<compile_context>
chip_gen: v7x
topology: tpu7x:2x2x1
jax: 0.10.0
libtpu: 0.0.40
codegen_flags: <defaults>
</compile_context>

<pallas_src>
import jax
import jax.numpy as jnp
import numpy as np
from jax import lax
from jax.experimental import pallas as pl
from jax.experimental.pallas import tpu as pltpu

_O_PAD = 128          # lane-dense padded classifier width
_NEG_BIG = -1.0e30    # padded-logit bias: exp(_NEG_BIG - max) == 0 in f32


def _gru_type_net_kernel(x_ref, h0_ref,
                         wi_r_ref, wi_z_ref, wi_n_ref,
                         wh_r_ref, wh_z_ref, wh_n_ref,
                         b_r_ref, b_z_ref, b_in_ref, b_hn_ref,
                         w0_ref, b0_ref, w1_ref, b1_ref,
                         out_ref, hout_ref,
                         gi_r_ref, gi_z_ref, gi_n_ref, h_all_ref):
    """Whole sequence in one invocation.

    Shapes inside the kernel (all f32, fully resident in VMEM):
      x_ref    : (S*B, I)      time-major flattened inputs (row t*B + b = x[b, t])
      h0_ref   : (B, H)        initial hidden state
      wi_*_ref : (I, H)        per-gate input weights (pre-transposed)
      wh_*_ref : (H, H)        per-gate hidden weights (pre-transposed)
      b_r/b_z  : (1, H)        folded biases b_ih + b_hh for r / z gates
      b_in/b_hn: (1, H)        n-gate input / hidden biases (kept separate)
      w0_ref   : (H, H)        fc_deep0 weight^T, b0_ref (1, H)
      w1_ref   : (H, O_PAD)    fc weight^T padded to 128 lanes, b1_ref (1, O_PAD)
      out_ref  : (S*B, O_PAD)  lane-dense log-softmax output slab
      hout_ref : (B, H)        final hidden state
      gi_*_ref : (S*B, H)      VMEM scratch: precomputed input projections
      h_all_ref: (S*B, H)      VMEM scratch: all per-step hidden states
    """
    B, H = h0_ref.shape
    SB = x_ref.shape[0]
    S = SB // B

    # --- Input projection for ALL timesteps at once (off the recurrence). ---
    x = x_ref[...]
    gi_r_ref[...] = jnp.dot(x, wi_r_ref[...], preferred_element_type=jnp.float32) + b_r_ref[...]
    gi_z_ref[...] = jnp.dot(x, wi_z_ref[...], preferred_element_type=jnp.float32) + b_z_ref[...]
    gi_n_ref[...] = jnp.dot(x, wi_n_ref[...], preferred_element_type=jnp.float32) + b_in_ref[...]

    wh_r = wh_r_ref[...]
    wh_z = wh_z_ref[...]
    wh_n = wh_n_ref[...]
    # Hoist the (1, H) -> (B, H) broadcast out of the loop (no CSE inside loops).
    b_hn = jnp.broadcast_to(b_hn_ref[...], (B, H))

    # --- Serial GRU recurrence (PyTorch gate order r, z, n). ---
    def step(t, h_prev):
        row = pl.multiple_of(t * B, B)
        g_r = gi_r_ref[pl.ds(row, B), :] + jnp.dot(
            h_prev, wh_r, preferred_element_type=jnp.float32)
        g_z = gi_z_ref[pl.ds(row, B), :] + jnp.dot(
            h_prev, wh_z, preferred_element_type=jnp.float32)
        h_n = jnp.dot(h_prev, wh_n, preferred_element_type=jnp.float32) + b_hn
        r = jax.nn.sigmoid(g_r)
        z = jax.nn.sigmoid(g_z)
        n = jnp.tanh(gi_n_ref[pl.ds(row, B), :] + r * h_n)
        h_new = (1.0 - z) * n + z * h_prev
        h_all_ref[pl.ds(row, B), :] = h_new
        return h_new

    h = h0_ref[...]
    if S <= 32:
        # Small static S: fully unroll at trace time (static slice offsets).
        for t in range(S):
            h = step(t, h)
    else:
        h = lax.fori_loop(0, S, step, h, unroll=8)

    hout_ref[...] = h        # final hidden state written exactly once

    # --- Head over the whole (S*B, H) slab, once. ---
    a = jnp.maximum(h_all_ref[...], 0.0)
    f0 = jnp.maximum(
        jnp.dot(a, w0_ref[...], preferred_element_type=jnp.float32) + b0_ref[...], 0.0)
    logits = jnp.dot(f0, w1_ref[...], preferred_element_type=jnp.float32) + b1_ref[...]
    # Padded columns carry a -1e30 bias -> exp() == 0, so the log-softmax over
    # the full 128 lanes equals the log-softmax over the real O columns.
    out_ref[...] = jax.nn.log_softmax(logits, axis=-1)


@jax.jit
def gru_type_net_forward(x, h0, params):
    """x: (B, S, input_dim+1), h0: (1, B, H).  Returns (log_probs (B,S,O), h (1,B,H))."""
    B, S, I = x.shape
    H = h0.shape[-1]
    O = params["w_fc"].shape[0]
    f32 = jnp.float32

    # Time-major, flattened: row t*B + b corresponds to x[b, t].
    x_flat = jnp.transpose(x.astype(f32), (1, 0, 2)).reshape(S * B, I)

    w_ih = params["w_ih"].astype(f32)   # (3H, I), gate order r, z, n
    w_hh = params["w_hh"].astype(f32)   # (3H, H)
    b_ih = params["b_ih"].astype(f32)   # (3H,)
    b_hh = params["b_hh"].astype(f32)   # (3H,)

    # Per-gate, pre-transposed, lane-aligned operands.
    wi_r, wi_z, wi_n = w_ih[:H].T, w_ih[H:2 * H].T, w_ih[2 * H:].T   # (I, H) each
    wh_r, wh_z, wh_n = w_hh[:H].T, w_hh[H:2 * H].T, w_hh[2 * H:].T   # (H, H) each
    b_r = (b_ih[:H] + b_hh[:H])[None, :]                             # (1, H)
    b_z = (b_ih[H:2 * H] + b_hh[H:2 * H])[None, :]                   # (1, H)
    b_in = b_ih[2 * H:][None, :]                                     # (1, H)
    b_hn = b_hh[2 * H:][None, :]                                     # (1, H)

    w0_t = params["w_fc0"].astype(f32).T          # (H, H)
    b0 = params["b_fc0"].astype(f32)[None, :]     # (1, H)

    # Classifier padded to a lane-dense 128-wide output slab.
    w1_t = params["w_fc"].astype(f32).T           # (H, O)
    b1 = params["b_fc"].astype(f32)[None, :]      # (1, O)
    w1_p = jnp.zeros((H, _O_PAD), f32).at[:, :O].set(w1_t)           # (H, 128)
    b1_p = jnp.full((1, _O_PAD), _NEG_BIG, f32).at[:, :O].set(b1)    # (1, 128)

    out_flat, h_final = pl.pallas_call(
        _gru_type_net_kernel,
        out_shape=(
            jax.ShapeDtypeStruct((S * B, _O_PAD), f32),
            jax.ShapeDtypeStruct((B, H), f32),
        ),
        scratch_shapes=[
            pltpu.VMEM((S * B, H), f32),   # gi_r
            pltpu.VMEM((S * B, H), f32),   # gi_z
            pltpu.VMEM((S * B, H), f32),   # gi_n
            pltpu.VMEM((S * B, H), f32),   # h_all
        ],
    )(x_flat, h0[0].astype(f32), wi_r, wi_z, wi_n, wh_r, wh_z, wh_n,
      b_r, b_z, b_in, b_hn, w0_t, b0, w1_p, b1_p)

    out = jnp.transpose(out_flat[:, :O].reshape(S, B, O), (1, 0, 2))   # (B, S, O)
    return out, h_final[None]


def _reference_forward(x, h0, params):
    """Pure-JAX reference reproducing GRUTypeNet.forward (for verification)."""
    H = h0.shape[-1]

    def step(h, xt):
        gi = xt @ params["w_ih"].T + params["b_ih"]
        gh = h @ params["w_hh"].T + params["b_hh"]
        i_r, i_z, i_n = gi[:, :H], gi[:, H:2 * H], gi[:, 2 * H:]
        h_r, h_z, h_n = gh[:, :H], gh[:, H:2 * H], gh[:, 2 * H:]
        r = jax.nn.sigmoid(i_r + h_r)
        z = jax.nn.sigmoid(i_z + h_z)
        n = jnp.tanh(i_n + r * h_n)
        h_new = (1.0 - z) * n + z * h
        return h_new, h_new

    h_final, outs = jax.lax.scan(step, h0[0], jnp.transpose(x, (1, 0, 2)))
    outs = jnp.transpose(outs, (1, 0, 2))                       # (B, S, H)
    a = jax.nn.relu(outs)
    f0 = jax.nn.relu(a @ params["w_fc0"].T + params["b_fc0"])
    logits = f0 @ params["w_fc"].T + params["b_fc"]
    return jax.nn.log_softmax(logits, axis=-1), h_final[None]


def init_params(key, input_dim, hidden_dim, output_dim):
    """Deterministic init mimicking PyTorch's uniform(-1/sqrt(H), 1/sqrt(H))."""
    I = input_dim + 1
    O = output_dim + 1
    H = hidden_dim
    ks = jax.random.split(key, 8)
    s = 1.0 / np.sqrt(H)
    u = lambda k, shape: jax.random.uniform(k, shape, jnp.float32, -s, s)
    return {
        "w_ih": u(ks[0], (3 * H, I)),
        "w_hh": u(ks[1], (3 * H, H)),
        "b_ih": u(ks[2], (3 * H,)),
        "b_hh": u(ks[3], (3 * H,)),
        "w_fc0": u(ks[4], (H, H)),
        "b_fc0": u(ks[5], (H,)),
        "w_fc": u(ks[6], (O, H)),
        "b_fc": u(ks[7], (O,)),
    }


if __name__ == "__main__":
    batch, seq_len = 8, 8              # B=8 fills MXU/VPU sublanes
    input_dim, hidden_dim, output_dim = 10, 32, 10

    key = jax.random.PRNGKey(0)
    k_param, k_x = jax.random.split(key)
    params = init_params(k_param, input_dim, hidden_dim, output_dim)

    # One-hot-like inputs, consistent with _epoch_loader (B, S, input_dim + 1).
    idx = jax.random.randint(k_x, (batch, seq_len), 0, input_dim + 1)
    x = jax.nn.one_hot(idx, input_dim + 1, dtype=jnp.float32)
    h0 = jnp.zeros((1, batch, hidden_dim), dtype=jnp.float32)  # init_hidden

    out, h = gru_type_net_forward(x, h0, params)
    jax.block_until_ready((out, h))

    out_ref, h_ref = _reference_forward(x, h0, params)
    assert out.shape == (batch, seq_len, output_dim + 1)
    assert h.shape == (1, batch, hidden_dim)
    np.testing.assert_allclose(np.asarray(out), np.asarray(out_ref), rtol=1e-4, atol=1e-4)
    np.testing.assert_allclose(np.asarray(h), np.asarray(h_ref), rtol=1e-4, atol=1e-4)

    print("KERNEL_OK")
</pallas_src>

<mosaic_0001>
module attributes {stable_mosaic.version = 11 : i64} {
  func.func @_gru_type_net_kernel(%arg0: memref<64x11xf32, #tpu.memory_space<vmem>>, %arg1: memref<8x32xf32, #tpu.memory_space<vmem>>, %arg2: memref<11x32xf32, #tpu.memory_space<vmem>>, %arg3: memref<11x32xf32, #tpu.memory_space<vmem>>, %arg4: memref<11x32xf32, #tpu.memory_space<vmem>>, %arg5: memref<32x32xf32, #tpu.memory_space<vmem>>, %arg6: memref<32x32xf32, #tpu.memory_space<vmem>>, %arg7: memref<32x32xf32, #tpu.memory_space<vmem>>, %arg8: memref<1x32xf32, #tpu.memory_space<vmem>>, %arg9: memref<1x32xf32, #tpu.memory_space<vmem>>, %arg10: memref<1x32xf32, #tpu.memory_space<vmem>>, %arg11: memref<1x32xf32, #tpu.memory_space<vmem>>, %arg12: memref<32x32xf32, #tpu.memory_space<vmem>>, %arg13: memref<1x32xf32, #tpu.memory_space<vmem>>, %arg14: memref<32x128xf32, #tpu.memory_space<vmem>>, %arg15: memref<1x128xf32, #tpu.memory_space<vmem>>, %arg16: memref<64x128xf32, #tpu.memory_space<vmem>>, %arg17: memref<8x32xf32, #tpu.memory_space<vmem>>, %arg18: memref<64x32xf32, #tpu.memory_space<vmem>>, %arg19: memref<64x32xf32, #tpu.memory_space<vmem>>, %arg20: memref<64x32xf32, #tpu.memory_space<vmem>>, %arg21: memref<64x32xf32, #tpu.memory_space<vmem>>) attributes {dimension_semantics = [], scalar_prefetch = 0 : i64, scratch_operands = 4 : i64, tpu.core_type = #tpu.core_type<tc>} {
    %c0 = arith.constant 0 : index
    %c0_0 = arith.constant 0 : index
    %0 = vector.load %arg0[%c0, %c0_0] : memref<64x11xf32, #tpu.memory_space<vmem>>, vector<64x11xf32>
    %c0_1 = arith.constant 0 : index
    %c0_2 = arith.constant 0 : index
    %1 = vector.load %arg2[%c0_1, %c0_2] : memref<11x32xf32, #tpu.memory_space<vmem>>, vector<11x32xf32>
    %cst = arith.constant dense<0.000000e+00> : vector<64x32xf32>
    %2 = tpu.matmul %0, %1, %cst {dimension_numbers = #tpu.dot_dimension_numbers<[1], [0], [0], [1], [0, 0, 1, 1], [], []>} : vector<64x11xf32>, vector<11x32xf32>, vector<64x32xf32> -> vector<64x32xf32>
    %c0_3 = arith.constant 0 : index
    %c0_4 = arith.constant 0 : index
    %3 = vector.load %arg8[%c0_3, %c0_4] : memref<1x32xf32, #tpu.memory_space<vmem>>, vector<1x32xf32>
    %4 = vector.broadcast %3 : vector<1x32xf32> to vector<64x32xf32>
    %5 = arith.addf %2, %4 : vector<64x32xf32>
    %c0_5 = arith.constant 0 : index
    %c0_6 = arith.constant 0 : index
    %6 = vector.load %arg18[%c0_5, %c0_6] : memref<64x32xf32, #tpu.memory_space<vmem>>, vector<64x32xf32>
    tpu.vector_store %arg18[%c0_5, %c0_6], %5 {strides = array<i32>} : memref<64x32xf32, #tpu.memory_space<vmem>>, vector<64x32xf32>,
    %c0_7 = arith.constant 0 : index
    %c0_8 = arith.constant 0 : index
    %7 = vector.load %arg3[%c0_7, %c0_8] : memref<11x32xf32, #tpu.memory_space<vmem>>, vector<11x32xf32>
    %cst_9 = arith.constant dense<0.000000e+00> : vector<64x32xf32>
    %8 = tpu.matmul %0, %7, %cst_9 {dimension_numbers = #tpu.dot_dimension_numbers<[1], [0], [0], [1], [0, 0, 1, 1], [], []>} : vector<64x11xf32>, vector<11x32xf32>, vector<64x32xf32> -> vector<64x32xf32>
    %c0_10 = arith.constant 0 : index
    %c0_11 = arith.constant 0 : index
    %9 = vector.load %arg9[%c0_10, %c0_11] : memref<1x32xf32, #tpu.memory_space<vmem>>, vector<1x32xf32>
    %10 = vector.broadcast %9 : vector<1x32xf32> to vector<64x32xf32>
    %11 = arith.addf %8, %10 : vector<64x32xf32>
    %c0_12 = arith.constant 0 : index
    %c0_13 = arith.constant 0 : index
    %12 = vector.load %arg19[%c0_12, %c0_13] : memref<64x32xf32, #tpu.memory_space<vmem>>, vector<64x32xf32>
    tpu.vector_store %arg19[%c0_12, %c0_13], %11 {strides = array<i32>} : memref<64x32xf32, #tpu.memory_space<vmem>>, vector<64x32xf32>,
    %c0_14 = arith.constant 0 : index
    %c0_15 = arith.constant 0 : index
    %13 = vector.load %arg4[%c0_14, %c0_15] : memref<11x32xf32, #tpu.memory_space<vmem>>, vector<11x32xf32>
    %cst_16 = arith.constant dense<0.000000e+00> : vector<64x32xf32>
    %14 = tpu.matmul %0, %13, %cst_16 {dimension_numbers = #tpu.dot_dimension_numbers<[1], [0], [0], [1], [0, 0, 1, 1], [], []>} : vector<64x11xf32>, vector<11x32xf32>, vector<64x32xf32> -> vector<64x32xf32>
    %c0_17 = arith.constant 0 : index
    %c0_18 = arith.constant 0 : index
    %15 = vector.load %arg10[%c0_17, %c0_18] : memref<1x32xf32, #tpu.memory_space<vmem>>, vector<1x32xf32>
    %16 = vector.broadcast %15 : vector<1x32xf32> to vector<64x32xf32>
    %17 = arith.addf %14, %16 : vector<64x32xf32>
    %c0_19 = arith.constant 0 : index
    %c0_20 = arith.constant 0 : index
    %18 = vector.load %arg20[%c0_19, %c0_20] : memref<64x32xf32, #tpu.memory_space<vmem>>, vector<64x32xf32>
    tpu.vector_store %arg20[%c0_19, %c0_20], %17 {strides = array<i32>} : memref<64x32xf32, #tpu.memory_space<vmem>>, vector<64x32xf32>,
    %c0_21 = arith.constant 0 : index
    %c0_22 = arith.constant 0 : index
    %19 = vector.load %arg5[%c0_21, %c0_22] : memref<32x32xf32, #tpu.memory_space<vmem>>, vector<32x32xf32>
    %c0_23 = arith.constant 0 : index
    %c0_24 = arith.constant 0 : index
    %20 = vector.load %arg6[%c0_23, %c0_24] : memref<32x32xf32, #tpu.memory_space<vmem>>, vector<32x32xf32>
    %c0_25 = arith.constant 0 : index
    %c0_26 = arith.constant 0 : index
    %21 = vector.load %arg7[%c0_25, %c0_26] : memref<32x32xf32, #tpu.memory_space<vmem>>, vector<32x32xf32>
    %c0_27 = arith.constant 0 : index
    %c0_28 = arith.constant 0 : index
    %22 = vector.load %arg11[%c0_27, %c0_28] : memref<1x32xf32, #tpu.memory_space<vmem>>, vector<1x32xf32>
    %23 = vector.shape_cast %22 : vector<1x32xf32> to vector<1x32xf32>
    %24 = vector.broadcast %23 : vector<1x32xf32> to vector<8x32xf32>
    %c0_29 = arith.constant 0 : index
    %c0_30 = arith.constant 0 : index
    %25 = vector.load %arg1[%c0_29, %c0_30] : memref<8x32xf32, #tpu.memory_space<vmem>>, vector<8x32xf32>
    %c0_i32 = arith.constant 0 : i32
    %26 = tpu.assume_multiple %c0_i32, 8 : i32
    %27 = arith.index_cast %26 : i32 to index
    %c0_31 = arith.constant 0 : index
    %28 = vector.load %arg18[%27, %c0_31] : memref<64x32xf32, #tpu.memory_space<vmem>>, vector<8x32xf32>
    %cst_32 = arith.constant dense<0.000000e+00> : vector<8x32xf32>
    %29 = tpu.matmul %25, %19, %cst_32 {dimension_numbers = #tpu.dot_dimension_numbers<[1], [0], [0], [1], [0, 0, 1, 1], [], []>} : vector<8x32xf32>, vector<32x32xf32>, vector<8x32xf32> -> vector<8x32xf32>
    %30 = arith.addf %28, %29 : vector<8x32xf32>
    %31 = arith.index_cast %26 : i32 to index
    %c0_33 = arith.constant 0 : index
    %32 = vector.load %arg19[%31, %c0_33] : memref<64x32xf32, #tpu.memory_space<vmem>>, vector<8x32xf32>
    %cst_34 = arith.constant dense<0.000000e+00> : vector<8x32xf32>
    %33 = tpu.matmul %25, %20, %cst_34 {dimension_numbers = #tpu.dot_dimension_numbers<[1], [0], [0], [1], [0, 0, 1, 1], [], []>} : vector<8x32xf32>, vector<32x32xf32>, vector<8x32xf32> -> vector<8x32xf32>
    %34 = arith.addf %32, %33 : vector<8x32xf32>
    %cst_35 = arith.constant dense<0.000000e+00> : vector<8x32xf32>
    %35 = tpu.matmul %25, %21, %cst_35 {dimension_numbers = #tpu.dot_dimension_numbers<[1], [0], [0], [1], [0, 0, 1, 1], [], []>} : vector<8x32xf32>, vector<32x32xf32>, vector<8x32xf32> -> vector<8x32xf32>
    %36 = arith.addf %35, %24 : vector<8x32xf32>
    %37 = arith.negf %30 : vector<8x32xf32>
    %38 = math.exp %37 : vector<8x32xf32>
    %cst_36 = arith.constant 1.000000e+00 : f32
    %39 = vector.broadcast %cst_36 : f32 to vector<8x32xf32>
    %40 = arith.addf %39, %38 : vector<8x32xf32>
    %41 = arith.divf %39, %40 : vector<8x32xf32>
    %42 = arith.negf %34 : vector<8x32xf32>
    %43 = math.exp %42 : vector<8x32xf32>
    %cst_37 = arith.constant 1.000000e+00 : f32
    %44 = vector.broadcast %cst_37 : f32 to vector<8x32xf32>
    %45 = arith.addf %44, %43 : vector<8x32xf32>
    %46 = arith.divf %44, %45 : vector<8x32xf32>
    %47 = arith.index_cast %26 : i32 to index
    %c0_38 = arith.constant 0 : index
    %48 = vector.load %arg20[%47, %c0_38] : memref<64x32xf32, #tpu.memory_space<vmem>>, vector<8x32xf32>
    %49 = arith.mulf %41, %36 : vector<8x32xf32>
    %50 = arith.addf %48, %49 : vector<8x32xf32>
    %51 = math.tanh %50 : vector<8x32xf32>
    %cst_39 = arith.constant 1.000000e+00 : f32
    %52 = vector.broadcast %cst_39 : f32 to vector<8x32xf32>
    %53 = arith.subf %52, %46 : vector<8x32xf32>
    %54 = arith.mulf %53, %51 : vector<8x32xf32>
    %55 = arith.mulf %46, %25 : vector<8x32xf32>
    %56 = arith.addf %54, %55 : vector<8x32xf32>
    %57 = arith.index_cast %26 : i32 to index
    %c0_40 = arith.constant 0 : index
    %58 = vector.load %arg21[%57, %c0_40] : memref<64x32xf32, #tpu.memory_space<vmem>>, vector<8x32xf32>
    tpu.vector_store %arg21[%57, %c0_40], %56 {strides = array<i32>} : memref<64x32xf32, #tpu.memory_space<vmem>>, vector<8x32xf32>,
    %c8_i32 = arith.constant 8 : i32
    %59 = tpu.assume_multiple %c8_i32, 8 : i32
    %60 = arith.index_cast %59 : i32 to index
    %c0_41 = arith.constant 0 : index
    %61 = vector.load %arg18[%60, %c0_41] : memref<64x32xf32, #tpu.memory_space<vmem>>, vector<8x32xf32>
    %cst_42 = arith.constant dense<0.000000e+00> : vector<8x32xf32>
    %62 = tpu.matmul %56, %19, %cst_42 {dimension_numbers = #tpu.dot_dimension_numbers<[1], [0], [0], [1], [0, 0, 1, 1], [], []>} : vector<8x32xf32>, vector<32x32xf32>, vector<8x32xf32> -> vector<8x32xf32>
    %63 = arith.addf %61, %62 : vector<8x32xf32>
    %64 = arith.index_cast %59 : i32 to index
    %c0_43 = arith.constant 0 : index
    %65 = vector.load %arg19[%64, %c0_43] : memref<64x32xf32, #tpu.memory_space<vmem>>, vector<8x32xf32>
    %cst_44 = arith.constant dense<0.000000e+00> : vector<8x32xf32>
    %66 = tpu.matmul %56, %20, %cst_44 {dimension_numbers = #tpu.dot_dimension_numbers<[1], [0], [0], [1], [0, 0, 1, 1], [], []>} : vector<8x32xf32>, vector<32x32xf32>, vector<8x32xf32> -> vector<8x32xf32>
    %67 = arith.addf %65, %66 : vector<8x32xf32>
    %cst_45 = arith.constant dense<0.000000e+00> : vector<8x32xf32>
    %68 = tpu.matmul %56, %21, %cst_45 {dimension_numbers = #tpu.dot_dimension_numbers<[1], [0], [0], [1], [0, 0, 1, 1], [], []>} : vector<8x32xf32>, vector<32x32xf32>, vector<8x32xf32> -> vector<8x32xf32>
    %69 = arith.addf %68, %24 : vector<8x32xf32>
    %70 = arith.negf %63 : vector<8x32xf32>
    %71 = math.exp %70 : vector<8x32xf32>
    %cst_46 = arith.constant 1.000000e+00 : f32
    %72 = vector.broadcast %cst_46 : f32 to vector<8x32xf32>
    %73 = arith.addf %72, %71 : vector<8x32xf32>
    %74 = arith.divf %72, %73 : vector<8x32xf32>
    %75 = arith.negf %67 : vector<8x32xf32>
    %76 = math.exp %75 : vector<8x32xf32>
    %cst_47 = arith.constant 1.000000e+00 : f32
    %77 = vector.broadcast %cst_47 : f32 to vector<8x32xf32>
    %78 = arith.addf %77, %76 : vector<8x32xf32>
    %79 = arith.divf %77, %78 : vector<8x32xf32>
    %80 = arith.index_cast %59 : i32 to index
    %c0_48 = arith.constant 0 : index
    %81 = vector.load %arg20[%80, %c0_48] : memref<64x32xf32, #tpu.memory_space<vmem>>, vector<8x32xf32>
    %82 = arith.mulf %74, %69 : vector<8x32xf32>
    %83 = arith.addf %81, %82 : vector<8x32xf32>
    %84 = math.tanh %83 : vector<8x32xf32>
    %cst_49 = arith.constant 1.000000e+00 : f32
    %85 = vector.broadcast %cst_49 : f32 to vector<8x32xf32>
    %86 = arith.subf %85, %79 : vector<8x32xf32>
    %87 = arith.mulf %86, %84 : vector<8x32xf32>
    %88 = arith.mulf %79, %56 : vector<8x32xf32>
    %89 = arith.addf %87, %88 : vector<8x32xf32>
    %90 = arith.index_cast %59 : i32 to index
    %c0_50 = arith.constant 0 : index
    %91 = vector.load %arg21[%90, %c0_50] : memref<64x32xf32, #tpu.memory_space<vmem>>, vector<8x32xf32>
    tpu.vector_store %arg21[%90, %c0_50], %89 {strides = array<i32>} : memref<64x32xf32, #tpu.memory_space<vmem>>, vector<8x32xf32>,
    %c16_i32 = arith.constant 16 : i32
    %92 = tpu.assume_multiple %c16_i32, 8 : i32
    %93 = arith.index_cast %92 : i32 to index
    %c0_51 = arith.constant 0 : index
    %94 = vector.load %arg18[%93, %c0_51] : memref<64x32xf32, #tpu.memory_space<vmem>>, vector<8x32xf32>
    %cst_52 = arith.constant dense<0.000000e+00> : vector<8x32xf32>
    %95 = tpu.matmul %89, %19, %cst_52 {dimension_numbers = #tpu.dot_dimension_numbers<[1], [0], [0], [1], [0, 0, 1, 1], [], []>} : vector<8x32xf32>, vector<32x32xf32>, vector<8x32xf32> -> vector<8x32xf32>
    %96 = arith.addf %94, %95 : vector<8x32xf32>
    %97 = arith.index_cast %92 : i32 to index
    %c0_53 = arith.constant 0 : index
    %98 = vector.load %arg19[%97, %c0_53] : memref<64x32xf32, #tpu.memory_space<vmem>>, vector<8x32xf32>
    %cst_54 = arith.constant dense<0.000000e+00> : vector<8x32xf32>
    %99 = tpu.matmul %89, %20, %cst_54 {dimension_numbers = #tpu.dot_dimension_numbers<[1], [0], [0], [1], [0, 0, 1, 1], [], []>} : vector<8x32xf32>, vector<32x32xf32>, vector<8x32xf32> -> vector<8x32xf32>
    %100 = arith.addf %98, %99 : vector<8x32xf32>
    %cst_55 = arith.constant dense<0.000000e+00> : vector<8x32xf32>
    %101 = tpu.matmul %89, %21, %cst_55 {dimension_numbers = #tpu.dot_dimension_numbers<[1], [0], [0], [1], [0, 0, 1, 1], [], []>} : vector<8x32xf32>, vector<32x32xf32>, vector<8x32xf32> -> vector<8x32xf32>
    %102 = arith.addf %101, %24 : vector<8x32xf32>
    %103 = arith.negf %96 : vector<8x32xf32>
    %104 = math.exp %103 : vector<8x32xf32>
    %cst_56 = arith.constant 1.000000e+00 : f32
    %105 = vector.broadcast %cst_56 : f32 to vector<8x32xf32>
    %106 = arith.addf %105, %104 : vector<8x32xf32>
    %107 = arith.divf %105, %106 : vector<8x32xf32>
    %108 = arith.negf %100 : vector<8x32xf32>
    %109 = math.exp %108 : vector<8x32xf32>
    %cst_57 = arith.constant 1.000000e+00 : f32
    %110 = vector.broadcast %cst_57 : f32 to vector<8x32xf32>
    %111 = arith.addf %110, %109 : vector<8x32xf32>
    %112 = arith.divf %110, %111 : vector<8x32xf32>
    %113 = arith.index_cast %92 : i32 to index
    %c0_58 = arith.constant 0 : index
    %114 = vector.load %arg20[%113, %c0_58] : memref<64x32xf32, #tpu.memory_space<vmem>>, vector<8x32xf32>
    %115 = arith.mulf %107, %102 : vector<8x32xf32>
    %116 = arith.addf %114, %115 : vector<8x32xf32>
    %117 = math.tanh %116 : vector<8x32xf32>
    %cst_59 = arith.constant 1.000000e+00 : f32
    %118 = vector.broadcast %cst_59 : f32 to vector<8x32xf32>
    %119 = arith.subf %118, %112 : vector<8x32xf32>
    %120 = arith.mulf %119, %117 : vector<8x32xf32>
    %121 = arith.mulf %112, %89 : vector<8x32xf32>
    %122 = arith.addf %120, %121 : vector<8x32xf32>
    %123 = arith.index_cast %92 : i32 to index
    %c0_60 = arith.constant 0 : index
    %124 = vector.load %arg21[%123, %c0_60] : memref<64x32xf32, #tpu.memory_space<vmem>>, vector<8x32xf32>
    tpu.vector_store %arg21[%123, %c0_60], %122 {strides = array<i32>} : memref<64x32xf32, #tpu.memory_space<vmem>>, vector<8x32xf32>,
    %c24_i32 = arith.constant 24 : i32
    %125 = tpu.assume_multiple %c24_i32, 8 : i32
    %126 = arith.index_cast %125 : i32 to index
    %c0_61 = arith.constant 0 : index
    %127 = vector.load %arg18[%126, %c0_61] : memref<64x32xf32, #tpu.memory_space<vmem>>, vector<8x32xf32>
    %cst_62 = arith.constant dense<0.000000e+00> : vector<8x32xf32>
    %128 = tpu.matmul %122, %19, %cst_62 {dimension_numbers = #tpu.dot_dimension_numbers<[1], [0], [0], [1], [0, 0, 1, 1], [], []>} : vector<8x32xf32>, vector<32x32xf32>, vector<8x32xf32> -> vector<8x32xf32>
    %129 = arith.addf %127, %128 : vector<8x32xf32>
    %130 = arith.index_cast %125 : i32 to index
    %c0_63 = arith.constant 0 : index
    %131 = vector.load %arg19[%130, %c0_63] : memref<64x32xf32, #tpu.memory_space<vmem>>, vector<8x32xf32>
    %cst_64 = arith.constant dense<0.000000e+00> : vector<8x32xf32>
    %132 = tpu.matmul %122, %20, %cst_64 {dimension_numbers = #tpu.dot_dimension_numbers<[1], [0], [0], [1], [0, 0, 1, 1], [], []>} : vector<8x32xf32>, vector<32x32xf32>, vector<8x32xf32> -> vector<8x32xf32>
    %133 = arith.addf %131, %132 : vector<8x32xf32>
    %cst_65 = arith.constant dense<0.000000e+00> : vector<8x32xf32>
    %134 = tpu.matmul %122, %21, %cst_65 {dimension_numbers = #tpu.dot_dimension_numbers<[1], [0], [0], [1], [0, 0, 1, 1], [], []>} : vector<8x32xf32>, vector<32x32xf32>, vector<8x32xf32> -> vector<8x32xf32>
    %135 = arith.addf %134, %24 : vector<8x32xf32>
    %136 = arith.negf %129 : vector<8x32xf32>
    %137 = math.exp %136 : vector<8x32xf32>
    %cst_66 = arith.constant 1.000000e+00 : f32
    %138 = vector.broadcast %cst_66 : f32 to vector<8x32xf32>
    %139 = arith.addf %138, %137 : vector<8x32xf32>
    %140 = arith.divf %138, %139 : vector<8x32xf32>
    %141 = arith.negf %133 : vector<8x32xf32>
    %142 = math.exp %141 : vector<8x32xf32>
    %cst_67 = arith.constant 1.000000e+00 : f32
    %143 = vector.broadcast %cst_67 : f32 to vector<8x32xf32>
    %144 = arith.addf %143, %142 : vector<8x32xf32>
    %145 = arith.divf %143, %144 : vector<8x32xf32>
    %146 = arith.index_cast %125 : i32 to index
    %c0_68 = arith.constant 0 : index
    %147 = vector.load %arg20[%146, %c0_68] : memref<64x32xf32, #tpu.memory_space<vmem>>, vector<8x32xf32>
    %148 = arith.mulf %140, %135 : vector<8x32xf32>
    %149 = arith.addf %147, %148 : vector<8x32xf32>
    %150 = math.tanh %149 : vector<8x32xf32>
    %cst_69 = arith.constant 1.000000e+00 : f32
    %151 = vector.broadcast %cst_69 : f32 to vector<8x32xf32>
    %152 = arith.subf %151, %145 : vector<8x32xf32>
    %153 = arith.mulf %152, %150 : vector<8x32xf32>
    %154 = arith.mulf %145, %122 : vector<8x32xf32>
    %155 = arith.addf %153, %154 : vector<8x32xf32>
    %156 = arith.index_cast %125 : i32 to index
    %c0_70 = arith.constant 0 : index
    %157 = vector.load %arg21[%156, %c0_70] : memref<64x32xf32, #tpu.memory_space<vmem>>, vector<8x32xf32>
    tpu.vector_store %arg21[%156, %c0_70], %155 {strides = array<i32>} : memref<64x32xf32, #tpu.memory_space<vmem>>, vector<8x32xf32>,
    %c32_i32 = arith.constant 32 : i32
    %158 = tpu.assume_multiple %c32_i32, 8 : i32
    %159 = arith.index_cast %158 : i32 to index
    %c0_71 = arith.constant 0 : index
    %160 = vector.load %arg18[%159, %c0_71] : memref<64x32xf32, #tpu.memory_space<vmem>>, vector<8x32xf32>
    %cst_72 = arith.constant dense<0.000000e+00> : vector<8x32xf32>
    %161 = tpu.matmul %155, %19, %cst_72 {dimension_numbers = #tpu.dot_dimension_numbers<[1], [0], [0], [1], [0, 0, 1, 1], [], []>} : vector<8x32xf32>, vector<32x32xf32>, vector<8x32xf32> -> vector<8x32xf32>
    %162 = arith.addf %160, %161 : vector<8x32xf32>
    %163 = arith.index_cast %158 : i32 to index
    %c0_73 = arith.constant 0 : index
    %164 = vector.load %arg19[%163, %c0_73] : memref<64x32xf32, #tpu.memory_space<vmem>>, vector<8x32xf32>
    %cst_74 = arith.constant dense<0.000000e+00> : vector<8x32xf32>
    %165 = tpu.matmul %155, %20, %cst_74 {dimension_numbers = #tpu.dot_dimension_numbers<[1], [0], [0], [1], [0, 0, 1, 1], [], []>} : vector<8x32xf32>, vector<32x32xf32>, vector<8x32xf32> -> vector<8x32xf32>
    %166 = arith.addf %164, %165 : vector<8x32xf32>
    %cst_75 = arith.constant dense<0.000000e+00> : vector<8x32xf32>
    %167 = tpu.matmul %155, %21, %cst_75 {dimension_numbers = #tpu.dot_dimension_numbers<[1], [0], [0], [1], [0, 0, 1, 1], [], []>} : vector<8x32xf32>, vector<32x32xf32>, vector<8x32xf32> -> vector<8x32xf32>
    %168 = arith.addf %167, %24 : vector<8x32xf32>
    %169 = arith.negf %162 : vector<8x32xf32>
    %170 = math.exp %169 : vector<8x32xf32>
    %cst_76 = arith.constant 1.000000e+00 : f32
    %171 = vector.broadcast %cst_76 : f32 to vector<8x32xf32>
    %172 = arith.addf %171, %170 : vector<8x32xf32>
    %173 = arith.divf %171, %172 : vector<8x32xf32>
    %174 = arith.negf %166 : vector<8x32xf32>
    %175 = math.exp %174 : vector<8x32xf32>
    %cst_77 = arith.constant 1.000000e+00 : f32
    %176 = vector.broadcast %cst_77 : f32 to vector<8x32xf32>
    %177 = arith.addf %176, %175 : vector<8x32xf32>
    %178 = arith.divf %176, %177 : vector<8x32xf32>
    %179 = arith.index_cast %158 : i32 to index
    %c0_78 = arith.constant 0 : index
    %180 = vector.load %arg20[%179, %c0_78] : memref<64x32xf32, #tpu.memory_space<vmem>>, vector<8x32xf32>
    %181 = arith.mulf %173, %168 : vector<8x32xf32>
    %182 = arith.addf %180, %181 : vector<8x32xf32>
    %183 = math.tanh %182 : vector<8x32xf32>
    %cst_79 = arith.constant 1.000000e+00 : f32
    %184 = vector.broadcast %cst_79 : f32 to vector<8x32xf32>
    %185 = arith.subf %184, %178 : vector<8x32xf32>
    %186 = arith.mulf %185, %183 : vector<8x32xf32>
    %187 = arith.mulf %178, %155 : vector<8x32xf32>
    %188 = arith.addf %186, %187 : vector<8x32xf32>
    %189 = arith.index_cast %158 : i32 to index
    %c0_80 = arith.constant 0 : index
    %190 = vector.load %arg21[%189, %c0_80] : memref<64x32xf32, #tpu.memory_space<vmem>>, vector<8x32xf32>
    tpu.vector_store %arg21[%189, %c0_80], %188 {strides = array<i32>} : memref<64x32xf32, #tpu.memory_space<vmem>>, vector<8x32xf32>,
    %c40_i32 = arith.constant 40 : i32
    %191 = tpu.assume_multiple %c40_i32, 8 : i32
    %192 = arith.index_cast %191 : i32 to index
    %c0_81 = arith.constant 0 : index
    %193 = vector.load %arg18[%192, %c0_81] : memref<64x32xf32, #tpu.memory_space<vmem>>, vector<8x32xf32>
    %cst_82 = arith.constant dense<0.000000e+00> : vector<8x32xf32>
    %194 = tpu.matmul %188, %19, %cst_82 {dimension_numbers = #tpu.dot_dimension_numbers<[1], [0], [0], [1], [0, 0, 1, 1], [], []>} : vector<8x32xf32>, vector<32x32xf32>, vector<8x32xf32> -> vector<8x32xf32>
    %195 = arith.addf %193, %194 : vector<8x32xf32>
    %196 = arith.index_cast %191 : i32 to index
    %c0_83 = arith.constant 0 : index
    %197 = vector.load %arg19[%196, %c0_83] : memref<64x32xf32, #tpu.memory_space<vmem>>, vector<8x32xf32>
    %cst_84 = arith.constant dense<0.000000e+00> : vector<8x32xf32>
    %198 = tpu.matmul %188, %20, %cst_84 {dimension_numbers = #tpu.dot_dimension_numbers<[1], [0], [0], [1], [0, 0, 1, 1], [], []>} : vector<8x32xf32>, vector<32x32xf32>, vector<8x32xf32> -> vector<8x32xf32>
    %199 = arith.addf %197, %198 : vector<8x32xf32>
    %cst_85 = arith.constant dense<0.000000e+00> : vector<8x32xf32>
    %200 = tpu.matmul %188, %21, %cst_85 {dimension_numbers = #tpu.dot_dimension_numbers<[1], [0], [0], [1], [0, 0, 1, 1], [], []>} : vector<8x32xf32>, vector<32x32xf32>, vector<8x32xf32> -> vector<8x32xf32>
    %201 = arith.addf %200, %24 : vector<8x32xf32>
    %202 = arith.negf %195 : vector<8x32xf32>
    %203 = math.exp %202 : vector<8x32xf32>
    %cst_86 = arith.constant 1.000000e+00 : f32
    %204 = vector.broadcast %cst_86 : f32 to vector<8x32xf32>
    %205 = arith.addf %204, %203 : vector<8x32xf32>
    %206 = arith.divf %204, %205 : vector<8x32xf32>
    %207 = arith.negf %199 : vector<8x32xf32>
    %208 = math.exp %207 : vector<8x32xf32>
    %cst_87 = arith.constant 1.000000e+00 : f32
    %209 = vector.broadcast %cst_87 : f32 to vector<8x32xf32>
    %210 = arith.addf %209, %208 : vector<8x32xf32>
    %211 = arith.divf %209, %210 : vector<8x32xf32>
    %212 = arith.index_cast %191 : i32 to index
    %c0_88 = arith.constant 0 : index
    %213 = vector.load %arg20[%212, %c0_88] : memref<64x32xf32, #tpu.memory_space<vmem>>, vector<8x32xf32>
    %214 = arith.mulf %206, %201 : vector<8x32xf32>
    %215 = arith.addf %213, %214 : vector<8x32xf32>
    %216 = math.tanh %215 : vector<8x32xf32>
    %cst_89 = arith.constant 1.000000e+00 : f32
    %217 = vector.broadcast %cst_89 : f32 to vector<8x32xf32>
    %218 = arith.subf %217, %211 : vector<8x32xf32>
    %219 = arith.mulf %218, %216 : vector<8x32xf32>
    %220 = arith.mulf %211, %188 : vector<8x32xf32>
    %221 = arith.addf %219, %220 : vector<8x32xf32>
    %222 = arith.index_cast %191 : i32 to index
    %c0_90 = arith.constant 0 : index
    %223 = vector.load %arg21[%222, %c0_90] : memref<64x32xf32, #tpu.memory_space<vmem>>, vector<8x32xf32>
    tpu.vector_store %arg21[%222, %c0_90], %221 {strides = array<i32>} : memref<64x32xf32, #tpu.memory_space<vmem>>, vector<8x32xf32>,
    %c48_i32 = arith.constant 48 : i32
    %224 = tpu.assume_multiple %c48_i32, 8 : i32
    %225 = arith.index_cast %224 : i32 to index
    %c0_91 = arith.constant 0 : index
    %226 = vector.load %arg18[%225, %c0_91] : memref<64x32xf32, #tpu.memory_space<vmem>>, vector<8x32xf32>
    %cst_92 = arith.constant dense<0.000000e+00> : vector<8x32xf32>
    %227 = tpu.matmul %221, %19, %cst_92 {dimension_numbers = #tpu.dot_dimension_numbers<[1], [0], [0], [1], [0, 0, 1, 1], [], []>} : vector<8x32xf32>, vector<32x32xf32>, vector<8x32xf32> -> vector<8x32xf32>
    %228 = arith.addf %226, %227 : vector<8x32xf32>
    %229 = arith.index_cast %224 : i32 to index
    %c0_93 = arith.constant 0 : index
    %230 = vector.load %arg19[%229, %c0_93] : memref<64x32xf32, #tpu.memory_space<vmem>>, vector<8x32xf32>
    %cst_94 = arith.constant dense<0.000000e+00> : vector<8x32xf32>
    %231 = tpu.matmul %221, %20, %cst_94 {dimension_numbers = #tpu.dot_dimension_numbers<[1], [0], [0], [1], [0, 0, 1, 1], [], []>} : vector<8x32xf32>, vector<32x32xf32>, vector<8x32xf32> -> vector<8x32xf32>
    %232 = arith.addf %230, %231 : vector<8x32xf32>
    %cst_95 = arith.constant dense<0.000000e+00> : vector<8x32xf32>
    %233 = tpu.matmul %221, %21, %cst_95 {dimension_numbers = #tpu.dot_dimension_numbers<[1], [0], [0], [1], [0, 0, 1, 1], [], []>} : vector<8x32xf32>, vector<32x32xf32>, vector<8x32xf32> -> vector<8x32xf32>
    %234 = arith.addf %233, %24 : vector<8x32xf32>
    %235 = arith.negf %228 : vector<8x32xf32>
    %236 = math.exp %235 : vector<8x32xf32>
    %cst_96 = arith.constant 1.000000e+00 : f32
    %237 = vector.broadcast %cst_96 : f32 to vector<8x32xf32>
    %238 = arith.addf %237, %236 : vector<8x32xf32>
    %239 = arith.divf %237, %238 : vector<8x32xf32>
    %240 = arith.negf %232 : vector<8x32xf32>
    %241 = math.exp %240 : vector<8x32xf32>
    %cst_97 = arith.constant 1.000000e+00 : f32
    %242 = vector.broadcast %cst_97 : f32 to vector<8x32xf32>
    %243 = arith.addf %242, %241 : vector<8x32xf32>
    %244 = arith.divf %242, %243 : vector<8x32xf32>
    %245 = arith.index_cast %224 : i32 to index
    %c0_98 = arith.constant 0 : index
    %246 = vector.load %arg20[%245, %c0_98] : memref<64x32xf32, #tpu.memory_space<vmem>>, vector<8x32xf32>
    %247 = arith.mulf %239, %234 : vector<8x32xf32>
    %248 = arith.addf %246, %247 : vector<8x32xf32>
    %249 = math.tanh %248 : vector<8x32xf32>
    %cst_99 = arith.constant 1.000000e+00 : f32
    %250 = vector.broadcast %cst_99 : f32 to vector<8x32xf32>
    %251 = arith.subf %250, %244 : vector<8x32xf32>
    %252 = arith.mulf %251, %249 : vector<8x32xf32>
    %253 = arith.mulf %244, %221 : vector<8x32xf32>
    %254 = arith.addf %252, %253 : vector<8x32xf32>
    %255 = arith.index_cast %224 : i32 to index
    %c0_100 = arith.constant 0 : index
    %256 = vector.load %arg21[%255, %c0_100] : memref<64x32xf32, #tpu.memory_space<vmem>>, vector<8x32xf32>
    tpu.vector_store %arg21[%255, %c0_100], %254 {strides = array<i32>} : memref<64x32xf32, #tpu.memory_space<vmem>>, vector<8x32xf32>,
    %c56_i32 = arith.constant 56 : i32
    %257 = tpu.assume_multiple %c56_i32, 8 : i32
    %258 = arith.index_cast %257 : i32 to index
    %c0_101 = arith.constant 0 : index
    %259 = vector.load %arg18[%258, %c0_101] : memref<64x32xf32, #tpu.memory_space<vmem>>, vector<8x32xf32>
    %cst_102 = arith.constant dense<0.000000e+00> : vector<8x32xf32>
    %260 = tpu.matmul %254, %19, %cst_102 {dimension_numbers = #tpu.dot_dimension_numbers<[1], [0], [0], [1], [0, 0, 1, 1], [], []>} : vector<8x32xf32>, vector<32x32xf32>, vector<8x32xf32> -> vector<8x32xf32>
    %261 = arith.addf %259, %260 : vector<8x32xf32>
    %262 = arith.index_cast %257 : i32 to index
    %c0_103 = arith.constant 0 : index
    %263 = vector.load %arg19[%262, %c0_103] : memref<64x32xf32, #tpu.memory_space<vmem>>, vector<8x32xf32>
    %cst_104 = arith.constant dense<0.000000e+00> : vector<8x32xf32>
    %264 = tpu.matmul %254, %20, %cst_104 {dimension_numbers = #tpu.dot_dimension_numbers<[1], [0], [0], [1], [0, 0, 1, 1], [], []>} : vector<8x32xf32>, vector<32x32xf32>, vector<8x32xf32> -> vector<8x32xf32>
    %265 = arith.addf %263, %264 : vector<8x32xf32>
    %cst_105 = arith.constant dense<0.000000e+00> : vector<8x32xf32>
    %266 = tpu.matmul %254, %21, %cst_105 {dimension_numbers = #tpu.dot_dimension_numbers<[1], [0], [0], [1], [0, 0, 1, 1], [], []>} : vector<8x32xf32>, vector<32x32xf32>, vector<8x32xf32> -> vector<8x32xf32>
    %267 = arith.addf %266, %24 : vector<8x32xf32>
    %268 = arith.negf %261 : vector<8x32xf32>
    %269 = math.exp %268 : vector<8x32xf32>
    %cst_106 = arith.constant 1.000000e+00 : f32
    %270 = vector.broadcast %cst_106 : f32 to vector<8x32xf32>
    %271 = arith.addf %270, %269 : vector<8x32xf32>
    %272 = arith.divf %270, %271 : vector<8x32xf32>
    %273 = arith.negf %265 : vector<8x32xf32>
    %274 = math.exp %273 : vector<8x32xf32>
    %cst_107 = arith.constant 1.000000e+00 : f32
    %275 = vector.broadcast %cst_107 : f32 to vector<8x32xf32>
    %276 = arith.addf %275, %274 : vector<8x32xf32>
    %277 = arith.divf %275, %276 : vector<8x32xf32>
    %278 = arith.index_cast %257 : i32 to index
    %c0_108 = arith.constant 0 : index
    %279 = vector.load %arg20[%278, %c0_108] : memref<64x32xf32, #tpu.memory_space<vmem>>, vector<8x32xf32>
    %280 = arith.mulf %272, %267 : vector<8x32xf32>
    %281 = arith.addf %279, %280 : vector<8x32xf32>
    %282 = math.tanh %281 : vector<8x32xf32>
    %cst_109 = arith.constant 1.000000e+00 : f32
    %283 = vector.broadcast %cst_109 : f32 to vector<8x32xf32>
    %284 = arith.subf %283, %277 : vector<8x32xf32>
    %285 = arith.mulf %284, %282 : vector<8x32xf32>
    %286 = arith.mulf %277, %254 : vector<8x32xf32>
    %287 = arith.addf %285, %286 : vector<8x32xf32>
    %288 = arith.index_cast %257 : i32 to index
    %c0_110 = arith.constant 0 : index
    %289 = vector.load %arg21[%288, %c0_110] : memref<64x32xf32, #tpu.memory_space<vmem>>, vector<8x32xf32>
    tpu.vector_store %arg21[%288, %c0_110], %287 {strides = array<i32>} : memref<64x32xf32, #tpu.memory_space<vmem>>, vector<8x32xf32>,
    %c0_111 = arith.constant 0 : index
    %c0_112 = arith.constant 0 : index
    %290 = vector.load %arg17[%c0_111, %c0_112] : memref<8x32xf32, #tpu.memory_space<vmem>>, vector<8x32xf32>
    tpu.vector_store %arg17[%c0_111, %c0_112], %287 {strides = array<i32>} : memref<8x32xf32, #tpu.memory_space<vmem>>, vector<8x32xf32>,
    %c0_113 = arith.constant 0 : index
    %c0_114 = arith.constant 0 : index
    %291 = vector.load %arg21[%c0_113, %c0_114] : memref<64x32xf32, #tpu.memory_space<vmem>>, vector<64x32xf32>
    %cst_115 = arith.constant 0.000000e+00 : f32
    %292 = vector.broadcast %cst_115 : f32 to vector<64x32xf32>
    %293 = arith.maximumf %291, %292 : vector<64x32xf32>
    %c0_116 = arith.constant 0 : index
    %c0_117 = arith.constant 0 : index
    %294 = vector.load %arg12[%c0_116, %c0_117] : memref<32x32xf32, #tpu.memory_space<vmem>>, vector<32x32xf32>
    %cst_118 = arith.constant dense<0.000000e+00> : vector<64x32xf32>
    %295 = tpu.matmul %293, %294, %cst_118 {dimension_numbers = #tpu.dot_dimension_numbers<[1], [0], [0], [1], [0, 0, 1, 1], [], []>} : vector<64x32xf32>, vector<32x32xf32>, vector<64x32xf32> -> vector<64x32xf32>
    %c0_119 = arith.constant 0 : index
    %c0_120 = arith.constant 0 : index
    %296 = vector.load %arg13[%c0_119, %c0_120] : memref<1x32xf32, #tpu.memory_space<vmem>>, vector<1x32xf32>
    %297 = vector.broadcast %296 : vector<1x32xf32> to vector<64x32xf32>
    %298 = arith.addf %295, %297 : vector<64x32xf32>
    %cst_121 = arith.constant 0.000000e+00 : f32
    %299 = vector.broadcast %cst_121 : f32 to vector<64x32xf32>
    %300 = arith.maximumf %298, %299 : vector<64x32xf32>
    %c0_122 = arith.constant 0 : index
    %c0_123 = arith.constant 0 : index
    %301 = vector.load %arg14[%c0_122, %c0_123] : memref<32x128xf32, #tpu.memory_space<vmem>>, vector<32x128xf32>
    %cst_124 = arith.constant dense<0.000000e+00> : vector<64x128xf32>
    %302 = tpu.matmul %300, %301, %cst_124 {dimension_numbers = #tpu.dot_dimension_numbers<[1], [0], [0], [1], [0, 0, 1, 1], [], []>} : vector<64x32xf32>, vector<32x128xf32>, vector<64x128xf32> -> vector<64x128xf32>
    %c0_125 = arith.constant 0 : index
    %c0_126 = arith.constant 0 : index
    %303 = vector.load %arg15[%c0_125, %c0_126] : memref<1x128xf32, #tpu.memory_space<vmem>>, vector<1x128xf32>
    %304 = vector.broadcast %303 : vector<1x128xf32> to vector<64x128xf32>
    %305 = arith.addf %302, %304 : vector<64x128xf32>
    %cst_127 = arith.constant dense<0xFF800000> : vector<64xf32>
    %306 = vector.multi_reduction <maximumf>, %305, %cst_127 [1] : vector<64x128xf32> to vector<64xf32>
    %cst_128 = arith.constant 0xFF800000 : f32
    %307 = vector.broadcast %cst_128 : f32 to vector<64xf32>
    %308 = arith.maximumf %307, %306 : vector<64xf32>
    %309 = vector.shape_cast %308 : vector<64xf32> to vector<64x1xf32>
    %310 = vector.broadcast %309 : vector<64x1xf32> to vector<64x128xf32>
    %311 = arith.subf %305, %310 : vector<64x128xf32>
    %312 = math.exp %311 : vector<64x128xf32>
    %cst_129 = arith.constant dense<0.000000e+00> : vector<64xf32>
    %313 = vector.multi_reduction <add>, %312, %cst_129 [1] : vector<64x128xf32> to vector<64xf32>
    %314 = vector.shape_cast %313 : vector<64xf32> to vector<64x1xf32>
    %315 = math.log %314 : vector<64x1xf32>
    %316 = vector.broadcast %315 : vector<64x1xf32> to vector<64x128xf32>
    %317 = arith.subf %311, %316 : vector<64x128xf32>
    %c0_130 = arith.constant 0 : index
    %c0_131 = arith.constant 0 : index
    %318 = vector.load %arg16[%c0_130, %c0_131] : memref<64x128xf32, #tpu.memory_space<vmem>>, vector<64x128xf32>
    tpu.vector_store %arg16[%c0_130, %c0_131], %317 {strides = array<i32>} : memref<64x128xf32, #tpu.memory_space<vmem>>, vector<64x128xf32>,
    return
  }
}

</mosaic_0001>

<llo_original>
// kernel: gru_type_net_forward.1
$region0: #{gru_type_net_forward.1}
  #allocation0 [shape = 'u32[]', space=smem, size = 0x4, offset = 0x4, fixed_abs, tag = 'smem constant byte address 0x4 - core index']
  #allocation1 [shape = 'u32[144,128]{1,0:T(1,128)}', space=vmem, size = 0x12000, scoped, tag = 'internal scratch']
  #allocation2 [shape = 'f32[64,32]{1,0:T(8,128)}', space=vmem, size = 0x8000, scoped, tag = 'scratch operand']
  #allocation3 [shape = 'f32[64,32]{1,0:T(8,128)}', space=vmem, size = 0x8000, scoped, tag = 'scratch operand']
  #allocation4 [shape = 'f32[64,32]{1,0:T(8,128)}', space=vmem, size = 0x8000, scoped, tag = 'scratch operand']
  #allocation5 [shape = 'f32[64,32]{1,0:T(8,128)}', space=vmem, size = 0x8000, scoped, tag = 'scratch operand']
  %s0 = inlined_call_operand.vmem [shape: f32[64,11], index: 0, kind: input, shape index: {}]
  %s1 = inlined_call_operand.vmem [shape: f32[8,32], index: 1, kind: input, shape index: {}]
  %s2 = inlined_call_operand.vmem [shape: f32[11,32], index: 2, kind: input, shape index: {}]
  %s3 = inlined_call_operand.vmem [shape: f32[11,32], index: 3, kind: input, shape index: {}]
  %s4 = inlined_call_operand.vmem [shape: f32[11,32], index: 4, kind: input, shape index: {}]
  %s5 = inlined_call_operand.vmem [shape: f32[32,32], index: 5, kind: input, shape index: {}]
  %s6 = inlined_call_operand.vmem [shape: f32[32,32], index: 6, kind: input, shape index: {}]
  %s7 = inlined_call_operand.vmem [shape: f32[32,32], index: 7, kind: input, shape index: {}]
  %s8 = inlined_call_operand.vmem [shape: f32[1,32], index: 8, kind: input, shape index: {}]
  %s9 = inlined_call_operand.vmem [shape: f32[1,32], index: 9, kind: input, shape index: {}]
  %s10 = inlined_call_operand.vmem [shape: f32[1,32], index: 10, kind: input, shape index: {}]
  %s11 = inlined_call_operand.vmem [shape: f32[1,32], index: 11, kind: input, shape index: {}]
  %s12 = inlined_call_operand.vmem [shape: f32[32,32], index: 12, kind: input, shape index: {}]
  %s13 = inlined_call_operand.vmem [shape: f32[1,32], index: 13, kind: input, shape index: {}]
  %s14 = inlined_call_operand.vmem [shape: f32[32,128], index: 14, kind: input, shape index: {}]
  %s15 = inlined_call_operand.vmem [shape: f32[1,128], index: 15, kind: input, shape index: {}]
  %s16 = inlined_call_operand.vmem [shape: f32[64,128], index: 16, kind: output, shape index: {0}]
  %s17 = inlined_call_operand.hbm [shape: f32[8,32], index: 17, kind: output, shape index: {1}]
  %18 = xla_tuple %s16, %s17
  %s19 = sld [smem:[#allocation0]]
  $region82: #{gru_type_net_forward.1} parent=0
    _
  %s21 = ssub.s32 1, %s19
  %s22 = scalar_select 0, %s21, %s19
  $region1: #{gru_type_net_forward.1} parent=0
    #allocation6 [shape = 'u8[4096]{0}', space=vmem, size = 0x1000, scoped, tag = 'output window, operand 1, single buffered']
    #allocation7 [shape = 's32[1]{0}', space=sflag, size = 0x4, scoped, tag = 'scoped memory for gru_type_net_forward.1']
    %23 = vsyncpa [#allocation7], 0
    // Predicated region
    $region2: #{gru_type_net_forward.1} parent=1 // pred_check
      _
    $region3: #{gru_type_net_forward.1} parent=1 // pred_check_branch
      %25 = sbr.rel (0) target = $region5
    $region4: #{gru_type_net_forward.1} parent=1 // pred_region
      _
    $region5: #{gru_type_net_forward.1} parent=1 // pred_fallthru
      _
    // Predicated region
    $region6: #{gru_type_net_forward.1} parent=1 // pred_check
      _
    $region7: #{gru_type_net_forward.1} parent=1 // pred_check_branch
      %27 = sbr.rel (0) target = $region9
    $region8: #{gru_type_net_forward.1} parent=1 // pred_region
      _
    $region9: #{gru_type_net_forward.1} parent=1 // pred_fallthru
      _
    // Predicated region
    $region10: #{gru_type_net_forward.1} parent=1 // pred_check
      _
    $region11: #{gru_type_net_forward.1} parent=1 // pred_check_branch
      %29 = sbr.rel (0) target = $region13
    $region12: #{gru_type_net_forward.1} parent=1 // pred_region
      _
    $region13: #{gru_type_net_forward.1} parent=1 // pred_fallthru
      _
    // Predicated region
    $region14: #{gru_type_net_forward.1} parent=1 // pred_check
      _
    $region15: #{gru_type_net_forward.1} parent=1 // pred_check_branch
      %31 = sbr.rel (0) target = $region17
    $region16: #{gru_type_net_forward.1} parent=1 // pred_region
      _
    $region17: #{gru_type_net_forward.1} parent=1 // pred_fallthru
      _
    // Predicated region
    $region18: #{gru_type_net_forward.1} parent=1 // pred_check
      _
    $region19: #{gru_type_net_forward.1} parent=1 // pred_check_branch
      %33 = sbr.rel (0) target = $region21
    $region20: #{gru_type_net_forward.1} parent=1 // pred_region
      _
    $region21: #{gru_type_net_forward.1} parent=1 // pred_fallthru
      _
    // Predicated region
    $region22: #{gru_type_net_forward.1} parent=1 // pred_check
      _
    $region23: #{gru_type_net_forward.1} parent=1 // pred_check_branch
      %35 = sbr.rel (0) target = $region25
    $region24: #{gru_type_net_forward.1} parent=1 // pred_region
      _
    $region25: #{gru_type_net_forward.1} parent=1 // pred_fallthru
      _
    // Predicated region
    $region26: #{gru_type_net_forward.1} parent=1 // pred_check
      _
    $region27: #{gru_type_net_forward.1} parent=1 // pred_check_branch
      %37 = sbr.rel (0) target = $region29
    $region28: #{gru_type_net_forward.1} parent=1 // pred_region
      _
    $region29: #{gru_type_net_forward.1} parent=1 // pred_fallthru
      _
    // Predicated region
    $region30: #{gru_type_net_forward.1} parent=1 // pred_check
      _
    $region31: #{gru_type_net_forward.1} parent=1 // pred_check_branch
      %39 = sbr.rel (0) target = $region33
    $region32: #{gru_type_net_forward.1} parent=1 // pred_region
      _
    $region33: #{gru_type_net_forward.1} parent=1 // pred_fallthru
      _
    // Predicated region
    $region34: #{gru_type_net_forward.1} parent=1 // pred_check
      _
    $region35: #{gru_type_net_forward.1} parent=1 // pred_check_branch
      %41 = sbr.rel (0) target = $region37
    $region36: #{gru_type_net_forward.1} parent=1 // pred_region
      _
    $region37: #{gru_type_net_forward.1} parent=1 // pred_fallthru
      _
    // Predicated region
    $region38: #{gru_type_net_forward.1} parent=1 // pred_check
      _
    $region39: #{gru_type_net_forward.1} parent=1 // pred_check_branch
      %43 = sbr.rel (0) target = $region41
    $region40: #{gru_type_net_forward.1} parent=1 // pred_region
      _
    $region41: #{gru_type_net_forward.1} parent=1 // pred_fallthru
      _
    // Predicated region
    $region42: #{gru_type_net_forward.1} parent=1 // pred_check
      _
    $region43: #{gru_type_net_forward.1} parent=1 // pred_check_branch
      %45 = sbr.rel (0) target = $region45
    $region44: #{gru_type_net_forward.1} parent=1 // pred_region
      _
    $region45: #{gru_type_net_forward.1} parent=1 // pred_fallthru
      _
    // Predicated region
    $region46: #{gru_type_net_forward.1} parent=1 // pred_check
      _
    $region47: #{gru_type_net_forward.1} parent=1 // pred_check_branch
      %47 = sbr.rel (0) target = $region49
    $region48: #{gru_type_net_forward.1} parent=1 // pred_region
      _
    $region49: #{gru_type_net_forward.1} parent=1 // pred_fallthru
      _
    // Predicated region
    $region50: #{gru_type_net_forward.1} parent=1 // pred_check
      _
    $region51: #{gru_type_net_forward.1} parent=1 // pred_check_branch
      %49 = sbr.rel (0) target = $region53
    $region52: #{gru_type_net_forward.1} parent=1 // pred_region
      _
    $region53: #{gru_type_net_forward.1} parent=1 // pred_fallthru
      _
    // Predicated region
    $region54: #{gru_type_net_forward.1} parent=1 // pred_check
      _
    $region55: #{gru_type_net_forward.1} parent=1 // pred_check_branch
      %51 = sbr.rel (0) target = $region57
    $region56: #{gru_type_net_forward.1} parent=1 // pred_region
      _
    $region57: #{gru_type_net_forward.1} parent=1 // pred_fallthru
      _
    // Predicated region
    $region58: #{gru_type_net_forward.1} parent=1 // pred_check
      _
    $region59: #{gru_type_net_forward.1} parent=1 // pred_check_branch
      %53 = sbr.rel (0) target = $region61
    $region60: #{gru_type_net_forward.1} parent=1 // pred_region
      _
    $region61: #{gru_type_net_forward.1} parent=1 // pred_fallthru
      _
    // Predicated region
    $region62: #{gru_type_net_forward.1} parent=1 // pred_check
      _
    $region63: #{gru_type_net_forward.1} parent=1 // pred_check_branch
      %55 = sbr.rel (0) target = $region65
    $region64: #{gru_type_net_forward.1} parent=1 // pred_region
      _
    $region65: #{gru_type_net_forward.1} parent=1 // pred_fallthru
      _
    %v56 = vld [vmem:[%s0] sm:$0xff]
    %v57 = vld [vmem:[%s0 + $0x8] sm:$0xff]
    %v58 = vld [vmem:[%s0 + $0x10] sm:$0xff]
    %v59 = vld [vmem:[%s0 + $0x18] sm:$0xff]
    %v60 = vld [vmem:[%s0 + $0x20] sm:$0xff]
    %v61 = vld [vmem:[%s0 + $0x28] sm:$0xff]
    %v62 = vld [vmem:[%s0 + $0x30] sm:$0xff]
    %v63 = vld [vmem:[%s0 + $0x38] sm:$0xff]
    %v64 = vld [vmem:[%s2] sm:$0xff]
    %v65 = vld [vmem:[%s2 + $0x8] sm:$0x7]
    %v66 = vld [vmem:[%s8] sm:$0x1]
    %v68 = vlaneseq
    %v69 = vshrl.u32 %v68, 7
    %v70 = vsub.s32 0, %v69
    %v71 = vrot.slane %v66, %v70
    %vm73 = vcmask 89088
    %v75 = vsel %vm73, %v56, 0
    %v78 = vsel %vm73, %v57, 0
    %v81 = vsel %vm73, %v58, 0
    %v84 = vsel %vm73, %v59, 0
    %v87 = vsel %vm73, %v60, 0
    %v90 = vsel %vm73, %v61, 0
    %v93 = vsel %vm73, %v62, 0
    %v96 = vsel %vm73, %v63, 0
    %vm98 = vcmask 1042432
    %v100 = vsel %vm98, %v65, 0
    %102 = vmatprep.subr.mxu0 0.0
    %103 = vmatpush1.msra.mxu0 %v64
    %104 = vmatprep.subr.mxu0 0.0
    %105 = vmatpush1.msra.mxu0 %v100
    %106 = vmatprep.subr.mxu0 0.0
    %107 = vmatpush1.msra.mxu0 0.0
    %108 = vmatprep.subr.mxu0 0.0
    %109 = vmatpush1.msra.mxu0 0.0
    %110 = vmatprep.subr.mxu0 0.0
    %111 = vmatpush1.msra.mxu0 0.0
    %112 = vmatprep.subr.mxu0 0.0
    %113 = vmatpush1.msra.mxu0 0.0
    %114 = vmatprep.subr.mxu0 0.0
    %115 = vmatpush1.msra.mxu0 0.0
    %116 = vmatprep.subr.mxu0 0.0
    %117 = vmatpush1.msra.mxu0 0.0
    %118 = vmatprep.subr.mxu0 0.0
    %119 = vmatpush1.msra.mxu0 0.0
    %120 = vmatprep.subr.mxu0 0.0
    %121 = vmatpush1.msra.mxu0 0.0
    %122 = vmatprep.subr.mxu0 0.0
    %123 = vmatpush1.msra.mxu0 0.0
    %124 = vmatprep.subr.mxu0 0.0
    %125 = vmatpush1.msra.mxu0 0.0
    %126 = vmatprep.subr.mxu0 0.0
    %127 = vmatpush1.msra.mxu0 0.0
    %128 = vmatprep.subr.mxu0 0.0
    %129 = vmatpush1.msra.mxu0 0.0
    %130 = vmatprep.subr.mxu0 0.0
    %131 = vmatpush1.msra.mxu0 0.0
    %132 = vmatprep.subr.mxu0 0.0
    %133 = vmatpush1.msra.mxu0 0.0
    %134 = vmatprep.subr.mxu0 0.0
    %135 = vmatpush1.msra.mxu0 0.0
    %136 = vmatprep.subr.mxu0 0.0
    %137 = vmatpush1.msra.mxu0 0.0
    %138 = vmatprep.subr.mxu0 0.0
    %139 = vmatpush1.msra.mxu0 0.0
    %140 = vmatprep.subr.mxu0 0.0
    %141 = vmatpush1.msra.mxu0 0.0
    %142 = vmatprep.subr.mxu0 0.0
    %143 = vmatpush1.msra.mxu0 0.0
    %144 = vmatprep.subr.mxu0 0.0
    %145 = vmatpush1.msra.mxu0 0.0
    %146 = vmatprep.subr.mxu0 0.0
    %147 = vmatpush1.msra.mxu0 0.0
    %148 = vmatprep.subr.mxu0 0.0
    %149 = vmatpush1.msra.mxu0 0.0
    %150 = vmatprep.subr.mxu0 0.0
    %151 = vmatpush1.msra.mxu0 0.0
    %152 = vmatprep.subr.mxu0 0.0
    %153 = vmatpush1.msra.mxu0 0.0
    %154 = vmatprep.subr.mxu0 0.0
    %155 = vmatpush1.msra.mxu0 0.0
    %156 = vmatprep.subr.mxu0 0.0
    %157 = vmatpush1.msra.mxu0 0.0
    %158 = vmatprep.subr.mxu0 0.0
    %159 = vmatpush1.msra.mxu0 0.0
    %160 = vmatprep.subr.mxu0 0.0
    %161 = vmatpush1.msra.mxu0 0.0
    %162 = vmatprep.subr.mxu0 0.0
    %163 = vmatpush1.msra.mxu0 0.0
    %164 = vmatprep.subr.mxu0 0.0
    %165 = vmatpush1.msra.mxu0 0.0
    %166 = vmatprep.mubr.f32.mxu0 0.0
    %167 = vmatmul.mubr.f32.gmra.mrb[0].mxu0 %v75
    %v168 = vpop.f32.mrb[0].mxu0
    %v169 = vadd.f32 %v71, %v168
    %v170 = vpop.f32.mrb[0].mxu0
    %171 = vmatprep.mubr.f32.mxu0 0.0
    %172 = vmatmul.mubr.f32.gmra.mrb[0].mxu0 %v78
    %v173 = vpop.f32.mrb[0].mxu0
    %v174 = vadd.f32 %v71, %v173
    %v175 = vpop.f32.mrb[0].mxu0
    %176 = vmatprep.mubr.f32.mxu0 0.0
    %177 = vmatmul.mubr.f32.gmra.mrb[0].mxu0 %v81
    %v178 = vpop.f32.mrb[0].mxu0
    %v179 = vadd.f32 %v71, %v178
    %v180 = vpop.f32.mrb[0].mxu0
    %181 = vmatprep.mubr.f32.mxu0 0.0
    %182 = vmatmul.mubr.f32.gmra.mrb[0].mxu0 %v84
    %v183 = vpop.f32.mrb[0].mxu0
    %v184 = vadd.f32 %v71, %v183
    %v185 = vpop.f32.mrb[0].mxu0
    %186 = vmatprep.mubr.f32.mxu0 0.0
    %187 = vmatmul.mubr.f32.gmra.mrb[0].mxu0 %v87
    %v188 = vpop.f32.mrb[0].mxu0
    %v189 = vadd.f32 %v71, %v188
    %v190 = vpop.f32.mrb[0].mxu0
    %191 = vmatprep.mubr.f32.mxu0 0.0
    %192 = vmatmul.mubr.f32.gmra.mrb[0].mxu0 %v90
    %v193 = vpop.f32.mrb[0].mxu0
    %v194 = vadd.f32 %v71, %v193
    %v195 = vpop.f32.mrb[0].mxu0
    %196 = vmatprep.mubr.f32.mxu0 0.0
    %197 = vmatmul.mubr.f32.gmra.mrb[0].mxu0 %v93
    %v198 = vpop.f32.mrb[0].mxu0
    %v199 = vadd.f32 %v71, %v198
    %v200 = vpop.f32.mrb[0].mxu0
    %201 = vmatprep.mubr.f32.mxu0 0.0
    %202 = vmatmul.mubr.f32.gmra.mrb[0].mxu0 %v96
    %v203 = vpop.f32.mrb[0].mxu0
    %v204 = vadd.f32 %v71, %v203
    %v205 = vpop.f32.mrb[0].mxu0
    %206 = vdwg.mxu0
    %vm207 = vcmask 261120
    %208 = vst.msk [vmem:[#allocation2] sm:$0xff] %vm207, %v169
    %209 = vst.msk [vmem:[#allocation2 + $0x8] sm:$0xff] %vm207, %v174
    %210 = vst.msk [vmem:[#allocation2 + $0x10] sm:$0xff] %vm207, %v179
    %211 = vst.msk [vmem:[#allocation2 + $0x18] sm:$0xff] %vm207, %v184
    %212 = vst.msk [vmem:[#allocation2 + $0x20] sm:$0xff] %vm207, %v189
    %213 = vst.msk [vmem:[#allocation2 + $0x28] sm:$0xff] %vm207, %v194
    %214 = vst.msk [vmem:[#allocation2 + $0x30] sm:$0xff] %vm207, %v199
    %215 = vst.msk [vmem:[#allocation2 + $0x38] sm:$0xff] %vm207, %v204
    %v216 = vld [vmem:[%s3] sm:$0xff]
    %v217 = vld [vmem:[%s3 + $0x8] sm:$0x7]
    %v218 = vld [vmem:[%s9] sm:$0x1]
    %v220 = vlaneseq
    %v221 = vshrl.u32 %v220, 7
    %v222 = vsub.s32 0, %v221
    %v223 = vrot.slane %v218, %v222
    %v226 = vsel %vm98, %v217, 0
    %228 = vmatprep.subr.mxu0 0.0
    %229 = vmatpush1.msra.mxu0 %v216
    %230 = vmatprep.subr.mxu0 0.0
    %231 = vmatpush1.msra.mxu0 %v226
    %232 = vmatprep.subr.mxu0 0.0
    %233 = vmatpush1.msra.mxu0 0.0
    %234 = vmatprep.subr.mxu0 0.0
    %235 = vmatpush1.msra.mxu0 0.0
    %236 = vmatprep.subr.mxu0 0.0
    %237 = vmatpush1.msra.mxu0 0.0
    %238 = vmatprep.subr.mxu0 0.0
    %239 = vmatpush1.msra.mxu0 0.0
    %240 = vmatprep.subr.mxu0 0.0
    %241 = vmatpush1.msra.mxu0 0.0
    %242 = vmatprep.subr.mxu0 0.0
    %243 = vmatpush1.msra.mxu0 0.0
    %244 = vmatprep.subr.mxu0 0.0
    %245 = vmatpush1.msra.mxu0 0.0
    %246 = vmatprep.subr.mxu0 0.0
    %247 = vmatpush1.msra.mxu0 0.0
    %248 = vmatprep.subr.mxu0 0.0
    %249 = vmatpush1.msra.mxu0 0.0
    %250 = vmatprep.subr.mxu0 0.0
    %251 = vmatpush1.msra.mxu0 0.0
    %252 = vmatprep.subr.mxu0 0.0
    %253 = vmatpush1.msra.mxu0 0.0
    %254 = vmatprep.subr.mxu0 0.0
    %255 = vmatpush1.msra.mxu0 0.0
    %256 = vmatprep.subr.mxu0 0.0
    %257 = vmatpush1.msra.mxu0 0.0
    %258 = vmatprep.subr.mxu0 0.0
    %259 = vmatpush1.msra.mxu0 0.0
    %260 = vmatprep.subr.mxu0 0.0
    %261 = vmatpush1.msra.mxu0 0.0
    %262 = vmatprep.subr.mxu0 0.0
    %263 = vmatpush1.msra.mxu0 0.0
    %264 = vmatprep.subr.mxu0 0.0
    %265 = vmatpush1.msra.mxu0 0.0
    %266 = vmatprep.subr.mxu0 0.0
    %267 = vmatpush1.msra.mxu0 0.0
    %268 = vmatprep.subr.mxu0 0.0
    %269 = vmatpush1.msra.mxu0 0.0
    %270 = vmatprep.subr.mxu0 0.0
    %271 = vmatpush1.msra.mxu0 0.0
    %272 = vmatprep.subr.mxu0 0.0
    %273 = vmatpush1.msra.mxu0 0.0
    %274 = vmatprep.subr.mxu0 0.0
    %275 = vmatpush1.msra.mxu0 0.0
    %276 = vmatprep.subr.mxu0 0.0
    %277 = vmatpush1.msra.mxu0 0.0
    %278 = vmatprep.subr.mxu0 0.0
    %279 = vmatpush1.msra.mxu0 0.0
    %280 = vmatprep.subr.mxu0 0.0
    %281 = vmatpush1.msra.mxu0 0.0
    %282 = vmatprep.subr.mxu0 0.0
    %283 = vmatpush1.msra.mxu0 0.0
    %284 = vmatprep.subr.mxu0 0.0
    %285 = vmatpush1.msra.mxu0 0.0
    %286 = vmatprep.subr.mxu0 0.0
    %287 = vmatpush1.msra.mxu0 0.0
    %288 = vmatprep.subr.mxu0 0.0
    %289 = vmatpush1.msra.mxu0 0.0
    %290 = vmatprep.subr.mxu0 0.0
    %291 = vmatpush1.msra.mxu0 0.0
    %292 = vmatprep.mubr.f32.mxu0 0.0
    %293 = vmatmul.mubr.f32.gmra.mrb[0].mxu0 %v75
    %v294 = vpop.f32.mrb[0].mxu0
    %v295 = vadd.f32 %v223, %v294
    %v296 = vpop.f32.mrb[0].mxu0
    %297 = vmatprep.mubr.f32.mxu0 0.0
    %298 = vmatmul.mubr.f32.gmra.mrb[0].mxu0 %v78
    %v299 = vpop.f32.mrb[0].mxu0
    %v300 = vadd.f32 %v223, %v299
    %v301 = vpop.f32.mrb[0].mxu0
    %302 = vmatprep.mubr.f32.mxu0 0.0
    %303 = vmatmul.mubr.f32.gmra.mrb[0].mxu0 %v81
    %v304 = vpop.f32.mrb[0].mxu0
    %v305 = vadd.f32 %v223, %v304
    %v306 = vpop.f32.mrb[0].mxu0
    %307 = vmatprep.mubr.f32.mxu0 0.0
    %308 = vmatmul.mubr.f32.gmra.mrb[0].mxu0 %v84
    %v309 = vpop.f32.mrb[0].mxu0
    %v310 = vadd.f32 %v223, %v309
    %v311 = vpop.f32.mrb[0].mxu0
    %312 = vmatprep.mubr.f32.mxu0 0.0
    %313 = vmatmul.mubr.f32.gmra.mrb[0].mxu0 %v87
    %v314 = vpop.f32.mrb[0].mxu0
    %v315 = vadd.f32 %v223, %v314
    %v316 = vpop.f32.mrb[0].mxu0
    %317 = vmatprep.mubr.f32.mxu0 0.0
    %318 = vmatmul.mubr.f32.gmra.mrb[0].mxu0 %v90
    %v319 = vpop.f32.mrb[0].mxu0
    %v320 = vadd.f32 %v223, %v319
    %v321 = vpop.f32.mrb[0].mxu0
    %322 = vmatprep.mubr.f32.mxu0 0.0
    %323 = vmatmul.mubr.f32.gmra.mrb[0].mxu0 %v93
    %v324 = vpop.f32.mrb[0].mxu0
    %v325 = vadd.f32 %v223, %v324
    %v326 = vpop.f32.mrb[0].mxu0
    %327 = vmatprep.mubr.f32.mxu0 0.0
    %328 = vmatmul.mubr.f32.gmra.mrb[0].mxu0 %v96
    %v329 = vpop.f32.mrb[0].mxu0
    %v330 = vadd.f32 %v223, %v329
    %v331 = vpop.f32.mrb[0].mxu0
    %332 = vdwg.mxu0
    %333 = vst.msk [vmem:[#allocation3] sm:$0xff] %vm207, %v295
    %334 = vst.msk [vmem:[#allocation3 + $0x8] sm:$0xff] %vm207, %v300
    %335 = vst.msk [vmem:[#allocation3 + $0x10] sm:$0xff] %vm207, %v305
    %336 = vst.msk [vmem:[#allocation3 + $0x18] sm:$0xff] %vm207, %v310
    %337 = vst.msk [vmem:[#allocation3 + $0x20] sm:$0xff] %vm207, %v315
    %338 = vst.msk [vmem:[#allocation3 + $0x28] sm:$0xff] %vm207, %v320
    %339 = vst.msk [vmem:[#allocation3 + $0x30] sm:$0xff] %vm207, %v325
    %340 = vst.msk [vmem:[#allocation3 + $0x38] sm:$0xff] %vm207, %v330
    %v341 = vld [vmem:[%s4] sm:$0xff]
    %v342 = vld [vmem:[%s4 + $0x8] sm:$0x7]
    %v343 = vld [vmem:[%s10] sm:$0x1]
    %v345 = vlaneseq
    %v346 = vshrl.u32 %v345, 7
    %v347 = vsub.s32 0, %v346
    %v348 = vrot.slane %v343, %v347
    %v351 = vsel %vm98, %v342, 0
    %353 = vmatprep.subr.mxu0 0.0
    %354 = vmatpush1.msra.mxu0 %v341
    %355 = vmatprep.subr.mxu0 0.0
    %356 = vmatpush1.msra.mxu0 %v351
    %357 = vmatprep.subr.mxu0 0.0
    %358 = vmatpush1.msra.mxu0 0.0
    %359 = vmatprep.subr.mxu0 0.0
    %360 = vmatpush1.msra.mxu0 0.0
    %361 = vmatprep.subr.mxu0 0.0
    %362 = vmatpush1.msra.mxu0 0.0
    %363 = vmatprep.subr.mxu0 0.0
    %364 = vmatpush1.msra.mxu0 0.0
    %365 = vmatprep.subr.mxu0 0.0
    %366 = vmatpush1.msra.mxu0 0.0
    %367 = vmatprep.subr.mxu0 0.0
    %368 = vmatpush1.msra.mxu0 0.0
    %369 = vmatprep.subr.mxu0 0.0
    %370 = vmatpush1.msra.mxu0 0.0
    %371 = vmatprep.subr.mxu0 0.0
    %372 = vmatpush1.msra.mxu0 0.0
    %373 = vmatprep.subr.mxu0 0.0
    %374 = vmatpush1.msra.mxu0 0.0
    %375 = vmatprep.subr.mxu0 0.0
    %376 = vmatpush1.msra.mxu0 0.0
    %377 = vmatprep.subr.mxu0 0.0
    %378 = vmatpush1.msra.mxu0 0.0
    %379 = vmatprep.subr.mxu0 0.0
    %380 = vmatpush1.msra.mxu0 0.0
    %381 = vmatprep.subr.mxu0 0.0
    %382 = vmatpush1.msra.mxu0 0.0
    %383 = vmatprep.subr.mxu0 0.0
    %384 = vmatpush1.msra.mxu0 0.0
    %385 = vmatprep.subr.mxu0 0.0
    %386 = vmatpush1.msra.mxu0 0.0
    %387 = vmatprep.subr.mxu0 0.0
    %388 = vmatpush1.msra.mxu0 0.0
    %389 = vmatprep.subr.mxu0 0.0
    %390 = vmatpush1.msra.mxu0 0.0
    %391 = vmatprep.subr.mxu0 0.0
    %392 = vmatpush1.msra.mxu0 0.0
    %393 = vmatprep.subr.mxu0 0.0
    %394 = vmatpush1.msra.mxu0 0.0
    %395 = vmatprep.subr.mxu0 0.0
    %396 = vmatpush1.msra.mxu0 0.0
    %397 = vmatprep.subr.mxu0 0.0
    %398 = vmatpush1.msra.mxu0 0.0
    %399 = vmatprep.subr.mxu0 0.0
    %400 = vmatpush1.msra.mxu0 0.0
    %401 = vmatprep.subr.mxu0 0.0
    %402 = vmatpush1.msra.mxu0 0.0
    %403 = vmatprep.subr.mxu0 0.0
    %404 = vmatpush1.msra.mxu0 0.0
    %405 = vmatprep.subr.mxu0 0.0
    %406 = vmatpush1.msra.mxu0 0.0
    %407 = vmatprep.subr.mxu0 0.0
    %408 = vmatpush1.msra.mxu0 0.0
    %409 = vmatprep.subr.mxu0 0.0
    %410 = vmatpush1.msra.mxu0 0.0
    %411 = vmatprep.subr.mxu0 0.0
    %412 = vmatpush1.msra.mxu0 0.0
    %413 = vmatprep.subr.mxu0 0.0
    %414 = vmatpush1.msra.mxu0 0.0
    %415 = vmatprep.subr.mxu0 0.0
    %416 = vmatpush1.msra.mxu0 0.0
    %417 = vmatprep.mubr.f32.mxu0 0.0
    %418 = vmatmul.mubr.f32.gmra.mrb[0].mxu0 %v75
    %v419 = vpop.f32.mrb[0].mxu0
    %v420 = vadd.f32 %v348, %v419
    %v421 = vpop.f32.mrb[0].mxu0
    %422 = vmatprep.mubr.f32.mxu0 0.0
    %423 = vmatmul.mubr.f32.gmra.mrb[0].mxu0 %v78
    %v424 = vpop.f32.mrb[0].mxu0
    %v425 = vadd.f32 %v348, %v424
    %v426 = vpop.f32.mrb[0].mxu0
    %427 = vmatprep.mubr.f32.mxu0 0.0
    %428 = vmatmul.mubr.f32.gmra.mrb[0].mxu0 %v81
    %v429 = vpop.f32.mrb[0].mxu0
    %v430 = vadd.f32 %v348, %v429
    %v431 = vpop.f32.mrb[0].mxu0
    %432 = vmatprep.mubr.f32.mxu0 0.0
    %433 = vmatmul.mubr.f32.gmra.mrb[0].mxu0 %v84
    %v434 = vpop.f32.mrb[0].mxu0
    %v435 = vadd.f32 %v348, %v434
    %v436 = vpop.f32.mrb[0].mxu0
    %437 = vmatprep.mubr.f32.mxu0 0.0
    %438 = vmatmul.mubr.f32.gmra.mrb[0].mxu0 %v87
    %v439 = vpop.f32.mrb[0].mxu0
    %v440 = vadd.f32 %v348, %v439
    %v441 = vpop.f32.mrb[0].mxu0
    %442 = vmatprep.mubr.f32.mxu0 0.0
    %443 = vmatmul.mubr.f32.gmra.mrb[0].mxu0 %v90
    %v444 = vpop.f32.mrb[0].mxu0
    %v445 = vadd.f32 %v348, %v444
    %v446 = vpop.f32.mrb[0].mxu0
    %447 = vmatprep.mubr.f32.mxu0 0.0
    %448 = vmatmul.mubr.f32.gmra.mrb[0].mxu0 %v93
    %v449 = vpop.f32.mrb[0].mxu0
    %v450 = vadd.f32 %v348, %v449
    %v451 = vpop.f32.mrb[0].mxu0
    %452 = vmatprep.mubr.f32.mxu0 0.0
    %453 = vmatmul.mubr.f32.gmra.mrb[0].mxu0 %v96
    %v454 = vpop.f32.mrb[0].mxu0
    %v455 = vadd.f32 %v348, %v454
    %v456 = vpop.f32.mrb[0].mxu0
    %457 = vdwg.mxu0
    %458 = vst.msk [vmem:[#allocation4] sm:$0xff] %vm207, %v420
    %459 = vst.msk [vmem:[#allocation4 + $0x8] sm:$0xff] %vm207, %v425
    %460 = vst.msk [vmem:[#allocation4 + $0x10] sm:$0xff] %vm207, %v430
    %461 = vst.msk [vmem:[#allocation4 + $0x18] sm:$0xff] %vm207, %v435
    %462 = vst.msk [vmem:[#allocation4 + $0x20] sm:$0xff] %vm207, %v440
    %463 = vst.msk [vmem:[#allocation4 + $0x28] sm:$0xff] %vm207, %v445
    %464 = vst.msk [vmem:[#allocation4 + $0x30] sm:$0xff] %vm207, %v450
    %465 = vst.msk [vmem:[#allocation4 + $0x38] sm:$0xff] %vm207, %v455
    %v466 = vld [vmem:[%s5] sm:$0xff]
    %v467 = vld [vmem:[%s5 + $0x8] sm:$0xff]
    %v468 = vld [vmem:[%s5 + $0x10] sm:$0xff]
    %v469 = vld [vmem:[%s5 + $0x18] sm:$0xff]
    %v470 = vld [vmem:[%s6] sm:$0xff]
    %v471 = vld [vmem:[%s6 + $0x8] sm:$0xff]
    %v472 = vld [vmem:[%s6 + $0x10] sm:$0xff]
    %v473 = vld [vmem:[%s6 + $0x18] sm:$0xff]
    %v474 = vld [vmem:[%s7] sm:$0xff]
    %v475 = vld [vmem:[%s7 + $0x8] sm:$0xff]
    %v476 = vld [vmem:[%s7 + $0x10] sm:$0xff]
    %v477 = vld [vmem:[%s7 + $0x18] sm:$0xff]
    %v478 = vld [vmem:[%s11] sm:$0x1]
    %v480 = vlaneseq
    %v481 = vshrl.u32 %v480, 7
    %v482 = vsub.s32 0, %v481
    %v483 = vrot.slane %v478, %v482
    %v485 = vld [vmem:[%s1] sm:$0xff]
    %v486 = vld [vmem:[#allocation2] sm:$0xff]
    %v488 = vsel %vm207, %v485, 0
    %490 = vmatprep.subr.mxu0 0.0
    %491 = vmatpush1.msra.mxu0 %v466
    %492 = vmatprep.subr.mxu0 0.0
    %493 = vmatpush1.msra.mxu0 %v467
    %494 = vmatprep.subr.mxu0 0.0
    %495 = vmatpush1.msra.mxu0 %v468
    %496 = vmatprep.subr.mxu0 0.0
    %497 = vmatpush1.msra.mxu0 %v469
    %498 = vmatprep.subr.mxu0 0.0
    %499 = vmatpush1.msra.mxu0 0.0
    %500 = vmatprep.subr.mxu0 0.0
    %501 = vmatpush1.msra.mxu0 0.0
    %502 = vmatprep.subr.mxu0 0.0
    %503 = vmatpush1.msra.mxu0 0.0
    %504 = vmatprep.subr.mxu0 0.0
    %505 = vmatpush1.msra.mxu0 0.0
    %506 = vmatprep.subr.mxu0 0.0
    %507 = vmatpush1.msra.mxu0 0.0
    %508 = vmatprep.subr.mxu0 0.0
    %509 = vmatpush1.msra.mxu0 0.0
    %510 = vmatprep.subr.mxu0 0.0
    %511 = vmatpush1.msra.mxu0 0.0
    %512 = vmatprep.subr.mxu0 0.0
    %513 = vmatpush1.msra.mxu0 0.0
    %514 = vmatprep.subr.mxu0 0.0
    %515 = vmatpush1.msra.mxu0 0.0
    %516 = vmatprep.subr.mxu0 0.0
    %517 = vmatpush1.msra.mxu0 0.0
    %518 = vmatprep.subr.mxu0 0.0
    %519 = vmatpush1.msra.mxu0 0.0
    %520 = vmatprep.subr.mxu0 0.0
    %521 = vmatpush1.msra.mxu0 0.0
    %522 = vmatprep.subr.mxu0 0.0
    %523 = vmatpush1.msra.mxu0 0.0
    %524 = vmatprep.subr.mxu0 0.0
    %525 = vmatpush1.msra.mxu0 0.0
    %526 = vmatprep.subr.mxu0 0.0
    %527 = vmatpush1.msra.mxu0 0.0
    %528 = vmatprep.subr.mxu0 0.0
    %529 = vmatpush1.msra.mxu0 0.0
    %530 = vmatprep.subr.mxu0 0.0
    %531 = vmatpush1.msra.mxu0 0.0
    %532 = vmatprep.subr.mxu0 0.0
    %533 = vmatpush1.msra.mxu0 0.0
    %534 = vmatprep.subr.mxu0 0.0
    %535 = vmatpush1.msra.mxu0 0.0
    %536 = vmatprep.subr.mxu0 0.0
    %537 = vmatpush1.msra.mxu0 0.0
    %538 = vmatprep.subr.mxu0 0.0
    %539 = vmatpush1.msra.mxu0 0.0
    %540 = vmatprep.subr.mxu0 0.0
    %541 = vmatpush1.msra.mxu0 0.0
    %542 = vmatprep.subr.mxu0 0.0
    %543 = vmatpush1.msra.mxu0 0.0
    %544 = vmatprep.subr.mxu0 0.0
    %545 = vmatpush1.msra.mxu0 0.0
    %546 = vmatprep.subr.mxu0 0.0
    %547 = vmatpush1.msra.mxu0 0.0
    %548 = vmatprep.subr.mxu0 0.0
    %549 = vmatpush1.msra.mxu0 0.0
    %550 = vmatprep.subr.mxu0 0.0
    %551 = vmatpush1.msra.mxu0 0.0
    %552 = vmatprep.subr.mxu0 0.0
    %553 = vmatpush1.msra.mxu0 0.0
    %554 = vmatprep.mubr.f32.mxu0 0.0
    %555 = vmatmul.mubr.f32.gmra.mrb[0].mxu0 %v488
    %v556 = vpop.f32.mrb[0].mxu0
    %v557 = vadd.f32 0.0, %v556
    %v558 = vpop.f32.mrb[0].mxu0
    %559 = vdwg.mxu0
    %v560 = vadd.f32 %v486, %v557
    %v561 = vld [vmem:[#allocation3] sm:$0xff]
    %562 = vmatprep.subr.mxu0 0.0
    %563 = vmatpush1.msra.mxu0 %v470
    %564 = vmatprep.subr.mxu0 0.0
    %565 = vmatpush1.msra.mxu0 %v471
    %566 = vmatprep.subr.mxu0 0.0
    %567 = vmatpush1.msra.mxu0 %v472
    %568 = vmatprep.subr.mxu0 0.0
    %569 = vmatpush1.msra.mxu0 %v473
    %570 = vmatprep.subr.mxu0 0.0
    %571 = vmatpush1.msra.mxu0 0.0
    %572 = vmatprep.subr.mxu0 0.0
    %573 = vmatpush1.msra.mxu0 0.0
    %574 = vmatprep.subr.mxu0 0.0
    %575 = vmatpush1.msra.mxu0 0.0
    %576 = vmatprep.subr.mxu0 0.0
    %577 = vmatpush1.msra.mxu0 0.0
    %578 = vmatprep.subr.mxu0 0.0
    %579 = vmatpush1.msra.mxu0 0.0
    %580 = vmatprep.subr.mxu0 0.0
    %581 = vmatpush1.msra.mxu0 0.0
    %582 = vmatprep.subr.mxu0 0.0
    %583 = vmatpush1.msra.mxu0 0.0
    %584 = vmatprep.subr.mxu0 0.0
    %585 = vmatpush1.msra.mxu0 0.0
    %586 = vmatprep.subr.mxu0 0.0
    %587 = vmatpush1.msra.mxu0 0.0
    %588 = vmatprep.subr.mxu0 0.0
    %589 = vmatpush1.msra.mxu0 0.0
    %590 = vmatprep.subr.mxu0 0.0
    %591 = vmatpush1.msra.mxu0 0.0
    %592 = vmatprep.subr.mxu0 0.0
    %593 = vmatpush1.msra.mxu0 0.0
    %594 = vmatprep.subr.mxu0 0.0
    %595 = vmatpush1.msra.mxu0 0.0
    %596 = vmatprep.subr.mxu0 0.0
    %597 = vmatpush1.msra.mxu0 0.0
    %598 = vmatprep.subr.mxu0 0.0
    %599 = vmatpush1.msra.mxu0 0.0
    %600 = vmatprep.subr.mxu0 0.0
    %601 = vmatpush1.msra.mxu0 0.0
    %602 = vmatprep.subr.mxu0 0.0
    %603 = vmatpush1.msra.mxu0 0.0
    %604 = vmatprep.subr.mxu0 0.0
    %605 = vmatpush1.msra.mxu0 0.0
    %606 = vmatprep.subr.mxu0 0.0
    %607 = vmatpush1.msra.mxu0 0.0
    %608 = vmatprep.subr.mxu0 0.0
    %609 = vmatpush1.msra.mxu0 0.0
    %610 = vmatprep.subr.mxu0 0.0
    %611 = vmatpush1.msra.mxu0 0.0
    %612 = vmatprep.subr.mxu0 0.0
    %613 = vmatpush1.msra.mxu0 0.0
    %614 = vmatprep.subr.mxu0 0.0
    %615 = vmatpush1.msra.mxu0 0.0
    %616 = vmatprep.subr.mxu0 0.0
    %617 = vmatpush1.msra.mxu0 0.0
    %618 = vmatprep.subr.mxu0 0.0
    %619 = vmatpush1.msra.mxu0 0.0
    %620 = vmatprep.subr.mxu0 0.0
    %621 = vmatpush1.msra.mxu0 0.0
    %622 = vmatprep.subr.mxu0 0.0
    %623 = vmatpush1.msra.mxu0 0.0
    %624 = vmatprep.subr.mxu0 0.0
    %625 = vmatpush1.msra.mxu0 0.0
    %626 = vmatprep.mubr.f32.mxu0 0.0
    %627 = vmatmul.mubr.f32.gmra.mrb[0].mxu0 %v488
    %v628 = vpop.f32.mrb[0].mxu0
    %v629 = vadd.f32 0.0, %v628
    %v630 = vpop.f32.mrb[0].mxu0
    %631 = vdwg.mxu0
    %v632 = vadd.f32 %v561, %v629
    %633 = vmatprep.subr.mxu0 0.0
    %634 = vmatpush1.msra.mxu0 %v474
    %635 = vmatprep.subr.mxu0 0.0
    %636 = vmatpush1.msra.mxu0 %v475
    %637 = vmatprep.subr.mxu0 0.0
    %638 = vmatpush1.msra.mxu0 %v476
    %639 = vmatprep.subr.mxu0 0.0
    %640 = vmatpush1.msra.mxu0 %v477
    %641 = vmatprep.subr.mxu0 0.0
    %642 = vmatpush1.msra.mxu0 0.0
    %643 = vmatprep.subr.mxu0 0.0
    %644 = vmatpush1.msra.mxu0 0.0
    %645 = vmatprep.subr.mxu0 0.0
    %646 = vmatpush1.msra.mxu0 0.0
    %647 = vmatprep.subr.mxu0 0.0
    %648 = vmatpush1.msra.mxu0 0.0
    %649 = vmatprep.subr.mxu0 0.0
    %650 = vmatpush1.msra.mxu0 0.0
    %651 = vmatprep.subr.mxu0 0.0
    %652 = vmatpush1.msra.mxu0 0.0
    %653 = vmatprep.subr.mxu0 0.0
    %654 = vmatpush1.msra.mxu0 0.0
    %655 = vmatprep.subr.mxu0 0.0
    %656 = vmatpush1.msra.mxu0 0.0
    %657 = vmatprep.subr.mxu0 0.0
    %658 = vmatpush1.msra.mxu0 0.0
    %659 = vmatprep.subr.mxu0 0.0
    %660 = vmatpush1.msra.mxu0 0.0
    %661 = vmatprep.subr.mxu0 0.0
    %662 = vmatpush1.msra.mxu0 0.0
    %663 = vmatprep.subr.mxu0 0.0
    %664 = vmatpush1.msra.mxu0 0.0
    %665 = vmatprep.subr.mxu0 0.0
    %666 = vmatpush1.msra.mxu0 0.0
    %667 = vmatprep.subr.mxu0 0.0
    %668 = vmatpush1.msra.mxu0 0.0
    %669 = vmatprep.subr.mxu0 0.0
    %670 = vmatpush1.msra.mxu0 0.0
    %671 = vmatprep.subr.mxu0 0.0
    %672 = vmatpush1.msra.mxu0 0.0
    %673 = vmatprep.subr.mxu0 0.0
    %674 = vmatpush1.msra.mxu0 0.0
    %675 = vmatprep.subr.mxu0 0.0
    %676 = vmatpush1.msra.mxu0 0.0
    %677 = vmatprep.subr.mxu0 0.0
    %678 = vmatpush1.msra.mxu0 0.0
    %679 = vmatprep.subr.mxu0 0.0
    %680 = vmatpush1.msra.mxu0 0.0
    %681 = vmatprep.subr.mxu0 0.0
    %682 = vmatpush1.msra.mxu0 0.0
    %683 = vmatprep.subr.mxu0 0.0
    %684 = vmatpush1.msra.mxu0 0.0
    %685 = vmatprep.subr.mxu0 0.0
    %686 = vmatpush1.msra.mxu0 0.0
    %687 = vmatprep.subr.mxu0 0.0
    %688 = vmatpush1.msra.mxu0 0.0
    %689 = vmatprep.subr.mxu0 0.0
    %690 = vmatpush1.msra.mxu0 0.0
    %691 = vmatprep.subr.mxu0 0.0
    %692 = vmatpush1.msra.mxu0 0.0
    %693 = vmatprep.subr.mxu0 0.0
    %694 = vmatpush1.msra.mxu0 0.0
    %695 = vmatprep.subr.mxu0 0.0
    %696 = vmatpush1.msra.mxu0 0.0
    %697 = vmatprep.mubr.f32.mxu0 0.0
    %698 = vmatmul.mubr.f32.gmra.mrb[0].mxu0 %v488
    %v699 = vpop.f32.mrb[0].mxu0
    %v700 = vadd.f32 %v483, %v699
    %v701 = vpop.f32.mrb[0].mxu0
    %702 = vdwg.mxu0
    %v703 = vxor.u32 %v560, 2147483648
    %v704 = vmul.f32 %v703, 1.442695
    %v705 = vpow.pop %v704
    %v706 = vadd.f32 %v705, 1.0
    %v707 = vrcp.pop %v706
    %v708 = vmul.f32 1.0, %v707
    %v709 = vxor.u32 %v632, 2147483648
    %v710 = vmul.f32 %v709, 1.442695
    %v711 = vpow.pop %v710
    %v712 = vadd.f32 %v711, 1.0
    %v713 = vrcp.pop %v712
    %v714 = vmul.f32 1.0, %v713
    %v715 = vld [vmem:[#allocation4] sm:$0xff]
    %v716 = vmul.f32 %v708, %v700
    %v717 = vadd.f32 %v715, %v716
    %v718 = vtanh.pop %v717
    %v719 = vsub.f32 1.0, %v714
    %v720 = vmul.f32 %v719, %v718
    %v721 = vmul.f32 %v714, %v485
    %v722 = vadd.f32 %v720, %v721
    %723 = vst.msk [vmem:[#allocation5] sm:$0xff] %vm207, %v722
    %s724 = scalar_lea.vmem [#allocation2], 8
    %v725 = vld [vmem:[%s724] sm:$0xff]
    %v727 = vsel %vm207, %v722, 0
    %729 = vmatprep.subr.mxu0 0.0
    %730 = vmatpush1.msra.mxu0 %v466
    %731 = vmatprep.subr.mxu0 0.0
    %732 = vmatpush1.msra.mxu0 %v467
    %733 = vmatprep.subr.mxu0 0.0
    %734 = vmatpush1.msra.mxu0 %v468
    %735 = vmatprep.subr.mxu0 0.0
    %736 = vmatpush1.msra.mxu0 %v469
    %737 = vmatprep.subr.mxu0 0.0
    %738 = vmatpush1.msra.mxu0 0.0
    %739 = vmatprep.subr.mxu0 0.0
    %740 = vmatpush1.msra.mxu0 0.0
    %741 = vmatprep.subr.mxu0 0.0
    %742 = vmatpush1.msra.mxu0 0.0
    %743 = vmatprep.subr.mxu0 0.0
    %744 = vmatpush1.msra.mxu0 0.0
    %745 = vmatprep.subr.mxu0 0.0
    %746 = vmatpush1.msra.mxu0 0.0
    %747 = vmatprep.subr.mxu0 0.0
    %748 = vmatpush1.msra.mxu0 0.0
    %749 = vmatprep.subr.mxu0 0.0
    %750 = vmatpush1.msra.mxu0 0.0
    %751 = vmatprep.subr.mxu0 0.0
    %752 = vmatpush1.msra.mxu0 0.0
    %753 = vmatprep.subr.mxu0 0.0
    %754 = vmatpush1.msra.mxu0 0.0
    %755 = vmatprep.subr.mxu0 0.0
    %756 = vmatpush1.msra.mxu0 0.0
    %757 = vmatprep.subr.mxu0 0.0
    %758 = vmatpush1.msra.mxu0 0.0
    %759 = vmatprep.subr.mxu0 0.0
    %760 = vmatpush1.msra.mxu0 0.0
    %761 = vmatprep.subr.mxu0 0.0
    %762 = vmatpush1.msra.mxu0 0.0
    %763 = vmatprep.subr.mxu0 0.0
    %764 = vmatpush1.msra.mxu0 0.0
    %765 = vmatprep.subr.mxu0 0.0
    %766 = vmatpush1.msra.mxu0 0.0
    %767 = vmatprep.subr.mxu0 0.0
    %768 = vmatpush1.msra.mxu0 0.0
    %769 = vmatprep.subr.mxu0 0.0
    %770 = vmatpush1.msra.mxu0 0.0
    %771 = vmatprep.subr.mxu0 0.0
    %772 = vmatpush1.msra.mxu0 0.0
    %773 = vmatprep.subr.mxu0 0.0
    %774 = vmatpush1.msra.mxu0 0.0
    %775 = vmatprep.subr.mxu0 0.0
    %776 = vmatpush1.msra.mxu0 0.0
    %777 = vmatprep.subr.mxu0 0.0
    %778 = vmatpush1.msra.mxu0 0.0
    %779 = vmatprep.subr.mxu0 0.0
    %780 = vmatpush1.msra.mxu0 0.0
    %781 = vmatprep.subr.mxu0 0.0
    %782 = vmatpush1.msra.mxu0 0.0
    %783 = vmatprep.subr.mxu0 0.0
    %784 = vmatpush1.msra.mxu0 0.0
    %785 = vmatprep.subr.mxu0 0.0
    %786 = vmatpush1.msra.mxu0 0.0
    %787 = vmatprep.subr.mxu0 0.0
    %788 = vmatpush1.msra.mxu0 0.0
    %789 = vmatprep.subr.mxu0 0.0
    %790 = vmatpush1.msra.mxu0 0.0
    %791 = vmatprep.subr.mxu0 0.0
    %792 = vmatpush1.msra.mxu0 0.0
    %793 = vmatprep.mubr.f32.mxu0 0.0
    %794 = vmatmul.mubr.f32.gmra.mrb[0].mxu0 %v727
    %v795 = vpop.f32.mrb[0].mxu0
    %v796 = vadd.f32 0.0, %v795
    %v797 = vpop.f32.mrb[0].mxu0
    %798 = vdwg.mxu0
    %v799 = vadd.f32 %v725, %v796
    %s800 = scalar_lea.vmem [#allocation3], 8
    %v801 = vld [vmem:[%s800] sm:$0xff]
    %802 = vmatprep.subr.mxu0 0.0
    %803 = vmatpush1.msra.mxu0 %v470
    %804 = vmatprep.subr.mxu0 0.0
    %805 = vmatpush1.msra.mxu0 %v471
    %806 = vmatprep.subr.mxu0 0.0
    %807 = vmatpush1.msra.mxu0 %v472
    %808 = vmatprep.subr.mxu0 0.0
    %809 = vmatpush1.msra.mxu0 %v473
    %810 = vmatprep.subr.mxu0 0.0
    %811 = vmatpush1.msra.mxu0 0.0
    %812 = vmatprep.subr.mxu0 0.0
    %813 = vmatpush1.msra.mxu0 0.0
    %814 = vmatprep.subr.mxu0 0.0
    %815 = vmatpush1.msra.mxu0 0.0
    %816 = vmatprep.subr.mxu0 0.0
    %817 = vmatpush1.msra.mxu0 0.0
    %818 = vmatprep.subr.mxu0 0.0
    %819 = vmatpush1.msra.mxu0 0.0
    %820 = vmatprep.subr.mxu0 0.0
    %821 = vmatpush1.msra.mxu0 0.0
    %822 = vmatprep.subr.mxu0 0.0
    %823 = vmatpush1.msra.mxu0 0.0
    %824 = vmatprep.subr.mxu0 0.0
    %825 = vmatpush1.msra.mxu0 0.0
    %826 = vmatprep.subr.mxu0 0.0
    %827 = vmatpush1.msra.mxu0 0.0
    %828 = vmatprep.subr.mxu0 0.0
    %829 = vmatpush1.msra.mxu0 0.0
    %830 = vmatprep.subr.mxu0 0.0
    %831 = vmatpush1.msra.mxu0 0.0
    %832 = vmatprep.subr.mxu0 0.0
    %833 = vmatpush1.msra.mxu0 0.0
    %834 = vmatprep.subr.mxu0 0.0
    %835 = vmatpush1.msra.mxu0 0.0
    %836 = vmatprep.subr.mxu0 0.0
    %837 = vmatpush1.msra.mxu0 0.0
    %838 = vmatprep.subr.mxu0 0.0
    %839 = vmatpush1.msra.mxu0 0.0
    %840 = vmatprep.subr.mxu0 0.0
    %841 = vmatpush1.msra.mxu0 0.0
    %842 = vmatprep.subr.mxu0 0.0
    %843 = vmatpush1.msra.mxu0 0.0
    %844 = vmatprep.subr.mxu0 0.0
    %845 = vmatpush1.msra.mxu0 0.0
    %846 = vmatprep.subr.mxu0 0.0
    %847 = vmatpush1.msra.mxu0 0.0
    %848 = vmatprep.subr.mxu0 0.0
    %849 = vmatpush1.msra.mxu0 0.0
    %850 = vmatprep.subr.mxu0 0.0
    %851 = vmatpush1.msra.mxu0 0.0
    %852 = vmatprep.subr.mxu0 0.0
    %853 = vmatpush1.msra.mxu0 0.0
    %854 = vmatprep.subr.mxu0 0.0
    %855 = vmatpush1.msra.mxu0 0.0
    %856 = vmatprep.subr.mxu0 0.0
    %857 = vmatpush1.msra.mxu0 0.0
    %858 = vmatprep.subr.mxu0 0.0
    %859 = vmatpush1.msra.mxu0 0.0
    %860 = vmatprep.subr.mxu0 0.0
    %861 = vmatpush1.msra.mxu0 0.0
    %862 = vmatprep.subr.mxu0 0.0
    %863 = vmatpush1.msra.mxu0 0.0
    %864 = vmatprep.subr.mxu0 0.0
    %865 = vmatpush1.msra.mxu0 0.0
    %866 = vmatprep.mubr.f32.mxu0 0.0
    %867 = vmatmul.mubr.f32.gmra.mrb[0].mxu0 %v727
    %v868 = vpop.f32.mrb[0].mxu0
    %v869 = vadd.f32 0.0, %v868
    %v870 = vpop.f32.mrb[0].mxu0
    %871 = vdwg.mxu0
    %v872 = vadd.f32 %v801, %v869
    %873 = vmatprep.subr.mxu0 0.0
    %874 = vmatpush1.msra.mxu0 %v474
    %875 = vmatprep.subr.mxu0 0.0
    %876 = vmatpush1.msra.mxu0 %v475
    %877 = vmatprep.subr.mxu0 0.0
    %878 = vmatpush1.msra.mxu0 %v476
    %879 = vmatprep.subr.mxu0 0.0
    %880 = vmatpush1.msra.mxu0 %v477
    %881 = vmatprep.subr.mxu0 0.0
    %882 = vmatpush1.msra.mxu0 0.0
    %883 = vmatprep.subr.mxu0 0.0
    %884 = vmatpush1.msra.mxu0 0.0
    %885 = vmatprep.subr.mxu0 0.0
    %886 = vmatpush1.msra.mxu0 0.0
    %887 = vmatprep.subr.mxu0 0.0
    %888 = vmatpush1.msra.mxu0 0.0
    %889 = vmatprep.subr.mxu0 0.0
    %890 = vmatpush1.msra.mxu0 0.0
    %891 = vmatprep.subr.mxu0 0.0
    %892 = vmatpush1.msra.mxu0 0.0
    %893 = vmatprep.subr.mxu0 0.0
    %894 = vmatpush1.msra.mxu0 0.0
    %895 = vmatprep.subr.mxu0 0.0
    %896 = vmatpush1.msra.mxu0 0.0
    %897 = vmatprep.subr.mxu0 0.0
    %898 = vmatpush1.msra.mxu0 0.0
    %899 = vmatprep.subr.mxu0 0.0
    %900 = vmatpush1.msra.mxu0 0.0
    %901 = vmatprep.subr.mxu0 0.0
    %902 = vmatpush1.msra.mxu0 0.0
    %903 = vmatprep.subr.mxu0 0.0
    %904 = vmatpush1.msra.mxu0 0.0
    %905 = vmatprep.subr.mxu0 0.0
    %906 = vmatpush1.msra.mxu0 0.0
    %907 = vmatprep.subr.mxu0 0.0
    %908 = vmatpush1.msra.mxu0 0.0
    %909 = vmatprep.subr.mxu0 0.0
    %910 = vmatpush1.msra.mxu0 0.0
    %911 = vmatprep.subr.mxu0 0.0
    %912 = vmatpush1.msra.mxu0 0.0
    %913 = vmatprep.subr.mxu0 0.0
    %914 = vmatpush1.msra.mxu0 0.0
    %915 = vmatprep.subr.mxu0 0.0
    %916 = vmatpush1.msra.mxu0 0.0
    %917 = vmatprep.subr.mxu0 0.0
    %918 = vmatpush1.msra.mxu0 0.0
    %919 = vmatprep.subr.mxu0 0.0
    %920 = vmatpush1.msra.mxu0 0.0
    %921 = vmatprep.subr.mxu0 0.0
    %922 = vmatpush1.msra.mxu0 0.0
    %923 = vmatprep.subr.mxu0 0.0
    %924 = vmatpush1.msra.mxu0 0.0
    %925 = vmatprep.subr.mxu0 0.0
    %926 = vmatpush1.msra.mxu0 0.0
    %927 = vmatprep.subr.mxu0 0.0
    %928 = vmatpush1.msra.mxu0 0.0
    %929 = vmatprep.subr.mxu0 0.0
    %930 = vmatpush1.msra.mxu0 0.0
    %931 = vmatprep.subr.mxu0 0.0
    %932 = vmatpush1.msra.mxu0 0.0
    %933 = vmatprep.subr.mxu0 0.0
    %934 = vmatpush1.msra.mxu0 0.0
    %935 = vmatprep.subr.mxu0 0.0
    %936 = vmatpush1.msra.mxu0 0.0
    %937 = vmatprep.mubr.f32.mxu0 0.0
    %938 = vmatmul.mubr.f32.gmra.mrb[0].mxu0 %v727
    %v939 = vpop.f32.mrb[0].mxu0
    %v940 = vadd.f32 %v483, %v939
    %v941 = vpop.f32.mrb[0].mxu0
    %942 = vdwg.mxu0
    %v943 = vxor.u32 %v799, 2147483648
    %v944 = vmul.f32 %v943, 1.442695
    %v945 = vpow.pop %v944
    %v946 = vadd.f32 %v945, 1.0
    %v947 = vrcp.pop %v946
    %v948 = vmul.f32 1.0, %v947
    %v949 = vxor.u32 %v872, 2147483648
    %v950 = vmul.f32 %v949, 1.442695
    %v951 = vpow.pop %v950
    %v952 = vadd.f32 %v951, 1.0
    %v953 = vrcp.pop %v952
    %v954 = vmul.f32 1.0, %v953
    %s955 = scalar_lea.vmem [#allocation4], 8
    %v956 = vld [vmem:[%s955] sm:$0xff]
    %v957 = vmul.f32 %v948, %v940
    %v958 = vadd.f32 %v956, %v957
    %v959 = vtanh.pop %v958
    %v960 = vsub.f32 1.0, %v954
    %v961 = vmul.f32 %v960, %v959
    %v962 = vmul.f32 %v954, %v722
    %v963 = vadd.f32 %v961, %v962
    %s964 = scalar_lea.vmem [#allocation5], 8
    %965 = vst.msk [vmem:[%s964] sm:$0xff] %vm207, %v963
    %s966 = scalar_lea.vmem [#allocation2], 16
    %v967 = vld [vmem:[%s966] sm:$0xff]
    %v969 = vsel %vm207, %v963, 0
    %971 = vmatprep.subr.mxu0 0.0
    %972 = vmatpush1.msra.mxu0 %v466
    %973 = vmatprep.subr.mxu0 0.0
    %974 = vmatpush1.msra.mxu0 %v467
    %975 = vmatprep.subr.mxu0 0.0
    %976 = vmatpush1.msra.mxu0 %v468
    %977 = vmatprep.subr.mxu0 0.0
    %978 = vmatpush1.msra.mxu0 %v469
    %979 = vmatprep.subr.mxu0 0.0
    %980 = vmatpush1.msra.mxu0 0.0
    %981 = vmatprep.subr.mxu0 0.0
    %982 = vmatpush1.msra.mxu0 0.0
    %983 = vmatprep.subr.mxu0 0.0
    %984 = vmatpush1.msra.mxu0 0.0
    %985 = vmatprep.subr.mxu0 0.0
    %986 = vmatpush1.msra.mxu0 0.0
    %987 = vmatprep.subr.mxu0 0.0
    %988 = vmatpush1.msra.mxu0 0.0
    %989 = vmatprep.subr.mxu0 0.0
    %990 = vmatpush1.msra.mxu0 0.0
    %991 = vmatprep.subr.mxu0 0.0
    %992 = vmatpush1.msra.mxu0 0.0
    %993 = vmatprep.subr.mxu0 0.0
    %994 = vmatpush1.msra.mxu0 0.0
    %995 = vmatprep.subr.mxu0 0.0
    %996 = vmatpush1.msra.mxu0 0.0
    %997 = vmatprep.subr.mxu0 0.0
    %998 = vmatpush1.msra.mxu0 0.0
    %999 = vmatprep.subr.mxu0 0.0
    %1000 = vmatpush1.msra.mxu0 0.0
    %1001 = vmatprep.subr.mxu0 0.0
    %1002 = vmatpush1.msra.mxu0 0.0
    %1003 = vmatprep.subr.mxu0 0.0
    %1004 = vmatpush1.msra.mxu0 0.0
    %1005 = vmatprep.subr.mxu0 0.0
    %1006 = vmatpush1.msra.mxu0 0.0
    %1007 = vmatprep.subr.mxu0 0.0
    %1008 = vmatpush1.msra.mxu0 0.0
    %1009 = vmatprep.subr.mxu0 0.0
    %1010 = vmatpush1.msra.mxu0 0.0
    %1011 = vmatprep.subr.mxu0 0.0
    %1012 = vmatpush1.msra.mxu0 0.0
    %1013 = vmatprep.subr.mxu0 0.0
    %1014 = vmatpush1.msra.mxu0 0.0
    %1015 = vmatprep.subr.mxu0 0.0
    %1016 = vmatpush1.msra.mxu0 0.0
    %1017 = vmatprep.subr.mxu0 0.0
    %1018 = vmatpush1.msra.mxu0 0.0
    %1019 = vmatprep.subr.mxu0 0.0
    %1020 = vmatpush1.msra.mxu0 0.0
    %1021 = vmatprep.subr.mxu0 0.0
    %1022 = vmatpush1.msra.mxu0 0.0
    %1023 = vmatprep.subr.mxu0 0.0
    %1024 = vmatpush1.msra.mxu0 0.0
    %1025 = vmatprep.subr.mxu0 0.0
    %1026 = vmatpush1.msra.mxu0 0.0
    %1027 = vmatprep.subr.mxu0 0.0
    %1028 = vmatpush1.msra.mxu0 0.0
    %1029 = vmatprep.subr.mxu0 0.0
    %1030 = vmatpush1.msra.mxu0 0.0
    %1031 = vmatprep.subr.mxu0 0.0
    %1032 = vmatpush1.msra.mxu0 0.0
    %1033 = vmatprep.subr.mxu0 0.0
    %1034 = vmatpush1.msra.mxu0 0.0
    %1035 = vmatprep.mubr.f32.mxu0 0.0
    %1036 = vmatmul.mubr.f32.gmra.mrb[0].mxu0 %v969
    %v1037 = vpop.f32.mrb[0].mxu0
    %v1038 = vadd.f32 0.0, %v1037
    %v1039 = vpop.f32.mrb[0].mxu0
    %1040 = vdwg.mxu0
    %v1041 = vadd.f32 %v967, %v1038
    %s1042 = scalar_lea.vmem [#allocation3], 16
    %v1043 = vld [vmem:[%s1042] sm:$0xff]
    %1044 = vmatprep.subr.mxu0 0.0
    %1045 = vmatpush1.msra.mxu0 %v470
    %1046 = vmatprep.subr.mxu0 0.0
    %1047 = vmatpush1.msra.mxu0 %v471
    %1048 = vmatprep.subr.mxu0 0.0
    %1049 = vmatpush1.msra.mxu0 %v472
    %1050 = vmatprep.subr.mxu0 0.0
    %1051 = vmatpush1.msra.mxu0 %v473
    %1052 = vmatprep.subr.mxu0 0.0
    %1053 = vmatpush1.msra.mxu0 0.0
    %1054 = vmatprep.subr.mxu0 0.0
    %1055 = vmatpush1.msra.mxu0 0.0
    %1056 = vmatprep.subr.mxu0 0.0
    %1057 = vmatpush1.msra.mxu0 0.0
    %1058 = vmatprep.subr.mxu0 0.0
    %1059 = vmatpush1.msra.mxu0 0.0
    %1060 = vmatprep.subr.mxu0 0.0
    %1061 = vmatpush1.msra.mxu0 0.0
    %1062 = vmatprep.subr.mxu0 0.0
    %1063 = vmatpush1.msra.mxu0 0.0
    %1064 = vmatprep.subr.mxu0 0.0
    %1065 = vmatpush1.msra.mxu0 0.0
    %1066 = vmatprep.subr.mxu0 0.0
    %1067 = vmatpush1.msra.mxu0 0.0
    %1068 = vmatprep.subr.mxu0 0.0
    %1069 = vmatpush1.msra.mxu0 0.0
    %1070 = vmatprep.subr.mxu0 0.0
    %1071 = vmatpush1.msra.mxu0 0.0
    %1072 = vmatprep.subr.mxu0 0.0
    %1073 = vmatpush1.msra.mxu0 0.0
    %1074 = vmatprep.subr.mxu0 0.0
    %1075 = vmatpush1.msra.mxu0 0.0
    %1076 = vmatprep.subr.mxu0 0.0
    %1077 = vmatpush1.msra.mxu0 0.0
    %1078 = vmatprep.subr.mxu0 0.0
    %1079 = vmatpush1.msra.mxu0 0.0
    %1080 = vmatprep.subr.mxu0 0.0
    %1081 = vmatpush1.msra.mxu0 0.0
    %1082 = vmatprep.subr.mxu0 0.0
    %1083 = vmatpush1.msra.mxu0 0.0
    %1084 = vmatprep.subr.mxu0 0.0
    %1085 = vmatpush1.msra.mxu0 0.0
    %1086 = vmatprep.subr.mxu0 0.0
    %1087 = vmatpush1.msra.mxu0 0.0
    %1088 = vmatprep.subr.mxu0 0.0
    %1089 = vmatpush1.msra.mxu0 0.0
    %1090 = vmatprep.subr.mxu0 0.0
    %1091 = vmatpush1.msra.mxu0 0.0
    %1092 = vmatprep.subr.mxu0 0.0
    %1093 = vmatpush1.msra.mxu0 0.0
    %1094 = vmatprep.subr.mxu0 0.0
    %1095 = vmatpush1.msra.mxu0 0.0
    %1096 = vmatprep.subr.mxu0 0.0
    %1097 = vmatpush1.msra.mxu0 0.0
    %1098 = vmatprep.subr.mxu0 0.0
    %1099 = vmatpush1.msra.mxu0 0.0
    %1100 = vmatprep.subr.mxu0 0.0
    %1101 = vmatpush1.msra.mxu0 0.0
    %1102 = vmatprep.subr.mxu0 0.0
    %1103 = vmatpush1.msra.mxu0 0.0
    %1104 = vmatprep.subr.mxu0 0.0
    %1105 = vmatpush1.msra.mxu0 0.0
    %1106 = vmatprep.subr.mxu0 0.0
    %1107 = vmatpush1.msra.mxu0 0.0
    %1108 = vmatprep.mubr.f32.mxu0 0.0
    %1109 = vmatmul.mubr.f32.gmra.mrb[0].mxu0 %v969
    %v1110 = vpop.f32.mrb[0].mxu0
    %v1111 = vadd.f32 0.0, %v1110
    %v1112 = vpop.f32.mrb[0].mxu0
    %1113 = vdwg.mxu0
    %v1114 = vadd.f32 %v1043, %v1111
    %1115 = vmatprep.subr.mxu0 0.0
    %1116 = vmatpush1.msra.mxu0 %v474
    %1117 = vmatprep.subr.mxu0 0.0
    %1118 = vmatpush1.msra.mxu0 %v475
    %1119 = vmatprep.subr.mxu0 0.0
    %1120 = vmatpush1.msra.mxu0 %v476
    %1121 = vmatprep.subr.mxu0 0.0
    %1122 = vmatpush1.msra.mxu0 %v477
    %1123 = vmatprep.subr.mxu0 0.0
    %1124 = vmatpush1.msra.mxu0 0.0
    %1125 = vmatprep.subr.mxu0 0.0
    %1126 = vmatpush1.msra.mxu0 0.0
    %1127 = vmatprep.subr.mxu0 0.0
    %1128 = vmatpush1.msra.mxu0 0.0
    %1129 = vmatprep.subr.mxu0 0.0
    %1130 = vmatpush1.msra.mxu0 0.0
    %1131 = vmatprep.subr.mxu0 0.0
    %1132 = vmatpush1.msra.mxu0 0.0
    %1133 = vmatprep.subr.mxu0 0.0
    %1134 = vmatpush1.msra.mxu0 0.0
    %1135 = vmatprep.subr.mxu0 0.0
    %1136 = vmatpush1.msra.mxu0 0.0
    %1137 = vmatprep.subr.mxu0 0.0
    %1138 = vmatpush1.msra.mxu0 0.0
    %1139 = vmatprep.subr.mxu0 0.0
    %1140 = vmatpush1.msra.mxu0 0.0
    %1141 = vmatprep.subr.mxu0 0.0
    %1142 = vmatpush1.msra.mxu0 0.0
    %1143 = vmatprep.subr.mxu0 0.0
    %1144 = vmatpush1.msra.mxu0 0.0
    %1145 = vmatprep.subr.mxu0 0.0
    %1146 = vmatpush1.msra.mxu0 0.0
    %1147 = vmatprep.subr.mxu0 0.0
    %1148 = vmatpush1.msra.mxu0 0.0
    %1149 = vmatprep.subr.mxu0 0.0
    %1150 = vmatpush1.msra.mxu0 0.0
    %1151 = vmatprep.subr.mxu0 0.0
    %1152 = vmatpush1.msra.mxu0 0.0
    %1153 = vmatprep.subr.mxu0 0.0
    %1154 = vmatpush1.msra.mxu0 0.0
    %1155 = vmatprep.subr.mxu0 0.0
    %1156 = vmatpush1.msra.mxu0 0.0
    %1157 = vmatprep.subr.mxu0 0.0
    %1158 = vmatpush1.msra.mxu0 0.0
    %1159 = vmatprep.subr.mxu0 0.0
    %1160 = vmatpush1.msra.mxu0 0.0
    %1161 = vmatprep.subr.mxu0 0.0
    %1162 = vmatpush1.msra.mxu0 0.0
    %1163 = vmatprep.subr.mxu0 0.0
    %1164 = vmatpush1.msra.mxu0 0.0
    %1165 = vmatprep.subr.mxu0 0.0
    %1166 = vmatpush1.msra.mxu0 0.0
    %1167 = vmatprep.subr.mxu0 0.0
    %1168 = vmatpush1.msra.mxu0 0.0
    %1169 = vmatprep.subr.mxu0 0.0
    %1170 = vmatpush1.msra.mxu0 0.0
    %1171 = vmatprep.subr.mxu0 0.0
    %1172 = vmatpush1.msra.mxu0 0.0
    %1173 = vmatprep.subr.mxu0 0.0
    %1174 = vmatpush1.msra.mxu0 0.0
    %1175 = vmatprep.subr.mxu0 0.0
    %1176 = vmatpush1.msra.mxu0 0.0
    %1177 = vmatprep.subr.mxu0 0.0
    %1178 = vmatpush1.msra.mxu0 0.0
    %1179 = vmatprep.mubr.f32.mxu0 0.0
    %1180 = vmatmul.mubr.f32.gmra.mrb[0].mxu0 %v969
    %v1181 = vpop.f32.mrb[0].mxu0
    %v1182 = vadd.f32 %v483, %v1181
    %v1183 = vpop.f32.mrb[0].mxu0
    %1184 = vdwg.mxu0
    %v1185 = vxor.u32 %v1041, 2147483648
    %v1186 = vmul.f32 %v1185, 1.442695
    %v1187 = vpow.pop %v1186
    %v1188 = vadd.f32 %v1187, 1.0
    %v1189 = vrcp.pop %v1188
    %v1190 = vmul.f32 1.0, %v1189
    %v1191 = vxor.u32 %v1114, 2147483648
    %v1192 = vmul.f32 %v1191, 1.442695
    %v1193 = vpow.pop %v1192
    %v1194 = vadd.f32 %v1193, 1.0
    %v1195 = vrcp.pop %v1194
    %v1196 = vmul.f32 1.0, %v1195
    %s1197 = scalar_lea.vmem [#allocation4], 16
    %v1198 = vld [vmem:[%s1197] sm:$0xff]
    %v1199 = vmul.f32 %v1190, %v1182
    %v1200 = vadd.f32 %v1198, %v1199
    %v1201 = vtanh.pop %v1200
    %v1202 = vsub.f32 1.0, %v1196
    %v1203 = vmul.f32 %v1202, %v1201
    %v1204 = vmul.f32 %v1196, %v963
    %v1205 = vadd.f32 %v1203, %v1204
    %s1206 = scalar_lea.vmem [#allocation5], 16
    %1207 = vst.msk [vmem:[%s1206] sm:$0xff] %vm207, %v1205
    %s1208 = scalar_lea.vmem [#allocation2], 24
    %v1209 = vld [vmem:[%s1208] sm:$0xff]
    %v1211 = vsel %vm207, %v1205, 0
    %1213 = vmatprep.subr.mxu0 0.0
    %1214 = vmatpush1.msra.mxu0 %v466
    %1215 = vmatprep.subr.mxu0 0.0
    %1216 = vmatpush1.msra.mxu0 %v467
    %1217 = vmatprep.subr.mxu0 0.0
    %1218 = vmatpush1.msra.mxu0 %v468
    %1219 = vmatprep.subr.mxu0 0.0
    %1220 = vmatpush1.msra.mxu0 %v469
    %1221 = vmatprep.subr.mxu0 0.0
    %1222 = vmatpush1.msra.mxu0 0.0
    %1223 = vmatprep.subr.mxu0 0.0
    %1224 = vmatpush1.msra.mxu0 0.0
    %1225 = vmatprep.subr.mxu0 0.0
    %1226 = vmatpush1.msra.mxu0 0.0
    %1227 = vmatprep.subr.mxu0 0.0
    %1228 = vmatpush1.msra.mxu0 0.0
    %1229 = vmatprep.subr.mxu0 0.0
    %1230 = vmatpush1.msra.mxu0 0.0
    %1231 = vmatprep.subr.mxu0 0.0
    %1232 = vmatpush1.msra.mxu0 0.0
    %1233 = vmatprep.subr.mxu0 0.0
    %1234 = vmatpush1.msra.mxu0 0.0
    %1235 = vmatprep.subr.mxu0 0.0
    %1236 = vmatpush1.msra.mxu0 0.0
    %1237 = vmatprep.subr.mxu0 0.0
    %1238 = vmatpush1.msra.mxu0 0.0
    %1239 = vmatprep.subr.mxu0 0.0
    %1240 = vmatpush1.msra.mxu0 0.0
    %1241 = vmatprep.subr.mxu0 0.0
    %1242 = vmatpush1.msra.mxu0 0.0
    %1243 = vmatprep.subr.mxu0 0.0
    %1244 = vmatpush1.msra.mxu0 0.0
    %1245 = vmatprep.subr.mxu0 0.0
    %1246 = vmatpush1.msra.mxu0 0.0
    %1247 = vmatprep.subr.mxu0 0.0
    %1248 = vmatpush1.msra.mxu0 0.0
    %1249 = vmatprep.subr.mxu0 0.0
    %1250 = vmatpush1.msra.mxu0 0.0
    %1251 = vmatprep.subr.mxu0 0.0
    %1252 = vmatpush1.msra.mxu0 0.0
    %1253 = vmatprep.subr.mxu0 0.0
    %1254 = vmatpush1.msra.mxu0 0.0
    %1255 = vmatprep.subr.mxu0 0.0
    %1256 = vmatpush1.msra.mxu0 0.0
    %1257 = vmatprep.subr.mxu0 0.0
    %1258 = vmatpush1.msra.mxu0 0.0
    %1259 = vmatprep.subr.mxu0 0.0
    %1260 = vmatpush1.msra.mxu0 0.0
    %1261 = vmatprep.subr.mxu0 0.0
    %1262 = vmatpush1.msra.mxu0 0.0
    %1263 = vmatprep.subr.mxu0 0.0
    %1264 = vmatpush1.msra.mxu0 0.0
    %1265 = vmatprep.subr.mxu0 0.0
    %1266 = vmatpush1.msra.mxu0 0.0
    %1267 = vmatprep.subr.mxu0 0.0
    %1268 = vmatpush1.msra.mxu0 0.0
    %1269 = vmatprep.subr.mxu0 0.0
    %1270 = vmatpush1.msra.mxu0 0.0
    %1271 = vmatprep.subr.mxu0 0.0
    %1272 = vmatpush1.msra.mxu0 0.0
    %1273 = vmatprep.subr.mxu0 0.0
    %1274 = vmatpush1.msra.mxu0 0.0
    %1275 = vmatprep.subr.mxu0 0.0
    %1276 = vmatpush1.msra.mxu0 0.0
    %1277 = vmatprep.mubr.f32.mxu0 0.0
    %1278 = vmatmul.mubr.f32.gmra.mrb[0].mxu0 %v1211
    %v1279 = vpop.f32.mrb[0].mxu0
    %v1280 = vadd.f32 0.0, %v1279
    %v1281 = vpop.f32.mrb[0].mxu0
    %1282 = vdwg.mxu0
    %v1283 = vadd.f32 %v1209, %v1280
    %s1284 = scalar_lea.vmem [#allocation3], 24
    %v1285 = vld [vmem:[%s1284] sm:$0xff]
    %1286 = vmatprep.subr.mxu0 0.0
    %1287 = vmatpush1.msra.mxu0 %v470
    %1288 = vmatprep.subr.mxu0 0.0
    %1289 = vmatpush1.msra.mxu0 %v471
    %1290 = vmatprep.subr.mxu0 0.0
    %1291 = vmatpush1.msra.mxu0 %v472
    %1292 = vmatprep.subr.mxu0 0.0
    %1293 = vmatpush1.msra.mxu0 %v473
    %1294 = vmatprep.subr.mxu0 0.0
    %1295 = vmatpush1.msra.mxu0 0.0
    %1296 = vmatprep.subr.mxu0 0.0
    %1297 = vmatpush1.msra.mxu0 0.0
    %1298 = vmatprep.subr.mxu0 0.0
    %1299 = vmatpush1.msra.mxu0 0.0
    %1300 = vmatprep.subr.mxu0 0.0
    %1301 = vmatpush1.msra.mxu0 0.0
    %1302 = vmatprep.subr.mxu0 0.0
    %1303 = vmatpush1.msra.mxu0 0.0
    %1304 = vmatprep.subr.mxu0 0.0
    %1305 = vmatpush1.msra.mxu0 0.0
    %1306 = vmatprep.subr.mxu0 0.0
    %1307 = vmatpush1.msra.mxu0 0.0
    %1308 = vmatprep.subr.mxu0 0.0
    %1309 = vmatpush1.msra.mxu0 0.0
    %1310 = vmatprep.subr.mxu0 0.0
    %1311 = vmatpush1.msra.mxu0 0.0
    %1312 = vmatprep.subr.mxu0 0.0
    %1313 = vmatpush1.msra.mxu0 0.0
    %1314 = vmatprep.subr.mxu0 0.0
    %1315 = vmatpush1.msra.mxu0 0.0
    %1316 = vmatprep.subr.mxu0 0.0
    %1317 = vmatpush1.msra.mxu0 0.0
    %1318 = vmatprep.subr.mxu0 0.0
    %1319 = vmatpush1.msra.mxu0 0.0
    %1320 = vmatprep.subr.mxu0 0.0
    %1321 = vmatpush1.msra.mxu0 0.0
    %1322 = vmatprep.subr.mxu0 0.0
    %1323 = vmatpush1.msra.mxu0 0.0
    %1324 = vmatprep.subr.mxu0 0.0
    %1325 = vmatpush1.msra.mxu0 0.0
    %1326 = vmatprep.subr.mxu0 0.0
    %1327 = vmatpush1.msra.mxu0 0.0
    %1328 = vmatprep.subr.mxu0 0.0
    %1329 = vmatpush1.msra.mxu0 0.0
    %1330 = vmatprep.subr.mxu0 0.0
    %1331 = vmatpush1.msra.mxu0 0.0
    %1332 = vmatprep.subr.mxu0 0.0
    %1333 = vmatpush1.msra.mxu0 0.0
    %1334 = vmatprep.subr.mxu0 0.0
    %1335 = vmatpush1.msra.mxu0 0.0
    %1336 = vmatprep.subr.mxu0 0.0
    %1337 = vmatpush1.msra.mxu0 0.0
    %1338 = vmatprep.subr.mxu0 0.0
    %1339 = vmatpush1.msra.mxu0 0.0
    %1340 = vmatprep.subr.mxu0 0.0
    %1341 = vmatpush1.msra.mxu0 0.0
    %1342 = vmatprep.subr.mxu0 0.0
    %1343 = vmatpush1.msra.mxu0 0.0
    %1344 = vmatprep.subr.mxu0 0.0
    %1345 = vmatpush1.msra.mxu0 0.0
    %1346 = vmatprep.subr.mxu0 0.0
    %1347 = vmatpush1.msra.mxu0 0.0
    %1348 = vmatprep.subr.mxu0 0.0
    %1349 = vmatpush1.msra.mxu0 0.0
    %1350 = vmatprep.mubr.f32.mxu0 0.0
    %1351 = vmatmul.mubr.f32.gmra.mrb[0].mxu0 %v1211
    %v1352 = vpop.f32.mrb[0].mxu0
    %v1353 = vadd.f32 0.0, %v1352
    %v1354 = vpop.f32.mrb[0].mxu0
    %1355 = vdwg.mxu0
    %v1356 = vadd.f32 %v1285, %v1353
    %1357 = vmatprep.subr.mxu0 0.0
    %1358 = vmatpush1.msra.mxu0 %v474
    %1359 = vmatprep.subr.mxu0 0.0
    %1360 = vmatpush1.msra.mxu0 %v475
    %1361 = vmatprep.subr.mxu0 0.0
    %1362 = vmatpush1.msra.mxu0 %v476
    %1363 = vmatprep.subr.mxu0 0.0
    %1364 = vmatpush1.msra.mxu0 %v477
    %1365 = vmatprep.subr.mxu0 0.0
    %1366 = vmatpush1.msra.mxu0 0.0
    %1367 = vmatprep.subr.mxu0 0.0
    %1368 = vmatpush1.msra.mxu0 0.0
    %1369 = vmatprep.subr.mxu0 0.0
    %1370 = vmatpush1.msra.mxu0 0.0
    %1371 = vmatprep.subr.mxu0 0.0
    %1372 = vmatpush1.msra.mxu0 0.0
    %1373 = vmatprep.subr.mxu0 0.0
    %1374 = vmatpush1.msra.mxu0 0.0
    %1375 = vmatprep.subr.mxu0 0.0
    %1376 = vmatpush1.msra.mxu0 0.0
    %1377 = vmatprep.subr.mxu0 0.0
    %1378 = vmatpush1.msra.mxu0 0.0
    %1379 = vmatprep.subr.mxu0 0.0
    %1380 = vmatpush1.msra.mxu0 0.0
    %1381 = vmatprep.subr.mxu0 0.0
    %1382 = vmatpush1.msra.mxu0 0.0
    %1383 = vmatprep.subr.mxu0 0.0
    %1384 = vmatpush1.msra.mxu0 0.0
    %1385 = vmatprep.subr.mxu0 0.0
    %1386 = vmatpush1.msra.mxu0 0.0
    %1387 = vmatprep.subr.mxu0 0.0
    %1388 = vmatpush1.msra.mxu0 0.0
    %1389 = vmatprep.subr.mxu0 0.0
    %1390 = vmatpush1.msra.mxu0 0.0
    %1391 = vmatprep.subr.mxu0 0.0
    %1392 = vmatpush1.msra.mxu0 0.0
    %1393 = vmatprep.subr.mxu0 0.0
    %1394 = vmatpush1.msra.mxu0 0.0
    %1395 = vmatprep.subr.mxu0 0.0
    %1396 = vmatpush1.msra.mxu0 0.0
    %1397 = vmatprep.subr.mxu0 0.0
    %1398 = vmatpush1.msra.mxu0 0.0
    %1399 = vmatprep.subr.mxu0 0.0
    %1400 = vmatpush1.msra.mxu0 0.0
    %1401 = vmatprep.subr.mxu0 0.0
    %1402 = vmatpush1.msra.mxu0 0.0
    %1403 = vmatprep.subr.mxu0 0.0
    %1404 = vmatpush1.msra.mxu0 0.0
    %1405 = vmatprep.subr.mxu0 0.0
    %1406 = vmatpush1.msra.mxu0 0.0
    %1407 = vmatprep.subr.mxu0 0.0
    %1408 = vmatpush1.msra.mxu0 0.0
    %1409 = vmatprep.subr.mxu0 0.0
    %1410 = vmatpush1.msra.mxu0 0.0
    %1411 = vmatprep.subr.mxu0 0.0
    %1412 = vmatpush1.msra.mxu0 0.0
    %1413 = vmatprep.subr.mxu0 0.0
    %1414 = vmatpush1.msra.mxu0 0.0
    %1415 = vmatprep.subr.mxu0 0.0
    %1416 = vmatpush1.msra.mxu0 0.0
    %1417 = vmatprep.subr.mxu0 0.0
    %1418 = vmatpush1.msra.mxu0 0.0
    %1419 = vmatprep.subr.mxu0 0.0
    %1420 = vmatpush1.msra.mxu0 0.0
    %1421 = vmatprep.mubr.f32.mxu0 0.0
    %1422 = vmatmul.mubr.f32.gmra.mrb[0].mxu0 %v1211
    %v1423 = vpop.f32.mrb[0].mxu0
    %v1424 = vadd.f32 %v483, %v1423
    %v1425 = vpop.f32.mrb[0].mxu0
    %1426 = vdwg.mxu0
    %v1427 = vxor.u32 %v1283, 2147483648
    %v1428 = vmul.f32 %v1427, 1.442695
    %v1429 = vpow.pop %v1428
    %v1430 = vadd.f32 %v1429, 1.0
    %v1431 = vrcp.pop %v1430
    %v1432 = vmul.f32 1.0, %v1431
    %v1433 = vxor.u32 %v1356, 2147483648
    %v1434 = vmul.f32 %v1433, 1.442695
    %v1435 = vpow.pop %v1434
    %v1436 = vadd.f32 %v1435, 1.0
    %v1437 = vrcp.pop %v1436
    %v1438 = vmul.f32 1.0, %v1437
    %s1439 = scalar_lea.vmem [#allocation4], 24
    %v1440 = vld [vmem:[%s1439] sm:$0xff]
    %v1441 = vmul.f32 %v1432, %v1424
    %v1442 = vadd.f32 %v1440, %v1441
    %v1443 = vtanh.pop %v1442
    %v1444 = vsub.f32 1.0, %v1438
    %v1445 = vmul.f32 %v1444, %v1443
    %v1446 = vmul.f32 %v1438, %v1205
    %v1447 = vadd.f32 %v1445, %v1446
    %s1448 = scalar_lea.vmem [#allocation5], 24
    %1449 = vst.msk [vmem:[%s1448] sm:$0xff] %vm207, %v1447
    %s1450 = scalar_lea.vmem [#allocation2], 32
    %v1451 = vld [vmem:[%s1450] sm:$0xff]
    %v1453 = vsel %vm207, %v1447, 0
    %1455 = vmatprep.subr.mxu0 0.0
    %1456 = vmatpush1.msra.mxu0 %v466
    %1457 = vmatprep.subr.mxu0 0.0
    %1458 = vmatpush1.msra.mxu0 %v467
    %1459 = vmatprep.subr.mxu0 0.0
    %1460 = vmatpush1.msra.mxu0 %v468
    %1461 = vmatprep.subr.mxu0 0.0
    %1462 = vmatpush1.msra.mxu0 %v469
    %1463 = vmatprep.subr.mxu0 0.0
    %1464 = vmatpush1.msra.mxu0 0.0
    %1465 = vmatprep.subr.mxu0 0.0
    %1466 = vmatpush1.msra.mxu0 0.0
    %1467 = vmatprep.subr.mxu0 0.0
    %1468 = vmatpush1.msra.mxu0 0.0
    %1469 = vmatprep.subr.mxu0 0.0
    %1470 = vmatpush1.msra.mxu0 0.0
    %1471 = vmatprep.subr.mxu0 0.0
    %1472 = vmatpush1.msra.mxu0 0.0
    %1473 = vmatprep.subr.mxu0 0.0
    %1474 = vmatpush1.msra.mxu0 0.0
    %1475 = vmatprep.subr.mxu0 0.0
    %1476 = vmatpush1.msra.mxu0 0.0
    %1477 = vmatprep.subr.mxu0 0.0
    %1478 = vmatpush1.msra.mxu0 0.0
    %1479 = vmatprep.subr.mxu0 0.0
    %1480 = vmatpush1.msra.mxu0 0.0
    %1481 = vmatprep.subr.mxu0 0.0
    %1482 = vmatpush1.msra.mxu0 0.0
    %1483 = vmatprep.subr.mxu0 0.0
    %1484 = vmatpush1.msra.mxu0 0.0
    %1485 = vmatprep.subr.mxu0 0.0
    %1486 = vmatpush1.msra.mxu0 0.0
    %1487 = vmatprep.subr.mxu0 0.0
    %1488 = vmatpush1.msra.mxu0 0.0
    %1489 = vmatprep.subr.mxu0 0.0
    %1490 = vmatpush1.msra.mxu0 0.0
    %1491 = vmatprep.subr.mxu0 0.0
    %1492 = vmatpush1.msra.mxu0 0.0
    %1493 = vmatprep.subr.mxu0 0.0
    %1494 = vmatpush1.msra.mxu0 0.0
    %1495 = vmatprep.subr.mxu0 0.0
    %1496 = vmatpush1.msra.mxu0 0.0
    %1497 = vmatprep.subr.mxu0 0.0
    %1498 = vmatpush1.msra.mxu0 0.0
    %1499 = vmatprep.subr.mxu0 0.0
    %1500 = vmatpush1.msra.mxu0 0.0
    %1501 = vmatprep.subr.mxu0 0.0
    %1502 = vmatpush1.msra.mxu0 0.0
    %1503 = vmatprep.subr.mxu0 0.0
    %1504 = vmatpush1.msra.mxu0 0.0
    %1505 = vmatprep.subr.mxu0 0.0
    %1506 = vmatpush1.msra.mxu0 0.0
    %1507 = vmatprep.subr.mxu0 0.0
    %1508 = vmatpush1.msra.mxu0 0.0
    %1509 = vmatprep.subr.mxu0 0.0
    %1510 = vmatpush1.msra.mxu0 0.0
    %1511 = vmatprep.subr.mxu0 0.0
    %1512 = vmatpush1.msra.mxu0 0.0
    %1513 = vmatprep.subr.mxu0 0.0
    %1514 = vmatpush1.msra.mxu0 0.0
    %1515 = vmatprep.subr.mxu0 0.0
    %1516 = vmatpush1.msra.mxu0 0.0
    %1517 = vmatprep.subr.mxu0 0.0
    %1518 = vmatpush1.msra.mxu0 0.0
    %1519 = vmatprep.mubr.f32.mxu0 0.0
    %1520 = vmatmul.mubr.f32.gmra.mrb[0].mxu0 %v1453
    %v1521 = vpop.f32.mrb[0].mxu0
    %v1522 = vadd.f32 0.0, %v1521
    %v1523 = vpop.f32.mrb[0].mxu0
    %1524 = vdwg.mxu0
    %v1525 = vadd.f32 %v1451, %v1522
    %s1526 = scalar_lea.vmem [#allocation3], 32
    %v1527 = vld [vmem:[%s1526] sm:$0xff]
    %1528 = vmatprep.subr.mxu0 0.0
    %1529 = vmatpush1.msra.mxu0 %v470
    %1530 = vmatprep.subr.mxu0 0.0
    %1531 = vmatpush1.msra.mxu0 %v471
    %1532 = vmatprep.subr.mxu0 0.0
    %1533 = vmatpush1.msra.mxu0 %v472
    %1534 = vmatprep.subr.mxu0 0.0
    %1535 = vmatpush1.msra.mxu0 %v473
    %1536 = vmatprep.subr.mxu0 0.0
    %1537 = vmatpush1.msra.mxu0 0.0
    %1538 = vmatprep.subr.mxu0 0.0
    %1539 = vmatpush1.msra.mxu0 0.0
    %1540 = vmatprep.subr.mxu0 0.0
    %1541 = vmatpush1.msra.mxu0 0.0
    %1542 = vmatprep.subr.mxu0 0.0
    %1543 = vmatpush1.msra.mxu0 0.0
    %1544 = vmatprep.subr.mxu0 0.0
    %1545 = vmatpush1.msra.mxu0 0.0
    %1546 = vmatprep.subr.mxu0 0.0
    %1547 = vmatpush1.msra.mxu0 0.0
    %1548 = vmatprep.subr.mxu0 0.0
    %1549 = vmatpush1.msra.mxu0 0.0
    %1550 = vmatprep.subr.mxu0 0.0
    %1551 = vmatpush1.msra.mxu0 0.0
    %1552 = vmatprep.subr.mxu0 0.0
    %1553 = vmatpush1.msra.mxu0 0.0
    %1554 = vmatprep.subr.mxu0 0.0
    %1555 = vmatpush1.msra.mxu0 0.0
    %1556 = vmatprep.subr.mxu0 0.0
    %1557 = vmatpush1.msra.mxu0 0.0
    %1558 = vmatprep.subr.mxu0 0.0
    %1559 = vmatpush1.msra.mxu0 0.0
    %1560 = vmatprep.subr.mxu0 0.0
    %1561 = vmatpush1.msra.mxu0 0.0
    %1562 = vmatprep.subr.mxu0 0.0
    %1563 = vmatpush1.msra.mxu0 0.0
    %1564 = vmatprep.subr.mxu0 0.0
    %1565 = vmatpush1.msra.mxu0 0.0
    %1566 = vmatprep.subr.mxu0 0.0
    %1567 = vmatpush1.msra.mxu0 0.0
    %1568 = vmatprep.subr.mxu0 0.0
    %1569 = vmatpush1.msra.mxu0 0.0
    %1570 = vmatprep.subr.mxu0 0.0
    %1571 = vmatpush1.msra.mxu0 0.0
    %1572 = vmatprep.subr.mxu0 0.0
    %1573 = vmatpush1.msra.mxu0 0.0
    %1574 = vmatprep.subr.mxu0 0.0
    %1575 = vmatpush1.msra.mxu0 0.0
    %1576 = vmatprep.subr.mxu0 0.0
    %1577 = vmatpush1.msra.mxu0 0.0
    %1578 = vmatprep.subr.mxu0 0.0
    %1579 = vmatpush1.msra.mxu0 0.0
    %1580 = vmatprep.subr.mxu0 0.0
    %1581 = vmatpush1.msra.mxu0 0.0
    %1582 = vmatprep.subr.mxu0 0.0
    %1583 = vmatpush1.msra.mxu0 0.0
    %1584 = vmatprep.subr.mxu0 0.0
    %1585 = vmatpush1.msra.mxu0 0.0
    %1586 = vmatprep.subr.mxu0 0.0
    %1587 = vmatpush1.msra.mxu0 0.0
    %1588 = vmatprep.subr.mxu0 0.0
    %1589 = vmatpush1.msra.mxu0 0.0
    %1590 = vmatprep.subr.mxu0 0.0
    %1591 = vmatpush1.msra.mxu0 0.0
    %1592 = vmatprep.mubr.f32.mxu0 0.0
    %1593 = vmatmul.mubr.f32.gmra.mrb[0].mxu0 %v1453
    %v1594 = vpop.f32.mrb[0].mxu0
    %v1595 = vadd.f32 0.0, %v1594
    %v1596 = vpop.f32.mrb[0].mxu0
    %1597 = vdwg.mxu0
    %v1598 = vadd.f32 %v1527, %v1595
    %1599 = vmatprep.subr.mxu0 0.0
    %1600 = vmatpush1.msra.mxu0 %v474
    %1601 = vmatprep.subr.mxu0 0.0
    %1602 = vmatpush1.msra.mxu0 %v475
    %1603 = vmatprep.subr.mxu0 0.0
    %1604 = vmatpush1.msra.mxu0 %v476
    %1605 = vmatprep.subr.mxu0 0.0
    %1606 = vmatpush1.msra.mxu0 %v477
    %1607 = vmatprep.subr.mxu0 0.0
    %1608 = vmatpush1.msra.mxu0 0.0
    %1609 = vmatprep.subr.mxu0 0.0
    %1610 = vmatpush1.msra.mxu0 0.0
    %1611 = vmatprep.subr.mxu0 0.0
    %1612 = vmatpush1.msra.mxu0 0.0
    %1613 = vmatprep.subr.mxu0 0.0
    %1614 = vmatpush1.msra.mxu0 0.0
    %1615 = vmatprep.subr.mxu0 0.0
    %1616 = vmatpush1.msra.mxu0 0.0
    %1617 = vmatprep.subr.mxu0 0.0
    %1618 = vmatpush1.msra.mxu0 0.0
    %1619 = vmatprep.subr.mxu0 0.0
    %1620 = vmatpush1.msra.mxu0 0.0
    %1621 = vmatprep.subr.mxu0 0.0
    %1622 = vmatpush1.msra.mxu0 0.0
    %1623 = vmatprep.subr.mxu0 0.0
    %1624 = vmatpush1.msra.mxu0 0.0
    %1625 = vmatprep.subr.mxu0 0.0
    %1626 = vmatpush1.msra.mxu0 0.0
    %1627 = vmatprep.subr.mxu0 0.0
    %1628 = vmatpush1.msra.mxu0 0.0
    %1629 = vmatprep.subr.mxu0 0.0
    %1630 = vmatpush1.msra.mxu0 0.0
    %1631 = vmatprep.subr.mxu0 0.0
    %1632 = vmatpush1.msra.mxu0 0.0
    %1633 = vmatprep.subr.mxu0 0.0
    %1634 = vmatpush1.msra.mxu0 0.0
    %1635 = vmatprep.subr.mxu0 0.0
    %1636 = vmatpush1.msra.mxu0 0.0
    %1637 = vmatprep.subr.mxu0 0.0
    %1638 = vmatpush1.msra.mxu0 0.0
    %1639 = vmatprep.subr.mxu0 0.0
    %1640 = vmatpush1.msra.mxu0 0.0
    %1641 = vmatprep.subr.mxu0 0.0
    %1642 = vmatpush1.msra.mxu0 0.0
    %1643 = vmatprep.subr.mxu0 0.0
    %1644 = vmatpush1.msra.mxu0 0.0
    %1645 = vmatprep.subr.mxu0 0.0
    %1646 = vmatpush1.msra.mxu0 0.0
    %1647 = vmatprep.subr.mxu0 0.0
    %1648 = vmatpush1.msra.mxu0 0.0
    %1649 = vmatprep.subr.mxu0 0.0
    %1650 = vmatpush1.msra.mxu0 0.0
    %1651 = vmatprep.subr.mxu0 0.0
    %1652 = vmatpush1.msra.mxu0 0.0
    %1653 = vmatprep.subr.mxu0 0.0
    %1654 = vmatpush1.msra.mxu0 0.0
    %1655 = vmatprep.subr.mxu0 0.0
    %1656 = vmatpush1.msra.mxu0 0.0
    %1657 = vmatprep.subr.mxu0 0.0
    %1658 = vmatpush1.msra.mxu0 0.0
    %1659 = vmatprep.subr.mxu0 0.0
    %1660 = vmatpush1.msra.mxu0 0.0
    %1661 = vmatprep.subr.mxu0 0.0
    %1662 = vmatpush1.msra.mxu0 0.0
    %1663 = vmatprep.mubr.f32.mxu0 0.0
    %1664 = vmatmul.mubr.f32.gmra.mrb[0].mxu0 %v1453
    %v1665 = vpop.f32.mrb[0].mxu0
    %v1666 = vadd.f32 %v483, %v1665
    %v1667 = vpop.f32.mrb[0].mxu0
    %1668 = vdwg.mxu0
    %v1669 = vxor.u32 %v1525, 2147483648
    %v1670 = vmul.f32 %v1669, 1.442695
    %v1671 = vpow.pop %v1670
    %v1672 = vadd.f32 %v1671, 1.0
    %v1673 = vrcp.pop %v1672
    %v1674 = vmul.f32 1.0, %v1673
    %v1675 = vxor.u32 %v1598, 2147483648
    %v1676 = vmul.f32 %v1675, 1.442695
    %v1677 = vpow.pop %v1676
    %v1678 = vadd.f32 %v1677, 1.0
    %v1679 = vrcp.pop %v1678
    %v1680 = vmul.f32 1.0, %v1679
    %s1681 = scalar_lea.vmem [#allocation4], 32
    %v1682 = vld [vmem:[%s1681] sm:$0xff]
    %v1683 = vmul.f32 %v1674, %v1666
    %v1684 = vadd.f32 %v1682, %v1683
    %v1685 = vtanh.pop %v1684
    %v1686 = vsub.f32 1.0, %v1680
    %v1687 = vmul.f32 %v1686, %v1685
    %v1688 = vmul.f32 %v1680, %v1447
    %v1689 = vadd.f32 %v1687, %v1688
    %s1690 = scalar_lea.vmem [#allocation5], 32
    %1691 = vst.msk [vmem:[%s1690] sm:$0xff] %vm207, %v1689
    %s1692 = scalar_lea.vmem [#allocation2], 40
    %v1693 = vld [vmem:[%s1692] sm:$0xff]
    %v1695 = vsel %vm207, %v1689, 0
    %1697 = vmatprep.subr.mxu0 0.0
    %1698 = vmatpush1.msra.mxu0 %v466
    %1699 = vmatprep.subr.mxu0 0.0
    %1700 = vmatpush1.msra.mxu0 %v467
    %1701 = vmatprep.subr.mxu0 0.0
    %1702 = vmatpush1.msra.mxu0 %v468
    %1703 = vmatprep.subr.mxu0 0.0
    %1704 = vmatpush1.msra.mxu0 %v469
    %1705 = vmatprep.subr.mxu0 0.0
    %1706 = vmatpush1.msra.mxu0 0.0
    %1707 = vmatprep.subr.mxu0 0.0
    %1708 = vmatpush1.msra.mxu0 0.0
    %1709 = vmatprep.subr.mxu0 0.0
    %1710 = vmatpush1.msra.mxu0 0.0
    %1711 = vmatprep.subr.mxu0 0.0
    %1712 = vmatpush1.msra.mxu0 0.0
    %1713 = vmatprep.subr.mxu0 0.0
    %1714 = vmatpush1.msra.mxu0 0.0
    %1715 = vmatprep.subr.mxu0 0.0
    %1716 = vmatpush1.msra.mxu0 0.0
    %1717 = vmatprep.subr.mxu0 0.0
    %1718 = vmatpush1.msra.mxu0 0.0
    %1719 = vmatprep.subr.mxu0 0.0
    %1720 = vmatpush1.msra.mxu0 0.0
    %1721 = vmatprep.subr.mxu0 0.0
    %1722 = vmatpush1.msra.mxu0 0.0
    %1723 = vmatprep.subr.mxu0 0.0
    %1724 = vmatpush1.msra.mxu0 0.0
    %1725 = vmatprep.subr.mxu0 0.0
    %1726 = vmatpush1.msra.mxu0 0.0
    %1727 = vmatprep.subr.mxu0 0.0
    %1728 = vmatpush1.msra.mxu0 0.0
    %1729 = vmatprep.subr.mxu0 0.0
    %1730 = vmatpush1.msra.mxu0 0.0
    %1731 = vmatprep.subr.mxu0 0.0
    %1732 = vmatpush1.msra.mxu0 0.0
    %1733 = vmatprep.subr.mxu0 0.0
    %1734 = vmatpush1.msra.mxu0 0.0
    %1735 = vmatprep.subr.mxu0 0.0
    %1736 = vmatpush1.msra.mxu0 0.0
    %1737 = vmatprep.subr.mxu0 0.0
    %1738 = vmatpush1.msra.mxu0 0.0
    %1739 = vmatprep.subr.mxu0 0.0
    %1740 = vmatpush1.msra.mxu0 0.0
    %1741 = vmatprep.subr.mxu0 0.0
    %1742 = vmatpush1.msra.mxu0 0.0
    %1743 = vmatprep.subr.mxu0 0.0
    %1744 = vmatpush1.msra.mxu0 0.0
    %1745 = vmatprep.subr.mxu0 0.0
    %1746 = vmatpush1.msra.mxu0 0.0
    %1747 = vmatprep.subr.mxu0 0.0
    %1748 = vmatpush1.msra.mxu0 0.0
    %1749 = vmatprep.subr.mxu0 0.0
    %1750 = vmatpush1.msra.mxu0 0.0
    %1751 = vmatprep.subr.mxu0 0.0
    %1752 = vmatpush1.msra.mxu0 0.0
    %1753 = vmatprep.subr.mxu0 0.0
    %1754 = vmatpush1.msra.mxu0 0.0
    %1755 = vmatprep.subr.mxu0 0.0
    %1756 = vmatpush1.msra.mxu0 0.0
    %1757 = vmatprep.subr.mxu0 0.0
    %1758 = vmatpush1.msra.mxu0 0.0
    %1759 = vmatprep.subr.mxu0 0.0
    %1760 = vmatpush1.msra.mxu0 0.0
    %1761 = vmatprep.mubr.f32.mxu0 0.0
    %1762 = vmatmul.mubr.f32.gmra.mrb[0].mxu0 %v1695
    %v1763 = vpop.f32.mrb[0].mxu0
    %v1764 = vadd.f32 0.0, %v1763
    %v1765 = vpop.f32.mrb[0].mxu0
    %1766 = vdwg.mxu0
    %v1767 = vadd.f32 %v1693, %v1764
    %s1768 = scalar_lea.vmem [#allocation3], 40
    %v1769 = vld [vmem:[%s1768] sm:$0xff]
    %1770 = vmatprep.subr.mxu0 0.0
    %1771 = vmatpush1.msra.mxu0 %v470
    %1772 = vmatprep.subr.mxu0 0.0
    %1773 = vmatpush1.msra.mxu0 %v471
    %1774 = vmatprep.subr.mxu0 0.0
    %1775 = vmatpush1.msra.mxu0 %v472
    %1776 = vmatprep.subr.mxu0 0.0
    %1777 = vmatpush1.msra.mxu0 %v473
    %1778 = vmatprep.subr.mxu0 0.0
    %1779 = vmatpush1.msra.mxu0 0.0
    %1780 = vmatprep.subr.mxu0 0.0
    %1781 = vmatpush1.msra.mxu0 0.0
    %1782 = vmatprep.subr.mxu0 0.0
    %1783 = vmatpush1.msra.mxu0 0.0
    %1784 = vmatprep.subr.mxu0 0.0
    %1785 = vmatpush1.msra.mxu0 0.0
    %1786 = vmatprep.subr.mxu0 0.0
    %1787 = vmatpush1.msra.mxu0 0.0
    %1788 = vmatprep.subr.mxu0 0.0
    %1789 = vmatpush1.msra.mxu0 0.0
    %1790 = vmatprep.subr.mxu0 0.0
    %1791 = vmatpush1.msra.mxu0 0.0
    %1792 = vmatprep.subr.mxu0 0.0
    %1793 = vmatpush1.msra.mxu0 0.0
    %1794 = vmatprep.subr.mxu0 0.0
    %1795 = vmatpush1.msra.mxu0 0.0
    %1796 = vmatprep.subr.mxu0 0.0
    %1797 = vmatpush1.msra.mxu0 0.0
    %1798 = vmatprep.subr.mxu0 0.0
    %1799 = vmatpush1.msra.mxu0 0.0
    %1800 = vmatprep.subr.mxu0 0.0
    %1801 = vmatpush1.msra.mxu0 0.0
    %1802 = vmatprep.subr.mxu0 0.0
    %1803 = vmatpush1.msra.mxu0 0.0
    %1804 = vmatprep.subr.mxu0 0.0
    %1805 = vmatpush1.msra.mxu0 0.0
    %1806 = vmatprep.subr.mxu0 0.0
    %1807 = vmatpush1.msra.mxu0 0.0
    %1808 = vmatprep.subr.mxu0 0.0
    %1809 = vmatpush1.msra.mxu0 0.0
    %1810 = vmatprep.subr.mxu0 0.0
    %1811 = vmatpush1.msra.mxu0 0.0
    %1812 = vmatprep.subr.mxu0 0.0
    %1813 = vmatpush1.msra.mxu0 0.0
    %1814 = vmatprep.subr.mxu0 0.0
    %1815 = vmatpush1.msra.mxu0 0.0
    %1816 = vmatprep.subr.mxu0 0.0
    %1817 = vmatpush1.msra.mxu0 0.0
    %1818 = vmatprep.subr.mxu0 0.0
    %1819 = vmatpush1.msra.mxu0 0.0
    %1820 = vmatprep.subr.mxu0 0.0
    %1821 = vmatpush1.msra.mxu0 0.0
    %1822 = vmatprep.subr.mxu0 0.0
    %1823 = vmatpush1.msra.mxu0 0.0
    %1824 = vmatprep.subr.mxu0 0.0
    %1825 = vmatpush1.msra.mxu0 0.0
    %1826 = vmatprep.subr.mxu0 0.0
    %1827 = vmatpush1.msra.mxu0 0.0
    %1828 = vmatprep.subr.mxu0 0.0
    %1829 = vmatpush1.msra.mxu0 0.0
    %1830 = vmatprep.subr.mxu0 0.0
    %1831 = vmatpush1.msra.mxu0 0.0
    %1832 = vmatprep.subr.mxu0 0.0
    %1833 = vmatpush1.msra.mxu0 0.0
    %1834 = vmatprep.mubr.f32.mxu0 0.0
    %1835 = vmatmul.mubr.f32.gmra.mrb[0].mxu0 %v1695
    %v1836 = vpop.f32.mrb[0].mxu0
    %v1837 = vadd.f32 0.0, %v1836
    %v1838 = vpop.f32.mrb[0].mxu0
    %1839 = vdwg.mxu0
    %v1840 = vadd.f32 %v1769, %v1837
    %1841 = vmatprep.subr.mxu0 0.0
    %1842 = vmatpush1.msra.mxu0 %v474
    %1843 = vmatprep.subr.mxu0 0.0
    %1844 = vmatpush1.msra.mxu0 %v475
    %1845 = vmatprep.subr.mxu0 0.0
    %1846 = vmatpush1.msra.mxu0 %v476
    %1847 = vmatprep.subr.mxu0 0.0
    %1848 = vmatpush1.msra.mxu0 %v477
    %1849 = vmatprep.subr.mxu0 0.0
    %1850 = vmatpush1.msra.mxu0 0.0
    %1851 = vmatprep.subr.mxu0 0.0
    %1852 = vmatpush1.msra.mxu0 0.0
    %1853 = vmatprep.subr.mxu0 0.0
    %1854 = vmatpush1.msra.mxu0 0.0
    %1855 = vmatprep.subr.mxu0 0.0
    %1856 = vmatpush1.msra.mxu0 0.0
    %1857 = vmatprep.subr.mxu0 0.0
    %1858 = vmatpush1.msra.mxu0 0.0
    %1859 = vmatprep.subr.mxu0 0.0
    %1860 = vmatpush1.msra.mxu0 0.0
    %1861 = vmatprep.subr.mxu0 0.0
    %1862 = vmatpush1.msra.mxu0 0.0
    %1863 = vmatprep.subr.mxu0 0.0
    %1864 = vmatpush1.msra.mxu0 0.0
    %1865 = vmatprep.subr.mxu0 0.0
    %1866 = vmatpush1.msra.mxu0 0.0
    %1867 = vmatprep.subr.mxu0 0.0
    %1868 = vmatpush1.msra.mxu0 0.0
    %1869 = vmatprep.subr.mxu0 0.0
    %1870 = vmatpush1.msra.mxu0 0.0
    %1871 = vmatprep.subr.mxu0 0.0
    %1872 = vmatpush1.msra.mxu0 0.0
    %1873 = vmatprep.subr.mxu0 0.0
    %1874 = vmatpush1.msra.mxu0 0.0
    %1875 = vmatprep.subr.mxu0 0.0
    %1876 = vmatpush1.msra.mxu0 0.0
    %1877 = vmatprep.subr.mxu0 0.0
    %1878 = vmatpush1.msra.mxu0 0.0
    %1879 = vmatprep.subr.mxu0 0.0
    %1880 = vmatpush1.msra.mxu0 0.0
    %1881 = vmatprep.subr.mxu0 0.0
    %1882 = vmatpush1.msra.mxu0 0.0
    %1883 = vmatprep.subr.mxu0 0.0
    %1884 = vmatpush1.msra.mxu0 0.0
    %1885 = vmatprep.subr.mxu0 0.0
    %1886 = vmatpush1.msra.mxu0 0.0
    %1887 = vmatprep.subr.mxu0 0.0
    %1888 = vmatpush1.msra.mxu0 0.0
    %1889 = vmatprep.subr.mxu0 0.0
    %1890 = vmatpush1.msra.mxu0 0.0
    %1891 = vmatprep.subr.mxu0 0.0
    %1892 = vmatpush1.msra.mxu0 0.0
    %1893 = vmatprep.subr.mxu0 0.0
    %1894 = vmatpush1.msra.mxu0 0.0
    %1895 = vmatprep.subr.mxu0 0.0
    %1896 = vmatpush1.msra.mxu0 0.0
    %1897 = vmatprep.subr.mxu0 0.0
    %1898 = vmatpush1.msra.mxu0 0.0
    %1899 = vmatprep.subr.mxu0 0.0
    %1900 = vmatpush1.msra.mxu0 0.0
    %1901 = vmatprep.subr.mxu0 0.0
    %1902 = vmatpush1.msra.mxu0 0.0
    %1903 = vmatprep.subr.mxu0 0.0
    %1904 = vmatpush1.msra.mxu0 0.0
    %1905 = vmatprep.mubr.f32.mxu0 0.0
    %1906 = vmatmul.mubr.f32.gmra.mrb[0].mxu0 %v1695
    %v1907 = vpop.f32.mrb[0].mxu0
    %v1908 = vadd.f32 %v483, %v1907
    %v1909 = vpop.f32.mrb[0].mxu0
    %1910 = vdwg.mxu0
    %v1911 = vxor.u32 %v1767, 2147483648
    %v1912 = vmul.f32 %v1911, 1.442695
    %v1913 = vpow.pop %v1912
    %v1914 = vadd.f32 %v1913, 1.0
    %v1915 = vrcp.pop %v1914
    %v1916 = vmul.f32 1.0, %v1915
    %v1917 = vxor.u32 %v1840, 2147483648
    %v1918 = vmul.f32 %v1917, 1.442695
    %v1919 = vpow.pop %v1918
    %v1920 = vadd.f32 %v1919, 1.0
    %v1921 = vrcp.pop %v1920
    %v1922 = vmul.f32 1.0, %v1921
    %s1923 = scalar_lea.vmem [#allocation4], 40
    %v1924 = vld [vmem:[%s1923] sm:$0xff]
    %v1925 = vmul.f32 %v1916, %v1908
    %v1926 = vadd.f32 %v1924, %v1925
    %v1927 = vtanh.pop %v1926
    %v1928 = vsub.f32 1.0, %v1922
    %v1929 = vmul.f32 %v1928, %v1927
    %v1930 = vmul.f32 %v1922, %v1689
    %v1931 = vadd.f32 %v1929, %v1930
    %s1932 = scalar_lea.vmem [#allocation5], 40
    %1933 = vst.msk [vmem:[%s1932] sm:$0xff] %vm207, %v1931
    %s1934 = scalar_lea.vmem [#allocation2], 48
    %v1935 = vld [vmem:[%s1934] sm:$0xff]
    %v1937 = vsel %vm207, %v1931, 0
    %1939 = vmatprep.subr.mxu0 0.0
    %1940 = vmatpush1.msra.mxu0 %v466
    %1941 = vmatprep.subr.mxu0 0.0
    %1942 = vmatpush1.msra.mxu0 %v467
    %1943 = vmatprep.subr.mxu0 0.0
    %1944 = vmatpush1.msra.mxu0 %v468
    %1945 = vmatprep.subr.mxu0 0.0
    %1946 = vmatpush1.msra.mxu0 %v469
    %1947 = vmatprep.subr.mxu0 0.0
    %1948 = vmatpush1.msra.mxu0 0.0
    %1949 = vmatprep.subr.mxu0 0.0
    %1950 = vmatpush1.msra.mxu0 0.0
    %1951 = vmatprep.subr.mxu0 0.0
    %1952 = vmatpush1.msra.mxu0 0.0
    %1953 = vmatprep.subr.mxu0 0.0
    %1954 = vmatpush1.msra.mxu0 0.0
    %1955 = vmatprep.subr.mxu0 0.0
    %1956 = vmatpush1.msra.mxu0 0.0
    %1957 = vmatprep.subr.mxu0 0.0
    %1958 = vmatpush1.msra.mxu0 0.0
    %1959 = vmatprep.subr.mxu0 0.0
    %1960 = vmatpush1.msra.mxu0 0.0
    %1961 = vmatprep.subr.mxu0 0.0
    %1962 = vmatpush1.msra.mxu0 0.0
    %1963 = vmatprep.subr.mxu0 0.0
    %1964 = vmatpush1.msra.mxu0 0.0
    %1965 = vmatprep.subr.mxu0 0.0
    %1966 = vmatpush1.msra.mxu0 0.0
    %1967 = vmatprep.subr.mxu0 0.0
    %1968 = vmatpush1.msra.mxu0 0.0
    %1969 = vmatprep.subr.mxu0 0.0
    %1970 = vmatpush1.msra.mxu0 0.0
    %1971 = vmatprep.subr.mxu0 0.0
    %1972 = vmatpush1.msra.mxu0 0.0
    %1973 = vmatprep.subr.mxu0 0.0
    %1974 = vmatpush1.msra.mxu0 0.0
    %1975 = vmatprep.subr.mxu0 0.0
    %1976 = vmatpush1.msra.mxu0 0.0
    %1977 = vmatprep.subr.mxu0 0.0
    %1978 = vmatpush1.msra.mxu0 0.0
    %1979 = vmatprep.subr.mxu0 0.0
    %1980 = vmatpush1.msra.mxu0 0.0
    %1981 = vmatprep.subr.mxu0 0.0
    %1982 = vmatpush1.msra.mxu0 0.0
    %1983 = vmatprep.subr.mxu0 0.0
    %1984 = vmatpush1.msra.mxu0 0.0
    %1985 = vmatprep.subr.mxu0 0.0
    %1986 = vmatpush1.msra.mxu0 0.0
    %1987 = vmatprep.subr.mxu0 0.0
    %1988 = vmatpush1.msra.mxu0 0.0
    %1989 = vmatprep.subr.mxu0 0.0
    %1990 = vmatpush1.msra.mxu0 0.0
    %1991 = vmatprep.subr.mxu0 0.0
    %1992 = vmatpush1.msra.mxu0 0.0
    %1993 = vmatprep.subr.mxu0 0.0
    %1994 = vmatpush1.msra.mxu0 0.0
    %1995 = vmatprep.subr.mxu0 0.0
    %1996 = vmatpush1.msra.mxu0 0.0
    %1997 = vmatprep.subr.mxu0 0.0
    %1998 = vmatpush1.msra.mxu0 0.0
    %1999 = vmatprep.subr.mxu0 0.0
    %2000 = vmatpush1.msra.mxu0 0.0
    %2001 = vmatprep.subr.mxu0 0.0
    %2002 = vmatpush1.msra.mxu0 0.0
    %2003 = vmatprep.mubr.f32.mxu0 0.0
    %2004 = vmatmul.mubr.f32.gmra.mrb[0].mxu0 %v1937
    %v2005 = vpop.f32.mrb[0].mxu0
    %v2006 = vadd.f32 0.0, %v2005
    %v2007 = vpop.f32.mrb[0].mxu0
    %2008 = vdwg.mxu0
    %v2009 = vadd.f32 %v1935, %v2006
    %s2010 = scalar_lea.vmem [#allocation3], 48
    %v2011 = vld [vmem:[%s2010] sm:$0xff]
    %2012 = vmatprep.subr.mxu0 0.0
    %2013 = vmatpush1.msra.mxu0 %v470
    %2014 = vmatprep.subr.mxu0 0.0
    %2015 = vmatpush1.msra.mxu0 %v471
    %2016 = vmatprep.subr.mxu0 0.0
    %2017 = vmatpush1.msra.mxu0 %v472
    %2018 = vmatprep.subr.mxu0 0.0
    %2019 = vmatpush1.msra.mxu0 %v473
    %2020 = vmatprep.subr.mxu0 0.0
    %2021 = vmatpush1.msra.mxu0 0.0
    %2022 = vmatprep.subr.mxu0 0.0
    %2023 = vmatpush1.msra.mxu0 0.0
    %2024 = vmatprep.subr.mxu0 0.0
    %2025 = vmatpush1.msra.mxu0 0.0
    %2026 = vmatprep.subr.mxu0 0.0
    %2027 = vmatpush1.msra.mxu0 0.0
    %2028 = vmatprep.subr.mxu0 0.0
    %2029 = vmatpush1.msra.mxu0 0.0
    %2030 = vmatprep.subr.mxu0 0.0
    %2031 = vmatpush1.msra.mxu0 0.0
    %2032 = vmatprep.subr.mxu0 0.0
    %2033 = vmatpush1.msra.mxu0 0.0
    %2034 = vmatprep.subr.mxu0 0.0
    %2035 = vmatpush1.msra.mxu0 0.0
    %2036 = vmatprep.subr.mxu0 0.0
    %2037 = vmatpush1.msra.mxu0 0.0
    %2038 = vmatprep.subr.mxu0 0.0
    %2039 = vmatpush1.msra.mxu0 0.0
    %2040 = vmatprep.subr.mxu0 0.0
    %2041 = vmatpush1.msra.mxu0 0.0
    %2042 = vmatprep.subr.mxu0 0.0
    %2043 = vmatpush1.msra.mxu0 0.0
    %2044 = vmatprep.subr.mxu0 0.0
    %2045 = vmatpush1.msra.mxu0 0.0
    %2046 = vmatprep.subr.mxu0 0.0
    %2047 = vmatpush1.msra.mxu0 0.0
    %2048 = vmatprep.subr.mxu0 0.0
    %2049 = vmatpush1.msra.mxu0 0.0
    %2050 = vmatprep.subr.mxu0 0.0
    %2051 = vmatpush1.msra.mxu0 0.0
    %2052 = vmatprep.subr.mxu0 0.0
    %2053 = vmatpush1.msra.mxu0 0.0
    %2054 = vmatprep.subr.mxu0 0.0
    %2055 = vmatpush1.msra.mxu0 0.0
    %2056 = vmatprep.subr.mxu0 0.0
    %2057 = vmatpush1.msra.mxu0 0.0
    %2058 = vmatprep.subr.mxu0 0.0
    %2059 = vmatpush1.msra.mxu0 0.0
    %2060 = vmatprep.subr.mxu0 0.0
    %2061 = vmatpush1.msra.mxu0 0.0
    %2062 = vmatprep.subr.mxu0 0.0
    %2063 = vmatpush1.msra.mxu0 0.0
    %2064 = vmatprep.subr.mxu0 0.0
    %2065 = vmatpush1.msra.mxu0 0.0
    %2066 = vmatprep.subr.mxu0 0.0
    %2067 = vmatpush1.msra.mxu0 0.0
    %2068 = vmatprep.subr.mxu0 0.0
    %2069 = vmatpush1.msra.mxu0 0.0
    %2070 = vmatprep.subr.mxu0 0.0
    %2071 = vmatpush1.msra.mxu0 0.0
    %2072 = vmatprep.subr.mxu0 0.0
    %2073 = vmatpush1.msra.mxu0 0.0
    %2074 = vmatprep.subr.mxu0 0.0
    %2075 = vmatpush1.msra.mxu0 0.0
    %2076 = vmatprep.mubr.f32.mxu0 0.0
    %2077 = vmatmul.mubr.f32.gmra.mrb[0].mxu0 %v1937
    %v2078 = vpop.f32.mrb[0].mxu0
    %v2079 = vadd.f32 0.0, %v2078
    %v2080 = vpop.f32.mrb[0].mxu0
    %2081 = vdwg.mxu0
    %v2082 = vadd.f32 %v2011, %v2079
    %2083 = vmatprep.subr.mxu0 0.0
    %2084 = vmatpush1.msra.mxu0 %v474
    %2085 = vmatprep.subr.mxu0 0.0
    %2086 = vmatpush1.msra.mxu0 %v475
    %2087 = vmatprep.subr.mxu0 0.0
    %2088 = vmatpush1.msra.mxu0 %v476
    %2089 = vmatprep.subr.mxu0 0.0
    %2090 = vmatpush1.msra.mxu0 %v477
    %2091 = vmatprep.subr.mxu0 0.0
    %2092 = vmatpush1.msra.mxu0 0.0
    %2093 = vmatprep.subr.mxu0 0.0
    %2094 = vmatpush1.msra.mxu0 0.0
    %2095 = vmatprep.subr.mxu0 0.0
    %2096 = vmatpush1.msra.mxu0 0.0
    %2097 = vmatprep.subr.mxu0 0.0
    %2098 = vmatpush1.msra.mxu0 0.0
    %2099 = vmatprep.subr.mxu0 0.0
    %2100 = vmatpush1.msra.mxu0 0.0
    %2101 = vmatprep.subr.mxu0 0.0
    %2102 = vmatpush1.msra.mxu0 0.0
    %2103 = vmatprep.subr.mxu0 0.0
    %2104 = vmatpush1.msra.mxu0 0.0
    %2105 = vmatprep.subr.mxu0 0.0
    %2106 = vmatpush1.msra.mxu0 0.0
    %2107 = vmatprep.subr.mxu0 0.0
    %2108 = vmatpush1.msra.mxu0 0.0
    %2109 = vmatprep.subr.mxu0 0.0
    %2110 = vmatpush1.msra.mxu0 0.0
    %2111 = vmatprep.subr.mxu0 0.0
    %2112 = vmatpush1.msra.mxu0 0.0
    %2113 = vmatprep.subr.mxu0 0.0
    %2114 = vmatpush1.msra.mxu0 0.0
    %2115 = vmatprep.subr.mxu0 0.0
    %2116 = vmatpush1.msra.mxu0 0.0
    %2117 = vmatprep.subr.mxu0 0.0
    %2118 = vmatpush1.msra.mxu0 0.0
    %2119 = vmatprep.subr.mxu0 0.0
    %2120 = vmatpush1.msra.mxu0 0.0
    %2121 = vmatprep.subr.mxu0 0.0
    %2122 = vmatpush1.msra.mxu0 0.0
    %2123 = vmatprep.subr.mxu0 0.0
    %2124 = vmatpush1.msra.mxu0 0.0
    %2125 = vmatprep.subr.mxu0 0.0
    %2126 = vmatpush1.msra.mxu0 0.0
    %2127 = vmatprep.subr.mxu0 0.0
    %2128 = vmatpush1.msra.mxu0 0.0
    %2129 = vmatprep.subr.mxu0 0.0
    %2130 = vmatpush1.msra.mxu0 0.0
    %2131 = vmatprep.subr.mxu0 0.0
    %2132 = vmatpush1.msra.mxu0 0.0
    %2133 = vmatprep.subr.mxu0 0.0
    %2134 = vmatpush1.msra.mxu0 0.0
    %2135 = vmatprep.subr.mxu0 0.0
    %2136 = vmatpush1.msra.mxu0 0.0
    %2137 = vmatprep.subr.mxu0 0.0
    %2138 = vmatpush1.msra.mxu0 0.0
    %2139 = vmatprep.subr.mxu0 0.0
    %2140 = vmatpush1.msra.mxu0 0.0
    %2141 = vmatprep.subr.mxu0 0.0
    %2142 = vmatpush1.msra.mxu0 0.0
    %2143 = vmatprep.subr.mxu0 0.0
    %2144 = vmatpush1.msra.mxu0 0.0
    %2145 = vmatprep.subr.mxu0 0.0
    %2146 = vmatpush1.msra.mxu0 0.0
    %2147 = vmatprep.mubr.f32.mxu0 0.0
    %2148 = vmatmul.mubr.f32.gmra.mrb[0].mxu0 %v1937
    %v2149 = vpop.f32.mrb[0].mxu0
    %v2150 = vadd.f32 %v483, %v2149
    %v2151 = vpop.f32.mrb[0].mxu0
    %2152 = vdwg.mxu0
    %v2153 = vxor.u32 %v2009, 2147483648
    %v2154 = vmul.f32 %v2153, 1.442695
    %v2155 = vpow.pop %v2154
    %v2156 = vadd.f32 %v2155, 1.0
    %v2157 = vrcp.pop %v2156
    %v2158 = vmul.f32 1.0, %v2157
    %v2159 = vxor.u32 %v2082, 2147483648
    %v2160 = vmul.f32 %v2159, 1.442695
    %v2161 = vpow.pop %v2160
    %v2162 = vadd.f32 %v2161, 1.0
    %v2163 = vrcp.pop %v2162
    %v2164 = vmul.f32 1.0, %v2163
    %s2165 = scalar_lea.vmem [#allocation4], 48
    %v2166 = vld [vmem:[%s2165] sm:$0xff]
    %v2167 = vmul.f32 %v2158, %v2150
    %v2168 = vadd.f32 %v2166, %v2167
    %v2169 = vtanh.pop %v2168
    %v2170 = vsub.f32 1.0, %v2164
    %v2171 = vmul.f32 %v2170, %v2169
    %v2172 = vmul.f32 %v2164, %v1931
    %v2173 = vadd.f32 %v2171, %v2172
    %s2174 = scalar_lea.vmem [#allocation5], 48
    %2175 = vst.msk [vmem:[%s2174] sm:$0xff] %vm207, %v2173
    %s2176 = scalar_lea.vmem [#allocation2], 56
    %v2177 = vld [vmem:[%s2176] sm:$0xff]
    %v2179 = vsel %vm207, %v2173, 0
    %2181 = vmatprep.subr.mxu0 0.0
    %2182 = vmatpush1.msra.mxu0 %v466
    %2183 = vmatprep.subr.mxu0 0.0
    %2184 = vmatpush1.msra.mxu0 %v467
    %2185 = vmatprep.subr.mxu0 0.0
    %2186 = vmatpush1.msra.mxu0 %v468
    %2187 = vmatprep.subr.mxu0 0.0
    %2188 = vmatpush1.msra.mxu0 %v469
    %2189 = vmatprep.subr.mxu0 0.0
    %2190 = vmatpush1.msra.mxu0 0.0
    %2191 = vmatprep.subr.mxu0 0.0
    %2192 = vmatpush1.msra.mxu0 0.0
    %2193 = vmatprep.subr.mxu0 0.0
    %2194 = vmatpush1.msra.mxu0 0.0
    %2195 = vmatprep.subr.mxu0 0.0
    %2196 = vmatpush1.msra.mxu0 0.0
    %2197 = vmatprep.subr.mxu0 0.0
    %2198 = vmatpush1.msra.mxu0 0.0
    %2199 = vmatprep.subr.mxu0 0.0
    %2200 = vmatpush1.msra.mxu0 0.0
    %2201 = vmatprep.subr.mxu0 0.0
    %2202 = vmatpush1.msra.mxu0 0.0
    %2203 = vmatprep.subr.mxu0 0.0
    %2204 = vmatpush1.msra.mxu0 0.0
    %2205 = vmatprep.subr.mxu0 0.0
    %2206 = vmatpush1.msra.mxu0 0.0
    %2207 = vmatprep.subr.mxu0 0.0
    %2208 = vmatpush1.msra.mxu0 0.0
    %2209 = vmatprep.subr.mxu0 0.0
    %2210 = vmatpush1.msra.mxu0 0.0
    %2211 = vmatprep.subr.mxu0 0.0
    %2212 = vmatpush1.msra.mxu0 0.0
    %2213 = vmatprep.subr.mxu0 0.0
    %2214 = vmatpush1.msra.mxu0 0.0
    %2215 = vmatprep.subr.mxu0 0.0
    %2216 = vmatpush1.msra.mxu0 0.0
    %2217 = vmatprep.subr.mxu0 0.0
    %2218 = vmatpush1.msra.mxu0 0.0
    %2219 = vmatprep.subr.mxu0 0.0
    %2220 = vmatpush1.msra.mxu0 0.0
    %2221 = vmatprep.subr.mxu0 0.0
    %2222 = vmatpush1.msra.mxu0 0.0
    %2223 = vmatprep.subr.mxu0 0.0
    %2224 = vmatpush1.msra.mxu0 0.0
    %2225 = vmatprep.subr.mxu0 0.0
    %2226 = vmatpush1.msra.mxu0 0.0
    %2227 = vmatprep.subr.mxu0 0.0
    %2228 = vmatpush1.msra.mxu0 0.0
    %2229 = vmatprep.subr.mxu0 0.0
    %2230 = vmatpush1.msra.mxu0 0.0
    %2231 = vmatprep.subr.mxu0 0.0
    %2232 = vmatpush1.msra.mxu0 0.0
    %2233 = vmatprep.subr.mxu0 0.0
    %2234 = vmatpush1.msra.mxu0 0.0
    %2235 = vmatprep.subr.mxu0 0.0
    %2236 = vmatpush1.msra.mxu0 0.0
    %2237 = vmatprep.subr.mxu0 0.0
    %2238 = vmatpush1.msra.mxu0 0.0
    %2239 = vmatprep.subr.mxu0 0.0
    %2240 = vmatpush1.msra.mxu0 0.0
    %2241 = vmatprep.subr.mxu0 0.0
    %2242 = vmatpush1.msra.mxu0 0.0
    %2243 = vmatprep.subr.mxu0 0.0
    %2244 = vmatpush1.msra.mxu0 0.0
    %2245 = vmatprep.mubr.f32.mxu0 0.0
    %2246 = vmatmul.mubr.f32.gmra.mrb[0].mxu0 %v2179
    %v2247 = vpop.f32.mrb[0].mxu0
    %v2248 = vadd.f32 0.0, %v2247
    %v2249 = vpop.f32.mrb[0].mxu0
    %2250 = vdwg.mxu0
    %v2251 = vadd.f32 %v2177, %v2248
    %s2252 = scalar_lea.vmem [#allocation3], 56
    %v2253 = vld [vmem:[%s2252] sm:$0xff]
    %2254 = vmatprep.subr.mxu0 0.0
    %2255 = vmatpush1.msra.mxu0 %v470
    %2256 = vmatprep.subr.mxu0 0.0
    %2257 = vmatpush1.msra.mxu0 %v471
    %2258 = vmatprep.subr.mxu0 0.0
    %2259 = vmatpush1.msra.mxu0 %v472
    %2260 = vmatprep.subr.mxu0 0.0
    %2261 = vmatpush1.msra.mxu0 %v473
    %2262 = vmatprep.subr.mxu0 0.0
    %2263 = vmatpush1.msra.mxu0 0.0
    %2264 = vmatprep.subr.mxu0 0.0
    %2265 = vmatpush1.msra.mxu0 0.0
    %2266 = vmatprep.subr.mxu0 0.0
    %2267 = vmatpush1.msra.mxu0 0.0
    %2268 = vmatprep.subr.mxu0 0.0
    %2269 = vmatpush1.msra.mxu0 0.0
    %2270 = vmatprep.subr.mxu0 0.0
    %2271 = vmatpush1.msra.mxu0 0.0
    %2272 = vmatprep.subr.mxu0 0.0
    %2273 = vmatpush1.msra.mxu0 0.0
    %2274 = vmatprep.subr.mxu0 0.0
    %2275 = vmatpush1.msra.mxu0 0.0
    %2276 = vmatprep.subr.mxu0 0.0
    %2277 = vmatpush1.msra.mxu0 0.0
    %2278 = vmatprep.subr.mxu0 0.0
    %2279 = vmatpush1.msra.mxu0 0.0
    %2280 = vmatprep.subr.mxu0 0.0
    %2281 = vmatpush1.msra.mxu0 0.0
    %2282 = vmatprep.subr.mxu0 0.0
    %2283 = vmatpush1.msra.mxu0 0.0
    %2284 = vmatprep.subr.mxu0 0.0
    %2285 = vmatpush1.msra.mxu0 0.0
    %2286 = vmatprep.subr.mxu0 0.0
    %2287 = vmatpush1.msra.mxu0 0.0
    %2288 = vmatprep.subr.mxu0 0.0
    %2289 = vmatpush1.msra.mxu0 0.0
    %2290 = vmatprep.subr.mxu0 0.0
    %2291 = vmatpush1.msra.mxu0 0.0
    %2292 = vmatprep.subr.mxu0 0.0
    %2293 = vmatpush1.msra.mxu0 0.0
    %2294 = vmatprep.subr.mxu0 0.0
    %2295 = vmatpush1.msra.mxu0 0.0
    %2296 = vmatprep.subr.mxu0 0.0
    %2297 = vmatpush1.msra.mxu0 0.0
    %2298 = vmatprep.subr.mxu0 0.0
    %2299 = vmatpush1.msra.mxu0 0.0
    %2300 = vmatprep.subr.mxu0 0.0
    %2301 = vmatpush1.msra.mxu0 0.0
    %2302 = vmatprep.subr.mxu0 0.0
    %2303 = vmatpush1.msra.mxu0 0.0
    %2304 = vmatprep.subr.mxu0 0.0
    %2305 = vmatpush1.msra.mxu0 0.0
    %2306 = vmatprep.subr.mxu0 0.0
    %2307 = vmatpush1.msra.mxu0 0.0
    %2308 = vmatprep.subr.mxu0 0.0
    %2309 = vmatpush1.msra.mxu0 0.0
    %2310 = vmatprep.subr.mxu0 0.0
    %2311 = vmatpush1.msra.mxu0 0.0
    %2312 = vmatprep.subr.mxu0 0.0
    %2313 = vmatpush1.msra.mxu0 0.0
    %2314 = vmatprep.subr.mxu0 0.0
    %2315 = vmatpush1.msra.mxu0 0.0
    %2316 = vmatprep.subr.mxu0 0.0
    %2317 = vmatpush1.msra.mxu0 0.0
    %2318 = vmatprep.mubr.f32.mxu0 0.0
    %2319 = vmatmul.mubr.f32.gmra.mrb[0].mxu0 %v2179
    %v2320 = vpop.f32.mrb[0].mxu0
    %v2321 = vadd.f32 0.0, %v2320
    %v2322 = vpop.f32.mrb[0].mxu0
    %2323 = vdwg.mxu0
    %v2324 = vadd.f32 %v2253, %v2321
    %2325 = vmatprep.subr.mxu0 0.0
    %2326 = vmatpush1.msra.mxu0 %v474
    %2327 = vmatprep.subr.mxu0 0.0
    %2328 = vmatpush1.msra.mxu0 %v475
    %2329 = vmatprep.subr.mxu0 0.0
    %2330 = vmatpush1.msra.mxu0 %v476
    %2331 = vmatprep.subr.mxu0 0.0
    %2332 = vmatpush1.msra.mxu0 %v477
    %2333 = vmatprep.subr.mxu0 0.0
    %2334 = vmatpush1.msra.mxu0 0.0
    %2335 = vmatprep.subr.mxu0 0.0
    %2336 = vmatpush1.msra.mxu0 0.0
    %2337 = vmatprep.subr.mxu0 0.0
    %2338 = vmatpush1.msra.mxu0 0.0
    %2339 = vmatprep.subr.mxu0 0.0
    %2340 = vmatpush1.msra.mxu0 0.0
    %2341 = vmatprep.subr.mxu0 0.0
    %2342 = vmatpush1.msra.mxu0 0.0
    %2343 = vmatprep.subr.mxu0 0.0
    %2344 = vmatpush1.msra.mxu0 0.0
    %2345 = vmatprep.subr.mxu0 0.0
    %2346 = vmatpush1.msra.mxu0 0.0
    %2347 = vmatprep.subr.mxu0 0.0
    %2348 = vmatpush1.msra.mxu0 0.0
    %2349 = vmatprep.subr.mxu0 0.0
    %2350 = vmatpush1.msra.mxu0 0.0
    %2351 = vmatprep.subr.mxu0 0.0
    %2352 = vmatpush1.msra.mxu0 0.0
    %2353 = vmatprep.subr.mxu0 0.0
    %2354 = vmatpush1.msra.mxu0 0.0
    %2355 = vmatprep.subr.mxu0 0.0
    %2356 = vmatpush1.msra.mxu0 0.0
    %2357 = vmatprep.subr.mxu0 0.0
    %2358 = vmatpush1.msra.mxu0 0.0
    %2359 = vmatprep.subr.mxu0 0.0
    %2360 = vmatpush1.msra.mxu0 0.0
    %2361 = vmatprep.subr.mxu0 0.0
    %2362 = vmatpush1.msra.mxu0 0.0
    %2363 = vmatprep.subr.mxu0 0.0
    %2364 = vmatpush1.msra.mxu0 0.0
    %2365 = vmatprep.subr.mxu0 0.0
    %2366 = vmatpush1.msra.mxu0 0.0
    %2367 = vmatprep.subr.mxu0 0.0
    %2368 = vmatpush1.msra.mxu0 0.0
    %2369 = vmatprep.subr.mxu0 0.0
    %2370 = vmatpush1.msra.mxu0 0.0
    %2371 = vmatprep.subr.mxu0 0.0
    %2372 = vmatpush1.msra.mxu0 0.0
    %2373 = vmatprep.subr.mxu0 0.0
    %2374 = vmatpush1.msra.mxu0 0.0
    %2375 = vmatprep.subr.mxu0 0.0
    %2376 = vmatpush1.msra.mxu0 0.0
    %2377 = vmatprep.subr.mxu0 0.0
    %2378 = vmatpush1.msra.mxu0 0.0
    %2379 = vmatprep.subr.mxu0 0.0
    %2380 = vmatpush1.msra.mxu0 0.0
    %2381 = vmatprep.subr.mxu0 0.0
    %2382 = vmatpush1.msra.mxu0 0.0
    %2383 = vmatprep.subr.mxu0 0.0
    %2384 = vmatpush1.msra.mxu0 0.0
    %2385 = vmatprep.subr.mxu0 0.0
    %2386 = vmatpush1.msra.mxu0 0.0
    %2387 = vmatprep.subr.mxu0 0.0
    %2388 = vmatpush1.msra.mxu0 0.0
    %2389 = vmatprep.mubr.f32.mxu0 0.0
    %2390 = vmatmul.mubr.f32.gmra.mrb[0].mxu0 %v2179
    %v2391 = vpop.f32.mrb[0].mxu0
    %v2392 = vadd.f32 %v483, %v2391
    %v2393 = vpop.f32.mrb[0].mxu0
    %2394 = vdwg.mxu0
    %v2395 = vxor.u32 %v2251, 2147483648
    %v2396 = vmul.f32 %v2395, 1.442695
    %v2397 = vpow.pop %v2396
    %v2398 = vadd.f32 %v2397, 1.0
    %v2399 = vrcp.pop %v2398
    %v2400 = vmul.f32 1.0, %v2399
    %v2401 = vxor.u32 %v2324, 2147483648
    %v2402 = vmul.f32 %v2401, 1.442695
    %v2403 = vpow.pop %v2402
    %v2404 = vadd.f32 %v2403, 1.0
    %v2405 = vrcp.pop %v2404
    %v2406 = vmul.f32 1.0, %v2405
    %s2407 = scalar_lea.vmem [#allocation4], 56
    %v2408 = vld [vmem:[%s2407] sm:$0xff]
    %v2409 = vmul.f32 %v2400, %v2392
    %v2410 = vadd.f32 %v2408, %v2409
    %v2411 = vtanh.pop %v2410
    %v2412 = vsub.f32 1.0, %v2406
    %v2413 = vmul.f32 %v2412, %v2411
    %v2414 = vmul.f32 %v2406, %v2173
    %v2415 = vadd.f32 %v2413, %v2414
    %s2416 = scalar_lea.vmem [#allocation5], 56
    %2417 = vst.msk [vmem:[%s2416] sm:$0xff] %vm207, %v2415
    %2418 = vst.msk [vmem:[#allocation6] sm:$0xff] %vm207, %v2415
    %v2419 = vld [vmem:[#allocation5] sm:$0xff]
    %v2420 = vld [vmem:[#allocation5 + $0x8] sm:$0xff]
    %v2421 = vld [vmem:[#allocation5 + $0x10] sm:$0xff]
    %v2422 = vld [vmem:[#allocation5 + $0x18] sm:$0xff]
    %v2423 = vld [vmem:[#allocation5 + $0x20] sm:$0xff]
    %v2424 = vld [vmem:[#allocation5 + $0x28] sm:$0xff]
    %v2425 = vld [vmem:[#allocation5 + $0x30] sm:$0xff]
    %v2426 = vld [vmem:[#allocation5 + $0x38] sm:$0xff]
    %v2427 = vmax.f32 %v2419, 0.0
    %v2428 = vmax.f32 %v2420, 0.0
    %v2429 = vmax.f32 %v2421, 0.0
    %v2430 = vmax.f32 %v2422, 0.0
    %v2431 = vmax.f32 %v2423, 0.0
    %v2432 = vmax.f32 %v2424, 0.0
    %v2433 = vmax.f32 %v2425, 0.0
    %v2434 = vmax.f32 %v2426, 0.0
    %v2435 = vld [vmem:[%s12] sm:$0xff]
    %v2436 = vld [vmem:[%s12 + $0x8] sm:$0xff]
    %v2437 = vld [vmem:[%s12 + $0x10] sm:$0xff]
    %v2438 = vld [vmem:[%s12 + $0x18] sm:$0xff]
    %v2439 = vld [vmem:[%s13] sm:$0x1]
    %v2441 = vlaneseq
    %v2442 = vshrl.u32 %v2441, 7
    %v2443 = vsub.s32 0, %v2442
    %v2444 = vrot.slane %v2439, %v2443
    %v2447 = vsel %vm207, %v2427, 0
    %v2450 = vsel %vm207, %v2428, 0
    %v2453 = vsel %vm207, %v2429, 0
    %v2456 = vsel %vm207, %v2430, 0
    %v2459 = vsel %vm207, %v2431, 0
    %v2462 = vsel %vm207, %v2432, 0
    %v2465 = vsel %vm207, %v2433, 0
    %v2468 = vsel %vm207, %v2434, 0
    %2470 = vmatprep.subr.mxu0 0.0
    %2471 = vmatpush1.msra.mxu0 %v2435
    %2472 = vmatprep.subr.mxu0 0.0
    %2473 = vmatpush1.msra.mxu0 %v2436
    %2474 = vmatprep.subr.mxu0 0.0
    %2475 = vmatpush1.msra.mxu0 %v2437
    %2476 = vmatprep.subr.mxu0 0.0
    %2477 = vmatpush1.msra.mxu0 %v2438
    %2478 = vmatprep.subr.mxu0 0.0
    %2479 = vmatpush1.msra.mxu0 0.0
    %2480 = vmatprep.subr.mxu0 0.0
    %2481 = vmatpush1.msra.mxu0 0.0
    %2482 = vmatprep.subr.mxu0 0.0
    %2483 = vmatpush1.msra.mxu0 0.0
    %2484 = vmatprep.subr.mxu0 0.0
    %2485 = vmatpush1.msra.mxu0 0.0
    %2486 = vmatprep.subr.mxu0 0.0
    %2487 = vmatpush1.msra.mxu0 0.0
    %2488 = vmatprep.subr.mxu0 0.0
    %2489 = vmatpush1.msra.mxu0 0.0
    %2490 = vmatprep.subr.mxu0 0.0
    %2491 = vmatpush1.msra.mxu0 0.0
    %2492 = vmatprep.subr.mxu0 0.0
    %2493 = vmatpush1.msra.mxu0 0.0
    %2494 = vmatprep.subr.mxu0 0.0
    %2495 = vmatpush1.msra.mxu0 0.0
    %2496 = vmatprep.subr.mxu0 0.0
    %2497 = vmatpush1.msra.mxu0 0.0
    %2498 = vmatprep.subr.mxu0 0.0
    %2499 = vmatpush1.msra.mxu0 0.0
    %2500 = vmatprep.subr.mxu0 0.0
    %2501 = vmatpush1.msra.mxu0 0.0
    %2502 = vmatprep.subr.mxu0 0.0
    %2503 = vmatpush1.msra.mxu0 0.0
    %2504 = vmatprep.subr.mxu0 0.0
    %2505 = vmatpush1.msra.mxu0 0.0
    %2506 = vmatprep.subr.mxu0 0.0
    %2507 = vmatpush1.msra.mxu0 0.0
    %2508 = vmatprep.subr.mxu0 0.0
    %2509 = vmatpush1.msra.mxu0 0.0
    %2510 = vmatprep.subr.mxu0 0.0
    %2511 = vmatpush1.msra.mxu0 0.0
    %2512 = vmatprep.subr.mxu0 0.0
    %2513 = vmatpush1.msra.mxu0 0.0
    %2514 = vmatprep.subr.mxu0 0.0
    %2515 = vmatpush1.msra.mxu0 0.0
    %2516 = vmatprep.subr.mxu0 0.0
    %2517 = vmatpush1.msra.mxu0 0.0
    %2518 = vmatprep.subr.mxu0 0.0
    %2519 = vmatpush1.msra.mxu0 0.0
    %2520 = vmatprep.subr.mxu0 0.0
    %2521 = vmatpush1.msra.mxu0 0.0
    %2522 = vmatprep.subr.mxu0 0.0
    %2523 = vmatpush1.msra.mxu0 0.0
    %2524 = vmatprep.subr.mxu0 0.0
    %2525 = vmatpush1.msra.mxu0 0.0
    %2526 = vmatprep.subr.mxu0 0.0
    %2527 = vmatpush1.msra.mxu0 0.0
    %2528 = vmatprep.subr.mxu0 0.0
    %2529 = vmatpush1.msra.mxu0 0.0
    %2530 = vmatprep.subr.mxu0 0.0
    %2531 = vmatpush1.msra.mxu0 0.0
    %2532 = vmatprep.subr.mxu0 0.0
    %2533 = vmatpush1.msra.mxu0 0.0
    %2534 = vmatprep.mubr.f32.mxu0 0.0
    %2535 = vmatmul.mubr.f32.gmra.mrb[0].mxu0 %v2447
    %v2536 = vpop.f32.mrb[0].mxu0
    %v2537 = vadd.f32 %v2444, %v2536
    %v2538 = vpop.f32.mrb[0].mxu0
    %2539 = vmatprep.mubr.f32.mxu0 0.0
    %2540 = vmatmul.mubr.f32.gmra.mrb[0].mxu0 %v2450
    %v2541 = vpop.f32.mrb[0].mxu0
    %v2542 = vadd.f32 %v2444, %v2541
    %v2543 = vpop.f32.mrb[0].mxu0
    %2544 = vmatprep.mubr.f32.mxu0 0.0
    %2545 = vmatmul.mubr.f32.gmra.mrb[0].mxu0 %v2453
    %v2546 = vpop.f32.mrb[0].mxu0
    %v2547 = vadd.f32 %v2444, %v2546
    %v2548 = vpop.f32.mrb[0].mxu0
    %2549 = vmatprep.mubr.f32.mxu0 0.0
    %2550 = vmatmul.mubr.f32.gmra.mrb[0].mxu0 %v2456
    %v2551 = vpop.f32.mrb[0].mxu0
    %v2552 = vadd.f32 %v2444, %v2551
    %v2553 = vpop.f32.mrb[0].mxu0
    %2554 = vmatprep.mubr.f32.mxu0 0.0
    %2555 = vmatmul.mubr.f32.gmra.mrb[0].mxu0 %v2459
    %v2556 = vpop.f32.mrb[0].mxu0
    %v2557 = vadd.f32 %v2444, %v2556
    %v2558 = vpop.f32.mrb[0].mxu0
    %2559 = vmatprep.mubr.f32.mxu0 0.0
    %2560 = vmatmul.mubr.f32.gmra.mrb[0].mxu0 %v2462
    %v2561 = vpop.f32.mrb[0].mxu0
    %v2562 = vadd.f32 %v2444, %v2561
    %v2563 = vpop.f32.mrb[0].mxu0
    %2564 = vmatprep.mubr.f32.mxu0 0.0
    %2565 = vmatmul.mubr.f32.gmra.mrb[0].mxu0 %v2465
    %v2566 = vpop.f32.mrb[0].mxu0
    %v2567 = vadd.f32 %v2444, %v2566
    %v2568 = vpop.f32.mrb[0].mxu0
    %2569 = vmatprep.mubr.f32.mxu0 0.0
    %2570 = vmatmul.mubr.f32.gmra.mrb[0].mxu0 %v2468
    %v2571 = vpop.f32.mrb[0].mxu0
    %v2572 = vadd.f32 %v2444, %v2571
    %v2573 = vpop.f32.mrb[0].mxu0
    %2574 = vdwg.mxu0
    %v2575 = vmax.f32 %v2537, 0.0
    %v2576 = vmax.f32 %v2542, 0.0
    %v2577 = vmax.f32 %v2547, 0.0
    %v2578 = vmax.f32 %v2552, 0.0
    %v2579 = vmax.f32 %v2557, 0.0
    %v2580 = vmax.f32 %v2562, 0.0
    %v2581 = vmax.f32 %v2567, 0.0
    %v2582 = vmax.f32 %v2572, 0.0
    %v2583 = vld [vmem:[%s14] sm:$0xff]
    %v2584 = vld [vmem:[%s14 + $0x8] sm:$0xff]
    %v2585 = vld [vmem:[%s14 + $0x10] sm:$0xff]
    %v2586 = vld [vmem:[%s14 + $0x18] sm:$0xff]
    %v2587 = vld [vmem:[%s15] sm:$0x1]
    %v2589 = vlaneseq
    %v2590 = vshrl.u32 %v2589, 7
    %v2591 = vsub.s32 0, %v2590
    %v2592 = vrot.slane %v2587, %v2591
    %v2595 = vsel %vm207, %v2575, 0
    %v2598 = vsel %vm207, %v2576, 0
    %v2601 = vsel %vm207, %v2577, 0
    %v2604 = vsel %vm207, %v2578, 0
    %v2607 = vsel %vm207, %v2579, 0
    %v2610 = vsel %vm207, %v2580, 0
    %v2613 = vsel %vm207, %v2581, 0
    %v2616 = vsel %vm207, %v2582, 0
    %2618 = vmatprep.subr.mxu0 0.0
    %2619 = vmatpush1.msra.mxu0 %v2583
    %2620 = vmatprep.subr.mxu0 0.0
    %2621 = vmatpush1.msra.mxu0 %v2584
    %2622 = vmatprep.subr.mxu0 0.0
    %2623 = vmatpush1.msra.mxu0 %v2585
    %2624 = vmatprep.subr.mxu0 0.0
    %2625 = vmatpush1.msra.mxu0 %v2586
    %2626 = vmatprep.subr.mxu0 0.0
    %2627 = vmatpush1.msra.mxu0 0.0
    %2628 = vmatprep.subr.mxu0 0.0
    %2629 = vmatpush1.msra.mxu0 0.0
    %2630 = vmatprep.subr.mxu0 0.0
    %2631 = vmatpush1.msra.mxu0 0.0
    %2632 = vmatprep.subr.mxu0 0.0
    %2633 = vmatpush1.msra.mxu0 0.0
    %2634 = vmatprep.subr.mxu0 0.0
    %2635 = vmatpush1.msra.mxu0 0.0
    %2636 = vmatprep.subr.mxu0 0.0
    %2637 = vmatpush1.msra.mxu0 0.0
    %2638 = vmatprep.subr.mxu0 0.0
    %2639 = vmatpush1.msra.mxu0 0.0
    %2640 = vmatprep.subr.mxu0 0.0
    %2641 = vmatpush1.msra.mxu0 0.0
    %2642 = vmatprep.subr.mxu0 0.0
    %2643 = vmatpush1.msra.mxu0 0.0
    %2644 = vmatprep.subr.mxu0 0.0
    %2645 = vmatpush1.msra.mxu0 0.0
    %2646 = vmatprep.subr.mxu0 0.0
    %2647 = vmatpush1.msra.mxu0 0.0
    %2648 = vmatprep.subr.mxu0 0.0
    %2649 = vmatpush1.msra.mxu0 0.0
    %2650 = vmatprep.subr.mxu0 0.0
    %2651 = vmatpush1.msra.mxu0 0.0
    %2652 = vmatprep.subr.mxu0 0.0
    %2653 = vmatpush1.msra.mxu0 0.0
    %2654 = vmatprep.subr.mxu0 0.0
    %2655 = vmatpush1.msra.mxu0 0.0
    %2656 = vmatprep.subr.mxu0 0.0
    %2657 = vmatpush1.msra.mxu0 0.0
    %2658 = vmatprep.subr.mxu0 0.0
    %2659 = vmatpush1.msra.mxu0 0.0
    %2660 = vmatprep.subr.mxu0 0.0
    %2661 = vmatpush1.msra.mxu0 0.0
    %2662 = vmatprep.subr.mxu0 0.0
    %2663 = vmatpush1.msra.mxu0 0.0
    %2664 = vmatprep.subr.mxu0 0.0
    %2665 = vmatpush1.msra.mxu0 0.0
    %2666 = vmatprep.subr.mxu0 0.0
    %2667 = vmatpush1.msra.mxu0 0.0
    %2668 = vmatprep.subr.mxu0 0.0
    %2669 = vmatpush1.msra.mxu0 0.0
    %2670 = vmatprep.subr.mxu0 0.0
    %2671 = vmatpush1.msra.mxu0 0.0
    %2672 = vmatprep.subr.mxu0 0.0
    %2673 = vmatpush1.msra.mxu0 0.0
    %2674 = vmatprep.subr.mxu0 0.0
    %2675 = vmatpush1.msra.mxu0 0.0
    %2676 = vmatprep.subr.mxu0 0.0
    %2677 = vmatpush1.msra.mxu0 0.0
    %2678 = vmatprep.subr.mxu0 0.0
    %2679 = vmatpush1.msra.mxu0 0.0
    %2680 = vmatprep.subr.mxu0 0.0
    %2681 = vmatpush1.msra.mxu0 0.0
    %2682 = vmatprep.mubr.f32.mxu0 0.0
    %2683 = vmatmul.mubr.f32.gmra.mrb[0].mxu0 %v2595
    %v2684 = vpop.f32.mrb[0].mxu0
    %v2685 = vadd.f32 %v2592, %v2684
    %v2686 = vpop.f32.mrb[0].mxu0
    %2687 = vmatprep.mubr.f32.mxu0 0.0
    %2688 = vmatmul.mubr.f32.gmra.mrb[0].mxu0 %v2598
    %v2689 = vpop.f32.mrb[0].mxu0
    %v2690 = vadd.f32 %v2592, %v2689
    %v2691 = vpop.f32.mrb[0].mxu0
    %2692 = vmatprep.mubr.f32.mxu0 0.0
    %2693 = vmatmul.mubr.f32.gmra.mrb[0].mxu0 %v2601
    %v2694 = vpop.f32.mrb[0].mxu0
    %v2695 = vadd.f32 %v2592, %v2694
    %v2696 = vpop.f32.mrb[0].mxu0
    %2697 = vmatprep.mubr.f32.mxu0 0.0
    %2698 = vmatmul.mubr.f32.gmra.mrb[0].mxu0 %v2604
    %v2699 = vpop.f32.mrb[0].mxu0
    %v2700 = vadd.f32 %v2592, %v2699
    %v2701 = vpop.f32.mrb[0].mxu0
    %2702 = vmatprep.mubr.f32.mxu0 0.0
    %2703 = vmatmul.mubr.f32.gmra.mrb[0].mxu0 %v2607
    %v2704 = vpop.f32.mrb[0].mxu0
    %v2705 = vadd.f32 %v2592, %v2704
    %v2706 = vpop.f32.mrb[0].mxu0
    %2707 = vmatprep.mubr.f32.mxu0 0.0
    %2708 = vmatmul.mubr.f32.gmra.mrb[0].mxu0 %v2610
    %v2709 = vpop.f32.mrb[0].mxu0
    %v2710 = vadd.f32 %v2592, %v2709
    %v2711 = vpop.f32.mrb[0].mxu0
    %2712 = vmatprep.mubr.f32.mxu0 0.0
    %2713 = vmatmul.mubr.f32.gmra.mrb[0].mxu0 %v2613
    %v2714 = vpop.f32.mrb[0].mxu0
    %v2715 = vadd.f32 %v2592, %v2714
    %v2716 = vpop.f32.mrb[0].mxu0
    %2717 = vmatprep.mubr.f32.mxu0 0.0
    %2718 = vmatmul.mubr.f32.gmra.mrb[0].mxu0 %v2616
    %v2719 = vpop.f32.mrb[0].mxu0
    %v2720 = vadd.f32 %v2592, %v2719
    %v2721 = vpop.f32.mrb[0].mxu0
    %2722 = vdwg.mxu0
    %2723 = vmax.xlane.f32.xlu0 %v2685
    %v2724 = vpop.xlane.xlu0 %2723
    %2725 = vmax.xlane.f32.xlu0 %v2690
    %v2726 = vpop.xlane.xlu0 %2725
    %2727 = vmax.xlane.f32.xlu0 %v2695
    %v2728 = vpop.xlane.xlu0 %2727
    %2729 = vmax.xlane.f32.xlu0 %v2700
    %v2730 = vpop.xlane.xlu0 %2729
    %2731 = vmax.xlane.f32.xlu0 %v2705
    %v2732 = vpop.xlane.xlu0 %2731
    %2733 = vmax.xlane.f32.xlu0 %v2710
    %v2734 = vpop.xlane.xlu0 %2733
    %2735 = vmax.xlane.f32.xlu0 %v2715
    %v2736 = vpop.xlane.xlu0 %2735
    %2737 = vmax.xlane.f32.xlu0 %v2720
    %v2738 = vpop.xlane.xlu0 %2737
    %v2739 = vsub.f32 %v2685, %v2724
    %v2740 = vsub.f32 %v2690, %v2726
    %v2741 = vsub.f32 %v2695, %v2728
    %v2742 = vsub.f32 %v2700, %v2730
    %v2743 = vsub.f32 %v2705, %v2732
    %v2744 = vsub.f32 %v2710, %v2734
    %v2745 = vsub.f32 %v2715, %v2736
    %v2746 = vsub.f32 %v2720, %v2738
    %v2747 = vmul.f32 %v2739, 1.442695
    %v2748 = vpow.pop %v2747
    %v2749 = vmul.f32 %v2740, 1.442695
    %v2750 = vpow.pop %v2749
    %v2751 = vmul.f32 %v2741, 1.442695
    %v2752 = vpow.pop %v2751
    %v2753 = vmul.f32 %v2742, 1.442695
    %v2754 = vpow.pop %v2753
    %v2755 = vmul.f32 %v2743, 1.442695
    %v2756 = vpow.pop %v2755
    %v2757 = vmul.f32 %v2744, 1.442695
    %v2758 = vpow.pop %v2757
    %v2759 = vmul.f32 %v2745, 1.442695
    %v2760 = vpow.pop %v2759
    %v2761 = vmul.f32 %v2746, 1.442695
    %v2762 = vpow.pop %v2761
    %2763 = vadd.xlane.f32.xlu0 %v2748
    %v2764 = vpop.xlane.xlu0 %2763
    %2765 = vadd.xlane.f32.xlu0 %v2750
    %v2766 = vpop.xlane.xlu0 %2765
    %2767 = vadd.xlane.f32.xlu0 %v2752
    %v2768 = vpop.xlane.xlu0 %2767
    %2769 = vadd.xlane.f32.xlu0 %v2754
    %v2770 = vpop.xlane.xlu0 %2769
    %2771 = vadd.xlane.f32.xlu0 %v2756
    %v2772 = vpop.xlane.xlu0 %2771
    %2773 = vadd.xlane.f32.xlu0 %v2758
    %v2774 = vpop.xlane.xlu0 %2773
    %2775 = vadd.xlane.f32.xlu0 %v2760
    %v2776 = vpop.xlane.xlu0 %2775
    %2777 = vadd.xlane.f32.xlu0 %v2762
    %v2778 = vpop.xlane.xlu0 %2777
    %v2779 = vlog2.pop %v2764
    %v2780 = vmul.f32 %v2779, 0.6931472
    %v2781 = vlog2.pop %v2766
    %v2782 = vmul.f32 %v2781, 0.6931472
    %v2783 = vlog2.pop %v2768
    %v2784 = vmul.f32 %v2783, 0.6931472
    %v2785 = vlog2.pop %v2770
    %v2786 = vmul.f32 %v2785, 0.6931472
    %v2787 = vlog2.pop %v2772
    %v2788 = vmul.f32 %v2787, 0.6931472
    %v2789 = vlog2.pop %v2774
    %v2790 = vmul.f32 %v2789, 0.6931472
    %v2791 = vlog2.pop %v2776
    %v2792 = vmul.f32 %v2791, 0.6931472
    %v2793 = vlog2.pop %v2778
    %v2794 = vmul.f32 %v2793, 0.6931472
    %v2795 = vsub.f32 %v2739, %v2780
    %v2796 = vsub.f32 %v2740, %v2782
    %v2797 = vsub.f32 %v2741, %v2784
    %v2798 = vsub.f32 %v2742, %v2786
    %v2799 = vsub.f32 %v2743, %v2788
    %v2800 = vsub.f32 %v2744, %v2790
    %v2801 = vsub.f32 %v2745, %v2792
    %v2802 = vsub.f32 %v2746, %v2794
    %2803 = vst [vmem:[%s16] sm:$0xff] %v2795
    %2804 = vst [vmem:[%s16 + $0x8] sm:$0xff] %v2796
    %2805 = vst [vmem:[%s16 + $0x10] sm:$0xff] %v2797
    %2806 = vst [vmem:[%s16 + $0x18] sm:$0xff] %v2798
    %2807 = vst [vmem:[%s16 + $0x20] sm:$0xff] %v2799
    %2808 = vst [vmem:[%s16 + $0x28] sm:$0xff] %v2800
    %2809 = vst [vmem:[%s16 + $0x30] sm:$0xff] %v2801
    %2810 = vst [vmem:[%s16 + $0x38] sm:$0xff] %v2802
    // Predicated region
    $region66: #{gru_type_net_forward.1} parent=1 // pred_check
      _
    $region67: #{gru_type_net_forward.1} parent=1 // pred_check_branch
      %2812 = sbr.rel (0) target = $region69
    $region68: #{gru_type_net_forward.1} parent=1 // pred_region
      _
    $region69: #{gru_type_net_forward.1} parent=1 // pred_fallthru
      _
    // Predicated region
    $region70: #{gru_type_net_forward.1} parent=1 // pred_check
      _
    $region71: #{gru_type_net_forward.1} parent=1 // pred_check_branch
      %2814 = sbr.rel (0) target = $region73
    $region72: #{gru_type_net_forward.1} parent=1 // pred_region
      %s2816 = ssub.s32 128, 128
      %2817 = vsyncadd [#allocation7], %s2816
      %s2819 = sshll.u32 [#allocation6], 4
      %s2820 = int_to_ptr.vmem [resolvable:$true] %s2819
      %2822 = dma.vmem_to_hbm [thread:$0]  %s2820, 128, %s17, [#allocation7]
    $region73: #{gru_type_net_forward.1} parent=1 // pred_fallthru
      _
    // Predicated region
    $region74: #{gru_type_net_forward.1} parent=1 // pred_check
      _
    $region75: #{gru_type_net_forward.1} parent=1 // pred_check_branch
      %2824 = sbr.rel (0) target = $region77
    $region76: #{gru_type_net_forward.1} parent=1 // pred_region
      _
    $region77: #{gru_type_net_forward.1} parent=1 // pred_fallthru
      _
    // Predicated region
    $region78: #{gru_type_net_forward.1} parent=1 // pred_check
      _
    $region79: #{gru_type_net_forward.1} parent=1 // pred_check_branch
      %2826 = sbr.rel (0) target = $region81
    $region80: #{gru_type_net_forward.1} parent=1 // pred_region
      %2827 = dma.done [#allocation7], 128
    $region81: #{gru_type_net_forward.1} parent=1 // pred_fallthru
      _
    %2828 = vsyncpa [#allocation7], 1

</llo_original>
